<compile_context>
chip_gen: v5e
topology: v5e:2x2
jax: 0.10.0
libtpu: 0.0.40
codegen_flags: <defaults>
</compile_context>

<pallas_src>
import jax
import jax.numpy as jnp
from jax import lax
from jax.experimental import pallas as pl
from jax.experimental.pallas import tpu as pltpu

EPS = 1e-5

# Problem size implied by the module (Conv2d(3, 16, ...)): N=2, C=3, H=W=16.
N, H, W = 2, 16, 16
C_IN, C_MID, C_OUT = 3, 16, 3
HW = H * W               # 256 pixels per image  (lane-dense)
M = N * HW               # 512 flattened pixels  (lane-dense)


# ----------------------------------------------------------------------------
# The fused kernel.  All refs are whole-array VMEM blocks (no grid, no scratch).
# Flat pixel index p = n*H*W + h*W + w lives on the lane axis.
# ----------------------------------------------------------------------------
def _fused_kernel(x_ref, w1_ref, b1_ref, g1_ref, be1_ref,
                  wt1_ref, bt1_ref, g2_ref, be2_ref,
                  wd_ref, bt2_ref, o_ref):
    f32 = jnp.float32
    inv_m = 1.0 / M

    lane = lax.broadcasted_iota(jnp.int32, (1, M), 1)
    w_idx = lane & (W - 1)
    h_idx = (lane >> 4) & (H - 1)
    hval = {d: (h_idx + d >= 0) & (h_idx + d < H) for d in (-1, 0, 1)}
    wval = {d: (w_idx + d >= 0) & (w_idx + d < W) for d in (-1, 0, 1)}
    h_even = (h_idx & 1) == 0
    w_even = (w_idx & 1) == 0

    def tap(src, dy, dx):
        # src[:, p] -> src[:, p + dy*W + dx], zero outside the image ("same" pad).
        if dy == 0 and dx == 0:
            return src
        rolled = pltpu.roll(src, shift=(-(dy * W + dx)) % M, axis=1)
        return jnp.where(hval[dy] & wval[dx], rolled, 0.0)

    def bn_relu(y, g_ref, b_ref):
        # torch BatchNorm2d training statistics: biased variance over N*H*W.
        mean = jnp.sum(y, axis=1, keepdims=True) * inv_m
        diff = y - mean
        var = jnp.maximum(jnp.sum(diff * diff, axis=1, keepdims=True) * inv_m, 0.0)
        scale = g_ref[...] * lax.rsqrt(var + EPS)          # rsqrt -> EUP slot
        shift = b_ref[...] - mean * scale
        return jnp.maximum(y * scale + shift, 0.0)

    # ---- input: flattened NCHW (N, C_IN, HW) -> channel-major (C_IN, M) -------
    x_cm = jnp.concatenate([x_ref[n] for n in range(N)], axis=1)      # (3, 512)

    # ---- Conv2d(3->16, k3, s1, p1) ---------------------------------------------
    acc1 = jnp.zeros((C_MID, M), f32)
    for ky in range(3):
        for kx in range(3):
            acc1 = acc1 + jnp.dot(w1_ref[ky, kx], tap(x_cm, ky - 1, kx - 1),
                                  preferred_element_type=f32)
    a1 = bn_relu(acc1 + b1_ref[...], g1_ref, be1_ref)                 # (16, 512)

    # ---- MaxPool 2x2 s2, kept at full resolution (block-max broadcast) ---------
    vpair = jnp.where(h_even, pltpu.roll(a1, shift=M - W, axis=1),    # row below
                      pltpu.roll(a1, shift=W, axis=1))                # row above
    tmax = jnp.maximum(a1, vpair)
    hpair = jnp.where(w_even, pltpu.roll(tmax, shift=M - 1, axis=1),  # col right
                      pltpu.roll(tmax, shift=1, axis=1))              # col left
    pooled = jnp.maximum(tmax, hpair)   # (16,512): enc[c, n, h//2, w//2] at every p

    # ---- ConvTranspose2d(16->16, k2, s2): 4 parity-blended dense dots ----------
    zacc = jnp.zeros((C_MID, M), f32)
    for di in range(2):
        for dj in range(2):
            sel = ((h_idx & 1) == di) & ((w_idx & 1) == dj)
            term = jnp.dot(wt1_ref[di, dj], pooled, preferred_element_type=f32)
            zacc = zacc + jnp.where(sel, term, 0.0)
    z = bn_relu(zacc + bt1_ref[...], g2_ref, be2_ref)                 # (16, 512)

    # ---- ConvTranspose2d(16->3, k3, s1, p1) == 3x3 conv with flipped weights ---
    acc3 = jnp.zeros((C_OUT, M), f32)
    for ky in range(3):
        for kx in range(3):
            acc3 = acc3 + jnp.dot(wd_ref[ky, kx], tap(z, ky - 1, kx - 1),
                                  preferred_element_type=f32)
    out = acc3 + bt2_ref[...]                                         # (3, 512)

    # ---- store as flattened NCHW: (N*C_OUT, HW) = (6, 256), lane-dense ---------
    for n in range(N):
        o_ref[n * C_OUT:(n + 1) * C_OUT, :] = out[:, n * HW:(n + 1) * HW]


# ----------------------------------------------------------------------------
# One-time parameter preprocessing (hoisted off the per-forward hot path).
# All weights become per-tap (Cout, Cin) matrices for the channel-major dots.
# ----------------------------------------------------------------------------
def prepare_params(p):
    return dict(
        # Conv2d weight (Cout,Cin,ky,kx) -> (ky,kx,Cout,Cin)
        w1=jnp.transpose(p["w1"], (2, 3, 0, 1)).astype(jnp.float32),          # (3,3,16,3)
        b1=p["b1"].reshape(C_MID, 1).astype(jnp.float32),
        g1=p["g1"].reshape(C_MID, 1).astype(jnp.float32),
        be1=p["be1"].reshape(C_MID, 1).astype(jnp.float32),
        # ConvT weight (Cin,Cout,kh,kw) -> per output-parity (di,dj,Cout,Cin)
        wt1=jnp.transpose(p["wt1"], (2, 3, 1, 0)).astype(jnp.float32),        # (2,2,16,16)
        bt1=p["bt1"].reshape(C_MID, 1).astype(jnp.float32),
        g2=p["g2"].reshape(C_MID, 1).astype(jnp.float32),
        be2=p["be2"].reshape(C_MID, 1).astype(jnp.float32),
        # ConvT(16->3,k3,s1,p1) == 3x3 conv with flipped, in/out-swapped weights
        wd=jnp.transpose(p["wt2"][:, :, ::-1, ::-1], (2, 3, 1, 0)).astype(jnp.float32),  # (3,3,3,16)
        bt2=p["bt2"].reshape(C_OUT, 1).astype(jnp.float32),
    )


def _vmem():
    return pl.BlockSpec(memory_space=pltpu.MemorySpace.VMEM)


@jax.jit
def one_stage_ae_forward(x_nchw, pp):
    # Free reshape: NCHW consumed directly (no transpose glue ops).
    x = x_nchw.reshape(N, C_IN, HW).astype(jnp.float32)
    out2d = pl.pallas_call(
        _fused_kernel,
        out_shape=jax.ShapeDtypeStruct((N * C_OUT, HW), jnp.float32),
        in_specs=[_vmem()] * 11,
        out_specs=_vmem(),
    )(x, pp["w1"], pp["b1"], pp["g1"], pp["be1"],
      pp["wt1"], pp["bt1"], pp["g2"], pp["be2"], pp["wd"], pp["bt2"])
    # (N*C_OUT, HW) is already flattened NCHW -> free reshape, no transpose.
    return out2d.reshape(N, C_OUT, H, W)


# ----------------------------------------------------------------------------
# Pure-XLA reference (same semantics) for a correctness check.
# ----------------------------------------------------------------------------
def reference_forward(x_nchw, p):
    dn = ("NCHW", "OIHW", "NCHW")
    hp = lax.Precision.HIGHEST

    def bn_relu_ref(y, g, b):
        m = y.mean(axis=(0, 2, 3), keepdims=True)
        v = y.var(axis=(0, 2, 3), keepdims=True)
        yn = (y - m) / jnp.sqrt(v + EPS) * g[None, :, None, None] + b[None, :, None, None]
        return jnp.maximum(yn, 0.0)

    y = lax.conv_general_dilated(x_nchw, p["w1"], (1, 1), ((1, 1), (1, 1)),
                                 dimension_numbers=dn, precision=hp)
    y = y + p["b1"][None, :, None, None]
    y = bn_relu_ref(y, p["g1"], p["be1"])
    y = lax.reduce_window(y, -jnp.inf, lax.max, (1, 1, 2, 2), (1, 1, 2, 2), "VALID")

    wf1 = jnp.transpose(p["wt1"][:, :, ::-1, ::-1], (1, 0, 2, 3))
    y = lax.conv_general_dilated(y, wf1, (1, 1), ((1, 1), (1, 1)),
                                 lhs_dilation=(2, 2), dimension_numbers=dn, precision=hp)
    y = y + p["bt1"][None, :, None, None]
    y = bn_relu_ref(y, p["g2"], p["be2"])

    wf2 = jnp.transpose(p["wt2"][:, :, ::-1, ::-1], (1, 0, 2, 3))
    y = lax.conv_general_dilated(y, wf2, (1, 1), ((1, 1), (1, 1)),
                                 dimension_numbers=dn, precision=hp)
    y = y + p["bt2"][None, :, None, None]
    return y


if __name__ == "__main__":
    key = jax.random.PRNGKey(0)
    ks = jax.random.split(key, 11)
    x = jax.random.normal(ks[0], (N, C_IN, H, W), jnp.float32)

    params = {
        "w1":  0.1 * jax.random.normal(ks[1], (16, 3, 3, 3), jnp.float32),   # Conv2d OIHW
        "b1":  0.1 * jax.random.normal(ks[2], (16,), jnp.float32),
        "g1":  1.0 + 0.1 * jax.random.normal(ks[3], (16,), jnp.float32),     # BN1 gamma
        "be1": 0.1 * jax.random.normal(ks[4], (16,), jnp.float32),           # BN1 beta
        "wt1": 0.1 * jax.random.normal(ks[5], (16, 16, 2, 2), jnp.float32),  # ConvT IOHW
        "bt1": 0.1 * jax.random.normal(ks[6], (16,), jnp.float32),
        "g2":  1.0 + 0.1 * jax.random.normal(ks[7], (16,), jnp.float32),     # BN2 gamma
        "be2": 0.1 * jax.random.normal(ks[8], (16,), jnp.float32),           # BN2 beta
        "wt2": 0.1 * jax.random.normal(ks[9], (16, 3, 3, 3), jnp.float32),   # ConvT IOHW
        "bt2": 0.1 * jax.random.normal(ks[10], (3,), jnp.float32),
    }

    pp = jax.tree_util.tree_map(jax.block_until_ready, prepare_params(params))  # one-time

    out = jax.block_until_ready(one_stage_ae_forward(x, pp))
    ref = jax.block_until_ready(reference_forward(x, params))

    assert out.shape == (N, C_OUT, H, W), out.shape
    err = float(jnp.max(jnp.abs(out - ref)))
    assert err < 3e-3, f"max abs error vs reference: {err}"
    print("KERNEL_OK")
</pallas_src>

<mosaic_0001>
module attributes {stable_mosaic.version = 11 : i64} {
  func.func @_fused_kernel(%arg0: memref<2x3x256xf32, #tpu.memory_space<vmem>>, %arg1: memref<3x3x16x3xf32, #tpu.memory_space<vmem>>, %arg2: memref<16x1xf32, #tpu.memory_space<vmem>>, %arg3: memref<16x1xf32, #tpu.memory_space<vmem>>, %arg4: memref<16x1xf32, #tpu.memory_space<vmem>>, %arg5: memref<2x2x16x16xf32, #tpu.memory_space<vmem>>, %arg6: memref<16x1xf32, #tpu.memory_space<vmem>>, %arg7: memref<16x1xf32, #tpu.memory_space<vmem>>, %arg8: memref<16x1xf32, #tpu.memory_space<vmem>>, %arg9: memref<3x3x3x16xf32, #tpu.memory_space<vmem>>, %arg10: memref<3x1xf32, #tpu.memory_space<vmem>>, %arg11: memref<6x256xf32, #tpu.memory_space<vmem>>) attributes {dimension_semantics = [], scalar_prefetch = 0 : i64, scratch_operands = 0 : i64, tpu.core_type = #tpu.core_type<tc>} {
    %0 = tpu.iota {dimensions = array<i32: 1>} : vector<1x512xi32>
    %c15_i32 = arith.constant 15 : i32
    %1 = vector.broadcast %c15_i32 : i32 to vector<1x512xi32>
    %2 = arith.andi %0, %1 : vector<1x512xi32>
    %c4_i32 = arith.constant 4 : i32
    %3 = vector.broadcast %c4_i32 : i32 to vector<1x512xi32>
    %4 = arith.shrsi %0, %3 : vector<1x512xi32>
    %c15_i32_0 = arith.constant 15 : i32
    %5 = vector.broadcast %c15_i32_0 : i32 to vector<1x512xi32>
    %6 = arith.andi %4, %5 : vector<1x512xi32>
    %c-1_i32 = arith.constant -1 : i32
    %7 = vector.broadcast %c-1_i32 : i32 to vector<1x512xi32>
    %8 = arith.addi %6, %7 : vector<1x512xi32>
    %c0_i32 = arith.constant 0 : i32
    %9 = vector.broadcast %c0_i32 : i32 to vector<1x512xi32>
    %10 = arith.cmpi sge, %8, %9 : vector<1x512xi32>
    %c-1_i32_1 = arith.constant -1 : i32
    %11 = vector.broadcast %c-1_i32_1 : i32 to vector<1x512xi32>
    %12 = arith.addi %6, %11 : vector<1x512xi32>
    %c16_i32 = arith.constant 16 : i32
    %13 = vector.broadcast %c16_i32 : i32 to vector<1x512xi32>
    %14 = arith.cmpi slt, %12, %13 : vector<1x512xi32>
    %15 = arith.andi %10, %14 : vector<1x512xi1>
    %c0_i32_2 = arith.constant 0 : i32
    %16 = vector.broadcast %c0_i32_2 : i32 to vector<1x512xi32>
    %17 = arith.addi %6, %16 : vector<1x512xi32>
    %c0_i32_3 = arith.constant 0 : i32
    %18 = vector.broadcast %c0_i32_3 : i32 to vector<1x512xi32>
    %19 = arith.cmpi sge, %17, %18 : vector<1x512xi32>
    %c0_i32_4 = arith.constant 0 : i32
    %20 = vector.broadcast %c0_i32_4 : i32 to vector<1x512xi32>
    %21 = arith.addi %6, %20 : vector<1x512xi32>
    %c16_i32_5 = arith.constant 16 : i32
    %22 = vector.broadcast %c16_i32_5 : i32 to vector<1x512xi32>
    %23 = arith.cmpi slt, %21, %22 : vector<1x512xi32>
    %24 = arith.andi %19, %23 : vector<1x512xi1>
    %c1_i32 = arith.constant 1 : i32
    %25 = vector.broadcast %c1_i32 : i32 to vector<1x512xi32>
    %26 = arith.addi %6, %25 : vector<1x512xi32>
    %c0_i32_6 = arith.constant 0 : i32
    %27 = vector.broadcast %c0_i32_6 : i32 to vector<1x512xi32>
    %28 = arith.cmpi sge, %26, %27 : vector<1x512xi32>
    %c1_i32_7 = arith.constant 1 : i32
    %29 = vector.broadcast %c1_i32_7 : i32 to vector<1x512xi32>
    %30 = arith.addi %6, %29 : vector<1x512xi32>
    %c16_i32_8 = arith.constant 16 : i32
    %31 = vector.broadcast %c16_i32_8 : i32 to vector<1x512xi32>
    %32 = arith.cmpi slt, %30, %31 : vector<1x512xi32>
    %33 = arith.andi %28, %32 : vector<1x512xi1>
    %c-1_i32_9 = arith.constant -1 : i32
    %34 = vector.broadcast %c-1_i32_9 : i32 to vector<1x512xi32>
    %35 = arith.addi %2, %34 : vector<1x512xi32>
    %c0_i32_10 = arith.constant 0 : i32
    %36 = vector.broadcast %c0_i32_10 : i32 to vector<1x512xi32>
    %37 = arith.cmpi sge, %35, %36 : vector<1x512xi32>
    %c-1_i32_11 = arith.constant -1 : i32
    %38 = vector.broadcast %c-1_i32_11 : i32 to vector<1x512xi32>
    %39 = arith.addi %2, %38 : vector<1x512xi32>
    %c16_i32_12 = arith.constant 16 : i32
    %40 = vector.broadcast %c16_i32_12 : i32 to vector<1x512xi32>
    %41 = arith.cmpi slt, %39, %40 : vector<1x512xi32>
    %42 = arith.andi %37, %41 : vector<1x512xi1>
    %c0_i32_13 = arith.constant 0 : i32
    %43 = vector.broadcast %c0_i32_13 : i32 to vector<1x512xi32>
    %44 = arith.addi %2, %43 : vector<1x512xi32>
    %c0_i32_14 = arith.constant 0 : i32
    %45 = vector.broadcast %c0_i32_14 : i32 to vector<1x512xi32>
    %46 = arith.cmpi sge, %44, %45 : vector<1x512xi32>
    %c0_i32_15 = arith.constant 0 : i32
    %47 = vector.broadcast %c0_i32_15 : i32 to vector<1x512xi32>
    %48 = arith.addi %2, %47 : vector<1x512xi32>
    %c16_i32_16 = arith.constant 16 : i32
    %49 = vector.broadcast %c16_i32_16 : i32 to vector<1x512xi32>
    %50 = arith.cmpi slt, %48, %49 : vector<1x512xi32>
    %51 = arith.andi %46, %50 : vector<1x512xi1>
    %c1_i32_17 = arith.constant 1 : i32
    %52 = vector.broadcast %c1_i32_17 : i32 to vector<1x512xi32>
    %53 = arith.addi %2, %52 : vector<1x512xi32>
    %c0_i32_18 = arith.constant 0 : i32
    %54 = vector.broadcast %c0_i32_18 : i32 to vector<1x512xi32>
    %55 = arith.cmpi sge, %53, %54 : vector<1x512xi32>
    %c1_i32_19 = arith.constant 1 : i32
    %56 = vector.broadcast %c1_i32_19 : i32 to vector<1x512xi32>
    %57 = arith.addi %2, %56 : vector<1x512xi32>
    %c16_i32_20 = arith.constant 16 : i32
    %58 = vector.broadcast %c16_i32_20 : i32 to vector<1x512xi32>
    %59 = arith.cmpi slt, %57, %58 : vector<1x512xi32>
    %60 = arith.andi %55, %59 : vector<1x512xi1>
    %c1_i32_21 = arith.constant 1 : i32
    %61 = vector.broadcast %c1_i32_21 : i32 to vector<1x512xi32>
    %62 = arith.andi %6, %61 : vector<1x512xi32>
    %c0_i32_22 = arith.constant 0 : i32
    %63 = vector.broadcast %c0_i32_22 : i32 to vector<1x512xi32>
    %64 = arith.cmpi eq, %62, %63 : vector<1x512xi32>
    %c1_i32_23 = arith.constant 1 : i32
    %65 = vector.broadcast %c1_i32_23 : i32 to vector<1x512xi32>
    %66 = arith.andi %2, %65 : vector<1x512xi32>
    %c0_i32_24 = arith.constant 0 : i32
    %67 = vector.broadcast %c0_i32_24 : i32 to vector<1x512xi32>
    %68 = arith.cmpi eq, %66, %67 : vector<1x512xi32>
    %c0 = arith.constant 0 : index
    %c0_25 = arith.constant 0 : index
    %c0_26 = arith.constant 0 : index
    %69 = vector.load %arg0[%c0, %c0_25, %c0_26] : memref<2x3x256xf32, #tpu.memory_space<vmem>>, vector<1x3x256xf32>
    %70 = vector.shape_cast %69 : vector<1x3x256xf32> to vector<3x256xf32>
    %c1 = arith.constant 1 : index
    %c0_27 = arith.constant 0 : index
    %c0_28 = arith.constant 0 : index
    %71 = vector.load %arg0[%c1, %c0_27, %c0_28] : memref<2x3x256xf32, #tpu.memory_space<vmem>>, vector<1x3x256xf32>
    %72 = vector.shape_cast %71 : vector<1x3x256xf32> to vector<3x256xf32>
    %73 = tpu.concatenate %70, %72 in 1 : vector<3x256xf32>, vector<3x256xf32> -> vector<3x512xf32>
    %cst = arith.constant 0.000000e+00 : f32
    %74 = vector.broadcast %cst : f32 to vector<16x512xf32>
    %c0_29 = arith.constant 0 : index
    %c0_30 = arith.constant 0 : index
    %c0_31 = arith.constant 0 : index
    %c0_32 = arith.constant 0 : index
    %75 = vector.load %arg1[%c0_29, %c0_30, %c0_31, %c0_32] : memref<3x3x16x3xf32, #tpu.memory_space<vmem>>, vector<1x1x16x3xf32>
    %76 = vector.shape_cast %75 : vector<1x1x16x3xf32> to vector<16x3xf32>
    %c17_i32 = arith.constant 17 : i32
    %77 = tpu.dynamic_rotate %73 by %c17_i32 dim 1 : vector<3x512xf32>, i32 -> vector<3x512xf32>
    %78 = arith.andi %15, %42 : vector<1x512xi1>
    %cst_33 = arith.constant 0.000000e+00 : f32
    %79 = vector.shape_cast %78 : vector<1x512xi1> to vector<1x512xi1>
    %80 = vector.broadcast %79 : vector<1x512xi1> to vector<3x512xi1>
    %81 = vector.broadcast %cst_33 : f32 to vector<3x512xf32>
    %82 = arith.select %80, %77, %81 : vector<3x512xi1>, vector<3x512xf32>
    %cst_34 = arith.constant dense<0.000000e+00> : vector<16x512xf32>
    %83 = tpu.matmul %76, %82, %cst_34 {dimension_numbers = #tpu.dot_dimension_numbers<[1], [0], [0], [1], [0, 0, 1, 1], [], []>} : vector<16x3xf32>, vector<3x512xf32>, vector<16x512xf32> -> vector<16x512xf32>
    %84 = arith.addf %74, %83 : vector<16x512xf32>
    %c0_35 = arith.constant 0 : index
    %c1_36 = arith.constant 1 : index
    %c0_37 = arith.constant 0 : index
    %c0_38 = arith.constant 0 : index
    %85 = vector.load %arg1[%c0_35, %c1_36, %c0_37, %c0_38] : memref<3x3x16x3xf32, #tpu.memory_space<vmem>>, vector<1x1x16x3xf32>
    %86 = vector.shape_cast %85 : vector<1x1x16x3xf32> to vector<16x3xf32>
    %c16_i32_39 = arith.constant 16 : i32
    %87 = tpu.dynamic_rotate %73 by %c16_i32_39 dim 1 : vector<3x512xf32>, i32 -> vector<3x512xf32>
    %88 = arith.andi %15, %51 : vector<1x512xi1>
    %cst_40 = arith.constant 0.000000e+00 : f32
    %89 = vector.shape_cast %88 : vector<1x512xi1> to vector<1x512xi1>
    %90 = vector.broadcast %89 : vector<1x512xi1> to vector<3x512xi1>
    %91 = vector.broadcast %cst_40 : f32 to vector<3x512xf32>
    %92 = arith.select %90, %87, %91 : vector<3x512xi1>, vector<3x512xf32>
    %cst_41 = arith.constant dense<0.000000e+00> : vector<16x512xf32>
    %93 = tpu.matmul %86, %92, %cst_41 {dimension_numbers = #tpu.dot_dimension_numbers<[1], [0], [0], [1], [0, 0, 1, 1], [], []>} : vector<16x3xf32>, vector<3x512xf32>, vector<16x512xf32> -> vector<16x512xf32>
    %94 = arith.addf %84, %93 : vector<16x512xf32>
    %c0_42 = arith.constant 0 : index
    %c2 = arith.constant 2 : index
    %c0_43 = arith.constant 0 : index
    %c0_44 = arith.constant 0 : index
    %95 = vector.load %arg1[%c0_42, %c2, %c0_43, %c0_44] : memref<3x3x16x3xf32, #tpu.memory_space<vmem>>, vector<1x1x16x3xf32>
    %96 = vector.shape_cast %95 : vector<1x1x16x3xf32> to vector<16x3xf32>
    %c15_i32_45 = arith.constant 15 : i32
    %97 = tpu.dynamic_rotate %73 by %c15_i32_45 dim 1 : vector<3x512xf32>, i32 -> vector<3x512xf32>
    %98 = arith.andi %15, %60 : vector<1x512xi1>
    %cst_46 = arith.constant 0.000000e+00 : f32
    %99 = vector.shape_cast %98 : vector<1x512xi1> to vector<1x512xi1>
    %100 = vector.broadcast %99 : vector<1x512xi1> to vector<3x512xi1>
    %101 = vector.broadcast %cst_46 : f32 to vector<3x512xf32>
    %102 = arith.select %100, %97, %101 : vector<3x512xi1>, vector<3x512xf32>
    %cst_47 = arith.constant dense<0.000000e+00> : vector<16x512xf32>
    %103 = tpu.matmul %96, %102, %cst_47 {dimension_numbers = #tpu.dot_dimension_numbers<[1], [0], [0], [1], [0, 0, 1, 1], [], []>} : vector<16x3xf32>, vector<3x512xf32>, vector<16x512xf32> -> vector<16x512xf32>
    %104 = arith.addf %94, %103 : vector<16x512xf32>
    %c1_48 = arith.constant 1 : index
    %c0_49 = arith.constant 0 : index
    %c0_50 = arith.constant 0 : index
    %c0_51 = arith.constant 0 : index
    %105 = vector.load %arg1[%c1_48, %c0_49, %c0_50, %c0_51] : memref<3x3x16x3xf32, #tpu.memory_space<vmem>>, vector<1x1x16x3xf32>
    %106 = vector.shape_cast %105 : vector<1x1x16x3xf32> to vector<16x3xf32>
    %c1_i32_52 = arith.constant 1 : i32
    %107 = tpu.dynamic_rotate %73 by %c1_i32_52 dim 1 : vector<3x512xf32>, i32 -> vector<3x512xf32>
    %108 = arith.andi %24, %42 : vector<1x512xi1>
    %cst_53 = arith.constant 0.000000e+00 : f32
    %109 = vector.shape_cast %108 : vector<1x512xi1> to vector<1x512xi1>
    %110 = vector.broadcast %109 : vector<1x512xi1> to vector<3x512xi1>
    %111 = vector.broadcast %cst_53 : f32 to vector<3x512xf32>
    %112 = arith.select %110, %107, %111 : vector<3x512xi1>, vector<3x512xf32>
    %cst_54 = arith.constant dense<0.000000e+00> : vector<16x512xf32>
    %113 = tpu.matmul %106, %112, %cst_54 {dimension_numbers = #tpu.dot_dimension_numbers<[1], [0], [0], [1], [0, 0, 1, 1], [], []>} : vector<16x3xf32>, vector<3x512xf32>, vector<16x512xf32> -> vector<16x512xf32>
    %114 = arith.addf %104, %113 : vector<16x512xf32>
    %c1_55 = arith.constant 1 : index
    %c1_56 = arith.constant 1 : index
    %c0_57 = arith.constant 0 : index
    %c0_58 = arith.constant 0 : index
    %115 = vector.load %arg1[%c1_55, %c1_56, %c0_57, %c0_58] : memref<3x3x16x3xf32, #tpu.memory_space<vmem>>, vector<1x1x16x3xf32>
    %116 = vector.shape_cast %115 : vector<1x1x16x3xf32> to vector<16x3xf32>
    %cst_59 = arith.constant dense<0.000000e+00> : vector<16x512xf32>
    %117 = tpu.matmul %116, %73, %cst_59 {dimension_numbers = #tpu.dot_dimension_numbers<[1], [0], [0], [1], [0, 0, 1, 1], [], []>} : vector<16x3xf32>, vector<3x512xf32>, vector<16x512xf32> -> vector<16x512xf32>
    %118 = arith.addf %114, %117 : vector<16x512xf32>
    %c1_60 = arith.constant 1 : index
    %c2_61 = arith.constant 2 : index
    %c0_62 = arith.constant 0 : index
    %c0_63 = arith.constant 0 : index
    %119 = vector.load %arg1[%c1_60, %c2_61, %c0_62, %c0_63] : memref<3x3x16x3xf32, #tpu.memory_space<vmem>>, vector<1x1x16x3xf32>
    %120 = vector.shape_cast %119 : vector<1x1x16x3xf32> to vector<16x3xf32>
    %c511_i32 = arith.constant 511 : i32
    %121 = tpu.dynamic_rotate %73 by %c511_i32 dim 1 : vector<3x512xf32>, i32 -> vector<3x512xf32>
    %122 = arith.andi %24, %60 : vector<1x512xi1>
    %cst_64 = arith.constant 0.000000e+00 : f32
    %123 = vector.shape_cast %122 : vector<1x512xi1> to vector<1x512xi1>
    %124 = vector.broadcast %123 : vector<1x512xi1> to vector<3x512xi1>
    %125 = vector.broadcast %cst_64 : f32 to vector<3x512xf32>
    %126 = arith.select %124, %121, %125 : vector<3x512xi1>, vector<3x512xf32>
    %cst_65 = arith.constant dense<0.000000e+00> : vector<16x512xf32>
    %127 = tpu.matmul %120, %126, %cst_65 {dimension_numbers = #tpu.dot_dimension_numbers<[1], [0], [0], [1], [0, 0, 1, 1], [], []>} : vector<16x3xf32>, vector<3x512xf32>, vector<16x512xf32> -> vector<16x512xf32>
    %128 = arith.addf %118, %127 : vector<16x512xf32>
    %c2_66 = arith.constant 2 : index
    %c0_67 = arith.constant 0 : index
    %c0_68 = arith.constant 0 : index
    %c0_69 = arith.constant 0 : index
    %129 = vector.load %arg1[%c2_66, %c0_67, %c0_68, %c0_69] : memref<3x3x16x3xf32, #tpu.memory_space<vmem>>, vector<1x1x16x3xf32>
    %130 = vector.shape_cast %129 : vector<1x1x16x3xf32> to vector<16x3xf32>
    %c497_i32 = arith.constant 497 : i32
    %131 = tpu.dynamic_rotate %73 by %c497_i32 dim 1 : vector<3x512xf32>, i32 -> vector<3x512xf32>
    %132 = arith.andi %33, %42 : vector<1x512xi1>
    %cst_70 = arith.constant 0.000000e+00 : f32
    %133 = vector.shape_cast %132 : vector<1x512xi1> to vector<1x512xi1>
    %134 = vector.broadcast %133 : vector<1x512xi1> to vector<3x512xi1>
    %135 = vector.broadcast %cst_70 : f32 to vector<3x512xf32>
    %136 = arith.select %134, %131, %135 : vector<3x512xi1>, vector<3x512xf32>
    %cst_71 = arith.constant dense<0.000000e+00> : vector<16x512xf32>
    %137 = tpu.matmul %130, %136, %cst_71 {dimension_numbers = #tpu.dot_dimension_numbers<[1], [0], [0], [1], [0, 0, 1, 1], [], []>} : vector<16x3xf32>, vector<3x512xf32>, vector<16x512xf32> -> vector<16x512xf32>
    %138 = arith.addf %128, %137 : vector<16x512xf32>
    %c2_72 = arith.constant 2 : index
    %c1_73 = arith.constant 1 : index
    %c0_74 = arith.constant 0 : index
    %c0_75 = arith.constant 0 : index
    %139 = vector.load %arg1[%c2_72, %c1_73, %c0_74, %c0_75] : memref<3x3x16x3xf32, #tpu.memory_space<vmem>>, vector<1x1x16x3xf32>
    %140 = vector.shape_cast %139 : vector<1x1x16x3xf32> to vector<16x3xf32>
    %c496_i32 = arith.constant 496 : i32
    %141 = tpu.dynamic_rotate %73 by %c496_i32 dim 1 : vector<3x512xf32>, i32 -> vector<3x512xf32>
    %142 = arith.andi %33, %51 : vector<1x512xi1>
    %cst_76 = arith.constant 0.000000e+00 : f32
    %143 = vector.shape_cast %142 : vector<1x512xi1> to vector<1x512xi1>
    %144 = vector.broadcast %143 : vector<1x512xi1> to vector<3x512xi1>
    %145 = vector.broadcast %cst_76 : f32 to vector<3x512xf32>
    %146 = arith.select %144, %141, %145 : vector<3x512xi1>, vector<3x512xf32>
    %cst_77 = arith.constant dense<0.000000e+00> : vector<16x512xf32>
    %147 = tpu.matmul %140, %146, %cst_77 {dimension_numbers = #tpu.dot_dimension_numbers<[1], [0], [0], [1], [0, 0, 1, 1], [], []>} : vector<16x3xf32>, vector<3x512xf32>, vector<16x512xf32> -> vector<16x512xf32>
    %148 = arith.addf %138, %147 : vector<16x512xf32>
    %c2_78 = arith.constant 2 : index
    %c2_79 = arith.constant 2 : index
    %c0_80 = arith.constant 0 : index
    %c0_81 = arith.constant 0 : index
    %149 = vector.load %arg1[%c2_78, %c2_79, %c0_80, %c0_81] : memref<3x3x16x3xf32, #tpu.memory_space<vmem>>, vector<1x1x16x3xf32>
    %150 = vector.shape_cast %149 : vector<1x1x16x3xf32> to vector<16x3xf32>
    %c495_i32 = arith.constant 495 : i32
    %151 = tpu.dynamic_rotate %73 by %c495_i32 dim 1 : vector<3x512xf32>, i32 -> vector<3x512xf32>
    %152 = arith.andi %33, %60 : vector<1x512xi1>
    %cst_82 = arith.constant 0.000000e+00 : f32
    %153 = vector.shape_cast %152 : vector<1x512xi1> to vector<1x512xi1>
    %154 = vector.broadcast %153 : vector<1x512xi1> to vector<3x512xi1>
    %155 = vector.broadcast %cst_82 : f32 to vector<3x512xf32>
    %156 = arith.select %154, %151, %155 : vector<3x512xi1>, vector<3x512xf32>
    %cst_83 = arith.constant dense<0.000000e+00> : vector<16x512xf32>
    %157 = tpu.matmul %150, %156, %cst_83 {dimension_numbers = #tpu.dot_dimension_numbers<[1], [0], [0], [1], [0, 0, 1, 1], [], []>} : vector<16x3xf32>, vector<3x512xf32>, vector<16x512xf32> -> vector<16x512xf32>
    %158 = arith.addf %148, %157 : vector<16x512xf32>
    %c0_84 = arith.constant 0 : index
    %c0_85 = arith.constant 0 : index
    %159 = vector.load %arg2[%c0_84, %c0_85] : memref<16x1xf32, #tpu.memory_space<vmem>>, vector<16x1xf32>
    %160 = vector.broadcast %159 : vector<16x1xf32> to vector<16x512xf32>
    %161 = arith.addf %158, %160 : vector<16x512xf32>
    %cst_86 = arith.constant dense<0.000000e+00> : vector<16xf32>
    %162 = vector.multi_reduction <add>, %161, %cst_86 [1] : vector<16x512xf32> to vector<16xf32>
    %163 = vector.shape_cast %162 : vector<16xf32> to vector<16x1xf32>
    %cst_87 = arith.constant 0.001953125 : f32
    %164 = vector.broadcast %cst_87 : f32 to vector<16x1xf32>
    %165 = arith.mulf %163, %164 : vector<16x1xf32>
    %166 = vector.broadcast %165 : vector<16x1xf32> to vector<16x512xf32>
    %167 = arith.subf %161, %166 : vector<16x512xf32>
    %168 = arith.mulf %167, %167 : vector<16x512xf32>
    %cst_88 = arith.constant dense<0.000000e+00> : vector<16xf32>
    %169 = vector.multi_reduction <add>, %168, %cst_88 [1] : vector<16x512xf32> to vector<16xf32>
    %170 = vector.shape_cast %169 : vector<16xf32> to vector<16x1xf32>
    %cst_89 = arith.constant 0.001953125 : f32
    %171 = vector.broadcast %cst_89 : f32 to vector<16x1xf32>
    %172 = arith.mulf %170, %171 : vector<16x1xf32>
    %cst_90 = arith.constant 0.000000e+00 : f32
    %173 = vector.broadcast %cst_90 : f32 to vector<16x1xf32>
    %174 = arith.maximumf %172, %173 : vector<16x1xf32>
    %c0_91 = arith.constant 0 : index
    %c0_92 = arith.constant 0 : index
    %175 = vector.load %arg3[%c0_91, %c0_92] : memref<16x1xf32, #tpu.memory_space<vmem>>, vector<16x1xf32>
    %cst_93 = arith.constant 9.99999974E-6 : f32
    %176 = vector.broadcast %cst_93 : f32 to vector<16x1xf32>
    %177 = arith.addf %174, %176 : vector<16x1xf32>
    %178 = math.rsqrt %177 : vector<16x1xf32>
    %179 = arith.mulf %175, %178 : vector<16x1xf32>
    %c0_94 = arith.constant 0 : index
    %c0_95 = arith.constant 0 : index
    %180 = vector.load %arg4[%c0_94, %c0_95] : memref<16x1xf32, #tpu.memory_space<vmem>>, vector<16x1xf32>
    %181 = arith.mulf %165, %179 : vector<16x1xf32>
    %182 = arith.subf %180, %181 : vector<16x1xf32>
    %183 = vector.broadcast %179 : vector<16x1xf32> to vector<16x512xf32>
    %184 = arith.mulf %161, %183 : vector<16x512xf32>
    %185 = vector.broadcast %182 : vector<16x1xf32> to vector<16x512xf32>
    %186 = arith.addf %184, %185 : vector<16x512xf32>
    %cst_96 = arith.constant 0.000000e+00 : f32
    %187 = vector.broadcast %cst_96 : f32 to vector<16x512xf32>
    %188 = arith.maximumf %186, %187 : vector<16x512xf32>
    %c496_i32_97 = arith.constant 496 : i32
    %189 = tpu.dynamic_rotate %188 by %c496_i32_97 dim 1 : vector<16x512xf32>, i32 -> vector<16x512xf32>
    %c16_i32_98 = arith.constant 16 : i32
    %190 = tpu.dynamic_rotate %188 by %c16_i32_98 dim 1 : vector<16x512xf32>, i32 -> vector<16x512xf32>
    %191 = vector.shape_cast %64 : vector<1x512xi1> to vector<1x512xi1>
    %192 = vector.broadcast %191 : vector<1x512xi1> to vector<16x512xi1>
    %193 = arith.select %192, %189, %190 : vector<16x512xi1>, vector<16x512xf32>
    %194 = arith.maximumf %188, %193 : vector<16x512xf32>
    %c511_i32_99 = arith.constant 511 : i32
    %195 = tpu.dynamic_rotate %194 by %c511_i32_99 dim 1 : vector<16x512xf32>, i32 -> vector<16x512xf32>
    %c1_i32_100 = arith.constant 1 : i32
    %196 = tpu.dynamic_rotate %194 by %c1_i32_100 dim 1 : vector<16x512xf32>, i32 -> vector<16x512xf32>
    %197 = vector.shape_cast %68 : vector<1x512xi1> to vector<1x512xi1>
    %198 = vector.broadcast %197 : vector<1x512xi1> to vector<16x512xi1>
    %199 = arith.select %198, %195, %196 : vector<16x512xi1>, vector<16x512xf32>
    %200 = arith.maximumf %194, %199 : vector<16x512xf32>
    %cst_101 = arith.constant 0.000000e+00 : f32
    %201 = vector.broadcast %cst_101 : f32 to vector<16x512xf32>
    %c1_i32_102 = arith.constant 1 : i32
    %202 = vector.broadcast %c1_i32_102 : i32 to vector<1x512xi32>
    %203 = arith.andi %6, %202 : vector<1x512xi32>
    %c0_i32_103 = arith.constant 0 : i32
    %204 = vector.broadcast %c0_i32_103 : i32 to vector<1x512xi32>
    %205 = arith.cmpi eq, %203, %204 : vector<1x512xi32>
    %c1_i32_104 = arith.constant 1 : i32
    %206 = vector.broadcast %c1_i32_104 : i32 to vector<1x512xi32>
    %207 = arith.andi %2, %206 : vector<1x512xi32>
    %c0_i32_105 = arith.constant 0 : i32
    %208 = vector.broadcast %c0_i32_105 : i32 to vector<1x512xi32>
    %209 = arith.cmpi eq, %207, %208 : vector<1x512xi32>
    %210 = arith.andi %205, %209 : vector<1x512xi1>
    %c0_106 = arith.constant 0 : index
    %c0_107 = arith.constant 0 : index
    %c0_108 = arith.constant 0 : index
    %c0_109 = arith.constant 0 : index
    %211 = vector.load %arg5[%c0_106, %c0_107, %c0_108, %c0_109] : memref<2x2x16x16xf32, #tpu.memory_space<vmem>>, vector<1x1x16x16xf32>
    %212 = vector.shape_cast %211 : vector<1x1x16x16xf32> to vector<16x16xf32>
    %cst_110 = arith.constant dense<0.000000e+00> : vector<16x512xf32>
    %213 = tpu.matmul %212, %200, %cst_110 {dimension_numbers = #tpu.dot_dimension_numbers<[1], [0], [0], [1], [0, 0, 1, 1], [], []>} : vector<16x16xf32>, vector<16x512xf32>, vector<16x512xf32> -> vector<16x512xf32>
    %cst_111 = arith.constant 0.000000e+00 : f32
    %214 = vector.shape_cast %210 : vector<1x512xi1> to vector<1x512xi1>
    %215 = vector.broadcast %214 : vector<1x512xi1> to vector<16x512xi1>
    %216 = vector.broadcast %cst_111 : f32 to vector<16x512xf32>
    %217 = arith.select %215, %213, %216 : vector<16x512xi1>, vector<16x512xf32>
    %218 = arith.addf %201, %217 : vector<16x512xf32>
    %c1_i32_112 = arith.constant 1 : i32
    %219 = vector.broadcast %c1_i32_112 : i32 to vector<1x512xi32>
    %220 = arith.andi %6, %219 : vector<1x512xi32>
    %c0_i32_113 = arith.constant 0 : i32
    %221 = vector.broadcast %c0_i32_113 : i32 to vector<1x512xi32>
    %222 = arith.cmpi eq, %220, %221 : vector<1x512xi32>
    %c1_i32_114 = arith.constant 1 : i32
    %223 = vector.broadcast %c1_i32_114 : i32 to vector<1x512xi32>
    %224 = arith.andi %2, %223 : vector<1x512xi32>
    %c1_i32_115 = arith.constant 1 : i32
    %225 = vector.broadcast %c1_i32_115 : i32 to vector<1x512xi32>
    %226 = arith.cmpi eq, %224, %225 : vector<1x512xi32>
    %227 = arith.andi %222, %226 : vector<1x512xi1>
    %c0_116 = arith.constant 0 : index
    %c1_117 = arith.constant 1 : index
    %c0_118 = arith.constant 0 : index
    %c0_119 = arith.constant 0 : index
    %228 = vector.load %arg5[%c0_116, %c1_117, %c0_118, %c0_119] : memref<2x2x16x16xf32, #tpu.memory_space<vmem>>, vector<1x1x16x16xf32>
    %229 = vector.shape_cast %228 : vector<1x1x16x16xf32> to vector<16x16xf32>
    %cst_120 = arith.constant dense<0.000000e+00> : vector<16x512xf32>
    %230 = tpu.matmul %229, %200, %cst_120 {dimension_numbers = #tpu.dot_dimension_numbers<[1], [0], [0], [1], [0, 0, 1, 1], [], []>} : vector<16x16xf32>, vector<16x512xf32>, vector<16x512xf32> -> vector<16x512xf32>
    %cst_121 = arith.constant 0.000000e+00 : f32
    %231 = vector.shape_cast %227 : vector<1x512xi1> to vector<1x512xi1>
    %232 = vector.broadcast %231 : vector<1x512xi1> to vector<16x512xi1>
    %233 = vector.broadcast %cst_121 : f32 to vector<16x512xf32>
    %234 = arith.select %232, %230, %233 : vector<16x512xi1>, vector<16x512xf32>
    %235 = arith.addf %218, %234 : vector<16x512xf32>
    %c1_i32_122 = arith.constant 1 : i32
    %236 = vector.broadcast %c1_i32_122 : i32 to vector<1x512xi32>
    %237 = arith.andi %6, %236 : vector<1x512xi32>
    %c1_i32_123 = arith.constant 1 : i32
    %238 = vector.broadcast %c1_i32_123 : i32 to vector<1x512xi32>
    %239 = arith.cmpi eq, %237, %238 : vector<1x512xi32>
    %c1_i32_124 = arith.constant 1 : i32
    %240 = vector.broadcast %c1_i32_124 : i32 to vector<1x512xi32>
    %241 = arith.andi %2, %240 : vector<1x512xi32>
    %c0_i32_125 = arith.constant 0 : i32
    %242 = vector.broadcast %c0_i32_125 : i32 to vector<1x512xi32>
    %243 = arith.cmpi eq, %241, %242 : vector<1x512xi32>
    %244 = arith.andi %239, %243 : vector<1x512xi1>
    %c1_126 = arith.constant 1 : index
    %c0_127 = arith.constant 0 : index
    %c0_128 = arith.constant 0 : index
    %c0_129 = arith.constant 0 : index
    %245 = vector.load %arg5[%c1_126, %c0_127, %c0_128, %c0_129] : memref<2x2x16x16xf32, #tpu.memory_space<vmem>>, vector<1x1x16x16xf32>
    %246 = vector.shape_cast %245 : vector<1x1x16x16xf32> to vector<16x16xf32>
    %cst_130 = arith.constant dense<0.000000e+00> : vector<16x512xf32>
    %247 = tpu.matmul %246, %200, %cst_130 {dimension_numbers = #tpu.dot_dimension_numbers<[1], [0], [0], [1], [0, 0, 1, 1], [], []>} : vector<16x16xf32>, vector<16x512xf32>, vector<16x512xf32> -> vector<16x512xf32>
    %cst_131 = arith.constant 0.000000e+00 : f32
    %248 = vector.shape_cast %244 : vector<1x512xi1> to vector<1x512xi1>
    %249 = vector.broadcast %248 : vector<1x512xi1> to vector<16x512xi1>
    %250 = vector.broadcast %cst_131 : f32 to vector<16x512xf32>
    %251 = arith.select %249, %247, %250 : vector<16x512xi1>, vector<16x512xf32>
    %252 = arith.addf %235, %251 : vector<16x512xf32>
    %c1_i32_132 = arith.constant 1 : i32
    %253 = vector.broadcast %c1_i32_132 : i32 to vector<1x512xi32>
    %254 = arith.andi %6, %253 : vector<1x512xi32>
    %c1_i32_133 = arith.constant 1 : i32
    %255 = vector.broadcast %c1_i32_133 : i32 to vector<1x512xi32>
    %256 = arith.cmpi eq, %254, %255 : vector<1x512xi32>
    %c1_i32_134 = arith.constant 1 : i32
    %257 = vector.broadcast %c1_i32_134 : i32 to vector<1x512xi32>
    %258 = arith.andi %2, %257 : vector<1x512xi32>
    %c1_i32_135 = arith.constant 1 : i32
    %259 = vector.broadcast %c1_i32_135 : i32 to vector<1x512xi32>
    %260 = arith.cmpi eq, %258, %259 : vector<1x512xi32>
    %261 = arith.andi %256, %260 : vector<1x512xi1>
    %c1_136 = arith.constant 1 : index
    %c1_137 = arith.constant 1 : index
    %c0_138 = arith.constant 0 : index
    %c0_139 = arith.constant 0 : index
    %262 = vector.load %arg5[%c1_136, %c1_137, %c0_138, %c0_139] : memref<2x2x16x16xf32, #tpu.memory_space<vmem>>, vector<1x1x16x16xf32>
    %263 = vector.shape_cast %262 : vector<1x1x16x16xf32> to vector<16x16xf32>
    %cst_140 = arith.constant dense<0.000000e+00> : vector<16x512xf32>
    %264 = tpu.matmul %263, %200, %cst_140 {dimension_numbers = #tpu.dot_dimension_numbers<[1], [0], [0], [1], [0, 0, 1, 1], [], []>} : vector<16x16xf32>, vector<16x512xf32>, vector<16x512xf32> -> vector<16x512xf32>
    %cst_141 = arith.constant 0.000000e+00 : f32
    %265 = vector.shape_cast %261 : vector<1x512xi1> to vector<1x512xi1>
    %266 = vector.broadcast %265 : vector<1x512xi1> to vector<16x512xi1>
    %267 = vector.broadcast %cst_141 : f32 to vector<16x512xf32>
    %268 = arith.select %266, %264, %267 : vector<16x512xi1>, vector<16x512xf32>
    %269 = arith.addf %252, %268 : vector<16x512xf32>
    %c0_142 = arith.constant 0 : index
    %c0_143 = arith.constant 0 : index
    %270 = vector.load %arg6[%c0_142, %c0_143] : memref<16x1xf32, #tpu.memory_space<vmem>>, vector<16x1xf32>
    %271 = vector.broadcast %270 : vector<16x1xf32> to vector<16x512xf32>
    %272 = arith.addf %269, %271 : vector<16x512xf32>
    %cst_144 = arith.constant dense<0.000000e+00> : vector<16xf32>
    %273 = vector.multi_reduction <add>, %272, %cst_144 [1] : vector<16x512xf32> to vector<16xf32>
    %274 = vector.shape_cast %273 : vector<16xf32> to vector<16x1xf32>
    %cst_145 = arith.constant 0.001953125 : f32
    %275 = vector.broadcast %cst_145 : f32 to vector<16x1xf32>
    %276 = arith.mulf %274, %275 : vector<16x1xf32>
    %277 = vector.broadcast %276 : vector<16x1xf32> to vector<16x512xf32>
    %278 = arith.subf %272, %277 : vector<16x512xf32>
    %279 = arith.mulf %278, %278 : vector<16x512xf32>
    %cst_146 = arith.constant dense<0.000000e+00> : vector<16xf32>
    %280 = vector.multi_reduction <add>, %279, %cst_146 [1] : vector<16x512xf32> to vector<16xf32>
    %281 = vector.shape_cast %280 : vector<16xf32> to vector<16x1xf32>
    %cst_147 = arith.constant 0.001953125 : f32
    %282 = vector.broadcast %cst_147 : f32 to vector<16x1xf32>
    %283 = arith.mulf %281, %282 : vector<16x1xf32>
    %cst_148 = arith.constant 0.000000e+00 : f32
    %284 = vector.broadcast %cst_148 : f32 to vector<16x1xf32>
    %285 = arith.maximumf %283, %284 : vector<16x1xf32>
    %c0_149 = arith.constant 0 : index
    %c0_150 = arith.constant 0 : index
    %286 = vector.load %arg7[%c0_149, %c0_150] : memref<16x1xf32, #tpu.memory_space<vmem>>, vector<16x1xf32>
    %cst_151 = arith.constant 9.99999974E-6 : f32
    %287 = vector.broadcast %cst_151 : f32 to vector<16x1xf32>
    %288 = arith.addf %285, %287 : vector<16x1xf32>
    %289 = math.rsqrt %288 : vector<16x1xf32>
    %290 = arith.mulf %286, %289 : vector<16x1xf32>
    %c0_152 = arith.constant 0 : index
    %c0_153 = arith.constant 0 : index
    %291 = vector.load %arg8[%c0_152, %c0_153] : memref<16x1xf32, #tpu.memory_space<vmem>>, vector<16x1xf32>
    %292 = arith.mulf %276, %290 : vector<16x1xf32>
    %293 = arith.subf %291, %292 : vector<16x1xf32>
    %294 = vector.broadcast %290 : vector<16x1xf32> to vector<16x512xf32>
    %295 = arith.mulf %272, %294 : vector<16x512xf32>
    %296 = vector.broadcast %293 : vector<16x1xf32> to vector<16x512xf32>
    %297 = arith.addf %295, %296 : vector<16x512xf32>
    %cst_154 = arith.constant 0.000000e+00 : f32
    %298 = vector.broadcast %cst_154 : f32 to vector<16x512xf32>
    %299 = arith.maximumf %297, %298 : vector<16x512xf32>
    %cst_155 = arith.constant 0.000000e+00 : f32
    %300 = vector.broadcast %cst_155 : f32 to vector<3x512xf32>
    %c0_156 = arith.constant 0 : index
    %c0_157 = arith.constant 0 : index
    %c0_158 = arith.constant 0 : index
    %c0_159 = arith.constant 0 : index
    %301 = vector.load %arg9[%c0_156, %c0_157, %c0_158, %c0_159] : memref<3x3x3x16xf32, #tpu.memory_space<vmem>>, vector<1x1x3x16xf32>
    %302 = vector.shape_cast %301 : vector<1x1x3x16xf32> to vector<3x16xf32>
    %c17_i32_160 = arith.constant 17 : i32
    %303 = tpu.dynamic_rotate %299 by %c17_i32_160 dim 1 : vector<16x512xf32>, i32 -> vector<16x512xf32>
    %304 = arith.andi %15, %42 : vector<1x512xi1>
    %cst_161 = arith.constant 0.000000e+00 : f32
    %305 = vector.shape_cast %304 : vector<1x512xi1> to vector<1x512xi1>
    %306 = vector.broadcast %305 : vector<1x512xi1> to vector<16x512xi1>
    %307 = vector.broadcast %cst_161 : f32 to vector<16x512xf32>
    %308 = arith.select %306, %303, %307 : vector<16x512xi1>, vector<16x512xf32>
    %cst_162 = arith.constant dense<0.000000e+00> : vector<3x512xf32>
    %309 = tpu.matmul %302, %308, %cst_162 {dimension_numbers = #tpu.dot_dimension_numbers<[1], [0], [0], [1], [0, 0, 1, 1], [], []>} : vector<3x16xf32>, vector<16x512xf32>, vector<3x512xf32> -> vector<3x512xf32>
    %310 = arith.addf %300, %309 : vector<3x512xf32>
    %c0_163 = arith.constant 0 : index
    %c1_164 = arith.constant 1 : index
    %c0_165 = arith.constant 0 : index
    %c0_166 = arith.constant 0 : index
    %311 = vector.load %arg9[%c0_163, %c1_164, %c0_165, %c0_166] : memref<3x3x3x16xf32, #tpu.memory_space<vmem>>, vector<1x1x3x16xf32>
    %312 = vector.shape_cast %311 : vector<1x1x3x16xf32> to vector<3x16xf32>
    %c16_i32_167 = arith.constant 16 : i32
    %313 = tpu.dynamic_rotate %299 by %c16_i32_167 dim 1 : vector<16x512xf32>, i32 -> vector<16x512xf32>
    %314 = arith.andi %15, %51 : vector<1x512xi1>
    %cst_168 = arith.constant 0.000000e+00 : f32
    %315 = vector.shape_cast %314 : vector<1x512xi1> to vector<1x512xi1>
    %316 = vector.broadcast %315 : vector<1x512xi1> to vector<16x512xi1>
    %317 = vector.broadcast %cst_168 : f32 to vector<16x512xf32>
    %318 = arith.select %316, %313, %317 : vector<16x512xi1>, vector<16x512xf32>
    %cst_169 = arith.constant dense<0.000000e+00> : vector<3x512xf32>
    %319 = tpu.matmul %312, %318, %cst_169 {dimension_numbers = #tpu.dot_dimension_numbers<[1], [0], [0], [1], [0, 0, 1, 1], [], []>} : vector<3x16xf32>, vector<16x512xf32>, vector<3x512xf32> -> vector<3x512xf32>
    %320 = arith.addf %310, %319 : vector<3x512xf32>
    %c0_170 = arith.constant 0 : index
    %c2_171 = arith.constant 2 : index
    %c0_172 = arith.constant 0 : index
    %c0_173 = arith.constant 0 : index
    %321 = vector.load %arg9[%c0_170, %c2_171, %c0_172, %c0_173] : memref<3x3x3x16xf32, #tpu.memory_space<vmem>>, vector<1x1x3x16xf32>
    %322 = vector.shape_cast %321 : vector<1x1x3x16xf32> to vector<3x16xf32>
    %c15_i32_174 = arith.constant 15 : i32
    %323 = tpu.dynamic_rotate %299 by %c15_i32_174 dim 1 : vector<16x512xf32>, i32 -> vector<16x512xf32>
    %324 = arith.andi %15, %60 : vector<1x512xi1>
    %cst_175 = arith.constant 0.000000e+00 : f32
    %325 = vector.shape_cast %324 : vector<1x512xi1> to vector<1x512xi1>
    %326 = vector.broadcast %325 : vector<1x512xi1> to vector<16x512xi1>
    %327 = vector.broadcast %cst_175 : f32 to vector<16x512xf32>
    %328 = arith.select %326, %323, %327 : vector<16x512xi1>, vector<16x512xf32>
    %cst_176 = arith.constant dense<0.000000e+00> : vector<3x512xf32>
    %329 = tpu.matmul %322, %328, %cst_176 {dimension_numbers = #tpu.dot_dimension_numbers<[1], [0], [0], [1], [0, 0, 1, 1], [], []>} : vector<3x16xf32>, vector<16x512xf32>, vector<3x512xf32> -> vector<3x512xf32>
    %330 = arith.addf %320, %329 : vector<3x512xf32>
    %c1_177 = arith.constant 1 : index
    %c0_178 = arith.constant 0 : index
    %c0_179 = arith.constant 0 : index
    %c0_180 = arith.constant 0 : index
    %331 = vector.load %arg9[%c1_177, %c0_178, %c0_179, %c0_180] : memref<3x3x3x16xf32, #tpu.memory_space<vmem>>, vector<1x1x3x16xf32>
    %332 = vector.shape_cast %331 : vector<1x1x3x16xf32> to vector<3x16xf32>
    %c1_i32_181 = arith.constant 1 : i32
    %333 = tpu.dynamic_rotate %299 by %c1_i32_181 dim 1 : vector<16x512xf32>, i32 -> vector<16x512xf32>
    %334 = arith.andi %24, %42 : vector<1x512xi1>
    %cst_182 = arith.constant 0.000000e+00 : f32
    %335 = vector.shape_cast %334 : vector<1x512xi1> to vector<1x512xi1>
    %336 = vector.broadcast %335 : vector<1x512xi1> to vector<16x512xi1>
    %337 = vector.broadcast %cst_182 : f32 to vector<16x512xf32>
    %338 = arith.select %336, %333, %337 : vector<16x512xi1>, vector<16x512xf32>
    %cst_183 = arith.constant dense<0.000000e+00> : vector<3x512xf32>
    %339 = tpu.matmul %332, %338, %cst_183 {dimension_numbers = #tpu.dot_dimension_numbers<[1], [0], [0], [1], [0, 0, 1, 1], [], []>} : vector<3x16xf32>, vector<16x512xf32>, vector<3x512xf32> -> vector<3x512xf32>
    %340 = arith.addf %330, %339 : vector<3x512xf32>
    %c1_184 = arith.constant 1 : index
    %c1_185 = arith.constant 1 : index
    %c0_186 = arith.constant 0 : index
    %c0_187 = arith.constant 0 : index
    %341 = vector.load %arg9[%c1_184, %c1_185, %c0_186, %c0_187] : memref<3x3x3x16xf32, #tpu.memory_space<vmem>>, vector<1x1x3x16xf32>
    %342 = vector.shape_cast %341 : vector<1x1x3x16xf32> to vector<3x16xf32>
    %cst_188 = arith.constant dense<0.000000e+00> : vector<3x512xf32>
    %343 = tpu.matmul %342, %299, %cst_188 {dimension_numbers = #tpu.dot_dimension_numbers<[1], [0], [0], [1], [0, 0, 1, 1], [], []>} : vector<3x16xf32>, vector<16x512xf32>, vector<3x512xf32> -> vector<3x512xf32>
    %344 = arith.addf %340, %343 : vector<3x512xf32>
    %c1_189 = arith.constant 1 : index
    %c2_190 = arith.constant 2 : index
    %c0_191 = arith.constant 0 : index
    %c0_192 = arith.constant 0 : index
    %345 = vector.load %arg9[%c1_189, %c2_190, %c0_191, %c0_192] : memref<3x3x3x16xf32, #tpu.memory_space<vmem>>, vector<1x1x3x16xf32>
    %346 = vector.shape_cast %345 : vector<1x1x3x16xf32> to vector<3x16xf32>
    %c511_i32_193 = arith.constant 511 : i32
    %347 = tpu.dynamic_rotate %299 by %c511_i32_193 dim 1 : vector<16x512xf32>, i32 -> vector<16x512xf32>
    %348 = arith.andi %24, %60 : vector<1x512xi1>
    %cst_194 = arith.constant 0.000000e+00 : f32
    %349 = vector.shape_cast %348 : vector<1x512xi1> to vector<1x512xi1>
    %350 = vector.broadcast %349 : vector<1x512xi1> to vector<16x512xi1>
    %351 = vector.broadcast %cst_194 : f32 to vector<16x512xf32>
    %352 = arith.select %350, %347, %351 : vector<16x512xi1>, vector<16x512xf32>
    %cst_195 = arith.constant dense<0.000000e+00> : vector<3x512xf32>
    %353 = tpu.matmul %346, %352, %cst_195 {dimension_numbers = #tpu.dot_dimension_numbers<[1], [0], [0], [1], [0, 0, 1, 1], [], []>} : vector<3x16xf32>, vector<16x512xf32>, vector<3x512xf32> -> vector<3x512xf32>
    %354 = arith.addf %344, %353 : vector<3x512xf32>
    %c2_196 = arith.constant 2 : index
    %c0_197 = arith.constant 0 : index
    %c0_198 = arith.constant 0 : index
    %c0_199 = arith.constant 0 : index
    %355 = vector.load %arg9[%c2_196, %c0_197, %c0_198, %c0_199] : memref<3x3x3x16xf32, #tpu.memory_space<vmem>>, vector<1x1x3x16xf32>
    %356 = vector.shape_cast %355 : vector<1x1x3x16xf32> to vector<3x16xf32>
    %c497_i32_200 = arith.constant 497 : i32
    %357 = tpu.dynamic_rotate %299 by %c497_i32_200 dim 1 : vector<16x512xf32>, i32 -> vector<16x512xf32>
    %358 = arith.andi %33, %42 : vector<1x512xi1>
    %cst_201 = arith.constant 0.000000e+00 : f32
    %359 = vector.shape_cast %358 : vector<1x512xi1> to vector<1x512xi1>
    %360 = vector.broadcast %359 : vector<1x512xi1> to vector<16x512xi1>
    %361 = vector.broadcast %cst_201 : f32 to vector<16x512xf32>
    %362 = arith.select %360, %357, %361 : vector<16x512xi1>, vector<16x512xf32>
    %cst_202 = arith.constant dense<0.000000e+00> : vector<3x512xf32>
    %363 = tpu.matmul %356, %362, %cst_202 {dimension_numbers = #tpu.dot_dimension_numbers<[1], [0], [0], [1], [0, 0, 1, 1], [], []>} : vector<3x16xf32>, vector<16x512xf32>, vector<3x512xf32> -> vector<3x512xf32>
    %364 = arith.addf %354, %363 : vector<3x512xf32>
    %c2_203 = arith.constant 2 : index
    %c1_204 = arith.constant 1 : index
    %c0_205 = arith.constant 0 : index
    %c0_206 = arith.constant 0 : index
    %365 = vector.load %arg9[%c2_203, %c1_204, %c0_205, %c0_206] : memref<3x3x3x16xf32, #tpu.memory_space<vmem>>, vector<1x1x3x16xf32>
    %366 = vector.shape_cast %365 : vector<1x1x3x16xf32> to vector<3x16xf32>
    %c496_i32_207 = arith.constant 496 : i32
    %367 = tpu.dynamic_rotate %299 by %c496_i32_207 dim 1 : vector<16x512xf32>, i32 -> vector<16x512xf32>
    %368 = arith.andi %33, %51 : vector<1x512xi1>
    %cst_208 = arith.constant 0.000000e+00 : f32
    %369 = vector.shape_cast %368 : vector<1x512xi1> to vector<1x512xi1>
    %370 = vector.broadcast %369 : vector<1x512xi1> to vector<16x512xi1>
    %371 = vector.broadcast %cst_208 : f32 to vector<16x512xf32>
    %372 = arith.select %370, %367, %371 : vector<16x512xi1>, vector<16x512xf32>
    %cst_209 = arith.constant dense<0.000000e+00> : vector<3x512xf32>
    %373 = tpu.matmul %366, %372, %cst_209 {dimension_numbers = #tpu.dot_dimension_numbers<[1], [0], [0], [1], [0, 0, 1, 1], [], []>} : vector<3x16xf32>, vector<16x512xf32>, vector<3x512xf32> -> vector<3x512xf32>
    %374 = arith.addf %364, %373 : vector<3x512xf32>
    %c2_210 = arith.constant 2 : index
    %c2_211 = arith.constant 2 : index
    %c0_212 = arith.constant 0 : index
    %c0_213 = arith.constant 0 : index
    %375 = vector.load %arg9[%c2_210, %c2_211, %c0_212, %c0_213] : memref<3x3x3x16xf32, #tpu.memory_space<vmem>>, vector<1x1x3x16xf32>
    %376 = vector.shape_cast %375 : vector<1x1x3x16xf32> to vector<3x16xf32>
    %c495_i32_214 = arith.constant 495 : i32
    %377 = tpu.dynamic_rotate %299 by %c495_i32_214 dim 1 : vector<16x512xf32>, i32 -> vector<16x512xf32>
    %378 = arith.andi %33, %60 : vector<1x512xi1>
    %cst_215 = arith.constant 0.000000e+00 : f32
    %379 = vector.shape_cast %378 : vector<1x512xi1> to vector<1x512xi1>
    %380 = vector.broadcast %379 : vector<1x512xi1> to vector<16x512xi1>
    %381 = vector.broadcast %cst_215 : f32 to vector<16x512xf32>
    %382 = arith.select %380, %377, %381 : vector<16x512xi1>, vector<16x512xf32>
    %cst_216 = arith.constant dense<0.000000e+00> : vector<3x512xf32>
    %383 = tpu.matmul %376, %382, %cst_216 {dimension_numbers = #tpu.dot_dimension_numbers<[1], [0], [0], [1], [0, 0, 1, 1], [], []>} : vector<3x16xf32>, vector<16x512xf32>, vector<3x512xf32> -> vector<3x512xf32>
    %384 = arith.addf %374, %383 : vector<3x512xf32>
    %c0_217 = arith.constant 0 : index
    %c0_218 = arith.constant 0 : index
    %385 = vector.load %arg10[%c0_217, %c0_218] : memref<3x1xf32, #tpu.memory_space<vmem>>, vector<3x1xf32>
    %386 = vector.broadcast %385 : vector<3x1xf32> to vector<3x512xf32>
    %387 = arith.addf %384, %386 : vector<3x512xf32>
    %388 = vector.extract_strided_slice %387 {offsets = [0, 0], sizes = [3, 256], strides = [1, 1]} : vector<3x512xf32> to vector<3x256xf32>
    %c0_219 = arith.constant 0 : index
    %c0_220 = arith.constant 0 : index
    %389 = vector.load %arg11[%c0_219, %c0_220] : memref<6x256xf32, #tpu.memory_space<vmem>>, vector<3x256xf32>
    tpu.vector_store %arg11[%c0_219, %c0_220], %388 {strides = array<i32>} : memref<6x256xf32, #tpu.memory_space<vmem>>, vector<3x256xf32>,
    %390 = vector.extract_strided_slice %387 {offsets = [0, 256], sizes = [3, 256], strides = [1, 1]} : vector<3x512xf32> to vector<3x256xf32>
    %c3 = arith.constant 3 : index
    %c0_221 = arith.constant 0 : index
    %391 = vector.load %arg11[%c3, %c0_221] : memref<6x256xf32, #tpu.memory_space<vmem>>, vector<3x256xf32>
    tpu.vector_store %arg11[%c3, %c0_221], %390 {strides = array<i32>} : memref<6x256xf32, #tpu.memory_space<vmem>>, vector<3x256xf32>,
    return
  }
}

</mosaic_0001>

<llo_original>
// kernel: one_stage_ae_forward.1
$region0: #{one_stage_ae_forward.1}
  #allocation0 [shape = 'u32[]', space=smem, size = 0x4, offset = 0x4, fixed_abs, tag = 'smem constant byte address 0x4 - core index']
  #allocation1 [shape = 'u32[72,128]{1,0:T(1,128)}', space=vmem, size = 0x9000, scoped, tag = 'internal scratch']
  %s0 = inlined_call_operand.vmem [shape: f32[2,3,256], index: 0, kind: input, shape index: {}]
  %s1 = inlined_call_operand.vmem [shape: f32[3,3,16,3], index: 1, kind: input, shape index: {}]
  %s2 = inlined_call_operand.vmem [shape: f32[16,1], index: 2, kind: input, shape index: {}]
  %s3 = inlined_call_operand.vmem [shape: f32[16,1], index: 3, kind: input, shape index: {}]
  %s4 = inlined_call_operand.vmem [shape: f32[16,1], index: 4, kind: input, shape index: {}]
  %s5 = inlined_call_operand.vmem [shape: f32[2,2,16,16], index: 5, kind: input, shape index: {}]
  %s6 = inlined_call_operand.vmem [shape: f32[16,1], index: 6, kind: input, shape index: {}]
  %s7 = inlined_call_operand.vmem [shape: f32[16,1], index: 7, kind: input, shape index: {}]
  %s8 = inlined_call_operand.vmem [shape: f32[16,1], index: 8, kind: input, shape index: {}]
  %s9 = inlined_call_operand.vmem [shape: f32[3,3,3,16], index: 9, kind: input, shape index: {}]
  %s10 = inlined_call_operand.vmem [shape: f32[3,1], index: 10, kind: input, shape index: {}]
  %s11 = inlined_call_operand.vmem [shape: f32[6,256], index: 11, kind: output, shape index: {}]
  %s12 = sld [smem:[#allocation0]]
  $region54: #{one_stage_ae_forward.1} parent=0
    _
  %s14 = ssub.s32 1, %s12
  %s15 = scalar_select 0, %s14, %s12
  // Predicated region
  $region2: #{one_stage_ae_forward.1} parent=0 // pred_check
    _
  $region3: #{one_stage_ae_forward.1} parent=0 // pred_check_branch
    %17 = sbr.rel (0) target = $region5
  $region4: #{one_stage_ae_forward.1} parent=0 // pred_region
    _
  $region5: #{one_stage_ae_forward.1} parent=0 // pred_fallthru
    _
  // Predicated region
  $region6: #{one_stage_ae_forward.1} parent=0 // pred_check
    _
  $region7: #{one_stage_ae_forward.1} parent=0 // pred_check_branch
    %19 = sbr.rel (0) target = $region9
  $region8: #{one_stage_ae_forward.1} parent=0 // pred_region
    _
  $region9: #{one_stage_ae_forward.1} parent=0 // pred_fallthru
    _
  // Predicated region
  $region10: #{one_stage_ae_forward.1} parent=0 // pred_check
    _
  $region11: #{one_stage_ae_forward.1} parent=0 // pred_check_branch
    %21 = sbr.rel (0) target = $region13
  $region12: #{one_stage_ae_forward.1} parent=0 // pred_region
    _
  $region13: #{one_stage_ae_forward.1} parent=0 // pred_fallthru
    _
  // Predicated region
  $region14: #{one_stage_ae_forward.1} parent=0 // pred_check
    _
  $region15: #{one_stage_ae_forward.1} parent=0 // pred_check_branch
    %23 = sbr.rel (0) target = $region17
  $region16: #{one_stage_ae_forward.1} parent=0 // pred_region
    _
  $region17: #{one_stage_ae_forward.1} parent=0 // pred_fallthru
    _
  // Predicated region
  $region18: #{one_stage_ae_forward.1} parent=0 // pred_check
    _
  $region19: #{one_stage_ae_forward.1} parent=0 // pred_check_branch
    %25 = sbr.rel (0) target = $region21
  $region20: #{one_stage_ae_forward.1} parent=0 // pred_region
    _
  $region21: #{one_stage_ae_forward.1} parent=0 // pred_fallthru
    _
  // Predicated region
  $region22: #{one_stage_ae_forward.1} parent=0 // pred_check
    _
  $region23: #{one_stage_ae_forward.1} parent=0 // pred_check_branch
    %27 = sbr.rel (0) target = $region25
  $region24: #{one_stage_ae_forward.1} parent=0 // pred_region
    _
  $region25: #{one_stage_ae_forward.1} parent=0 // pred_fallthru
    _
  // Predicated region
  $region26: #{one_stage_ae_forward.1} parent=0 // pred_check
    _
  $region27: #{one_stage_ae_forward.1} parent=0 // pred_check_branch
    %29 = sbr.rel (0) target = $region29
  $region28: #{one_stage_ae_forward.1} parent=0 // pred_region
    _
  $region29: #{one_stage_ae_forward.1} parent=0 // pred_fallthru
    _
  // Predicated region
  $region30: #{one_stage_ae_forward.1} parent=0 // pred_check
    _
  $region31: #{one_stage_ae_forward.1} parent=0 // pred_check_branch
    %31 = sbr.rel (0) target = $region33
  $region32: #{one_stage_ae_forward.1} parent=0 // pred_region
    _
  $region33: #{one_stage_ae_forward.1} parent=0 // pred_fallthru
    _
  // Predicated region
  $region34: #{one_stage_ae_forward.1} parent=0 // pred_check
    _
  $region35: #{one_stage_ae_forward.1} parent=0 // pred_check_branch
    %33 = sbr.rel (0) target = $region37
  $region36: #{one_stage_ae_forward.1} parent=0 // pred_region
    _
  $region37: #{one_stage_ae_forward.1} parent=0 // pred_fallthru
    _
  // Predicated region
  $region38: #{one_stage_ae_forward.1} parent=0 // pred_check
    _
  $region39: #{one_stage_ae_forward.1} parent=0 // pred_check_branch
    %35 = sbr.rel (0) target = $region41
  $region40: #{one_stage_ae_forward.1} parent=0 // pred_region
    _
  $region41: #{one_stage_ae_forward.1} parent=0 // pred_fallthru
    _
  // Predicated region
  $region42: #{one_stage_ae_forward.1} parent=0 // pred_check
    _
  $region43: #{one_stage_ae_forward.1} parent=0 // pred_check_branch
    %37 = sbr.rel (0) target = $region45
  $region44: #{one_stage_ae_forward.1} parent=0 // pred_region
    _
  $region45: #{one_stage_ae_forward.1} parent=0 // pred_fallthru
    _
  %v38 = vlaneseq
  %v39 = vand.u32 %v38, 127
  %v40 = vadd.s32 %v39, 128
  %v41 = vadd.s32 %v39, 256
  %v42 = vadd.s32 %v39, 384
  %v43 = vand.u32 %v39, 15
  %v44 = vand.u32 %v40, 15
  %v45 = vand.u32 %v41, 15
  %v46 = vand.u32 %v42, 15
  %v47 = vshra.s32 %v39, 4
  %v48 = vshra.s32 %v40, 4
  %v49 = vshra.s32 %v41, 4
  %v50 = vshra.s32 %v42, 4
  %v51 = vand.u32 %v47, 15
  %v52 = vand.u32 %v48, 15
  %v53 = vand.u32 %v49, 15
  %v54 = vand.u32 %v50, 15
  %v55 = vadd.s32 %v51, 4294967295
  %v56 = vadd.s32 %v52, 4294967295
  %v57 = vadd.s32 %v53, 4294967295
  %v58 = vadd.s32 %v54, 4294967295
  %vm59 = vcmp.ge.s32.totalorder %v55, 0
  %vm60 = vcmp.ge.s32.totalorder %v56, 0
  %vm61 = vcmp.ge.s32.totalorder %v57, 0
  %vm62 = vcmp.ge.s32.totalorder %v58, 0
  %vm63 = vcmp.lt.s32.totalorder %v55, 16
  %vm64 = vcmp.lt.s32.totalorder %v56, 16
  %vm65 = vcmp.lt.s32.totalorder %v57, 16
  %vm66 = vcmp.lt.s32.totalorder %v58, 16
  %vm67 = vmand %vm59, %vm63
  %vm68 = vmand %vm60, %vm64
  %vm69 = vmand %vm61, %vm65
  %vm70 = vmand %vm62, %vm66
  %vm71 = vcmp.ge.s32.totalorder %v51, 0
  %vm72 = vcmp.ge.s32.totalorder %v52, 0
  %vm73 = vcmp.ge.s32.totalorder %v53, 0
  %vm74 = vcmp.ge.s32.totalorder %v54, 0
  %vm75 = vcmp.lt.s32.totalorder %v51, 16
  %vm76 = vcmp.lt.s32.totalorder %v52, 16
  %vm77 = vcmp.lt.s32.totalorder %v53, 16
  %vm78 = vcmp.lt.s32.totalorder %v54, 16
  %vm79 = vmand %vm71, %vm75
  %vm80 = vmand %vm72, %vm76
  %vm81 = vmand %vm73, %vm77
  %vm82 = vmand %vm74, %vm78
  %v83 = vadd.s32 %v51, 1
  %v84 = vadd.s32 %v52, 1
  %v85 = vadd.s32 %v53, 1
  %v86 = vadd.s32 %v54, 1
  %vm87 = vcmp.ge.s32.totalorder %v83, 0
  %vm88 = vcmp.ge.s32.totalorder %v84, 0
  %vm89 = vcmp.ge.s32.totalorder %v85, 0
  %vm90 = vcmp.ge.s32.totalorder %v86, 0
  %vm91 = vcmp.lt.s32.totalorder %v83, 16
  %vm92 = vcmp.lt.s32.totalorder %v84, 16
  %vm93 = vcmp.lt.s32.totalorder %v85, 16
  %vm94 = vcmp.lt.s32.totalorder %v86, 16
  %vm95 = vmand %vm87, %vm91
  %vm96 = vmand %vm88, %vm92
  %vm97 = vmand %vm89, %vm93
  %vm98 = vmand %vm90, %vm94
  %v99 = vadd.s32 %v43, 4294967295
  %v100 = vadd.s32 %v44, 4294967295
  %v101 = vadd.s32 %v45, 4294967295
  %v102 = vadd.s32 %v46, 4294967295
  %vm103 = vcmp.ge.s32.totalorder %v99, 0
  %vm104 = vcmp.ge.s32.totalorder %v100, 0
  %vm105 = vcmp.ge.s32.totalorder %v101, 0
  %vm106 = vcmp.ge.s32.totalorder %v102, 0
  %vm107 = vcmp.lt.s32.totalorder %v99, 16
  %vm108 = vcmp.lt.s32.totalorder %v100, 16
  %vm109 = vcmp.lt.s32.totalorder %v101, 16
  %vm110 = vcmp.lt.s32.totalorder %v102, 16
  %vm111 = vmand %vm103, %vm107
  %vm112 = vmand %vm104, %vm108
  %vm113 = vmand %vm105, %vm109
  %vm114 = vmand %vm106, %vm110
  %vm115 = vcmp.ge.s32.totalorder %v43, 0
  %vm116 = vcmp.ge.s32.totalorder %v44, 0
  %vm117 = vcmp.ge.s32.totalorder %v45, 0
  %vm118 = vcmp.ge.s32.totalorder %v46, 0
  %vm119 = vcmp.lt.s32.totalorder %v43, 16
  %vm120 = vcmp.lt.s32.totalorder %v44, 16
  %vm121 = vcmp.lt.s32.totalorder %v45, 16
  %vm122 = vcmp.lt.s32.totalorder %v46, 16
  %vm123 = vmand %vm115, %vm119
  %vm124 = vmand %vm116, %vm120
  %vm125 = vmand %vm117, %vm121
  %vm126 = vmand %vm118, %vm122
  %v127 = vadd.s32 %v43, 1
  %v128 = vadd.s32 %v44, 1
  %v129 = vadd.s32 %v45, 1
  %v130 = vadd.s32 %v46, 1
  %vm131 = vcmp.ge.s32.totalorder %v127, 0
  %vm132 = vcmp.ge.s32.totalorder %v128, 0
  %vm133 = vcmp.ge.s32.totalorder %v129, 0
  %vm134 = vcmp.ge.s32.totalorder %v130, 0
  %vm135 = vcmp.lt.s32.totalorder %v127, 16
  %vm136 = vcmp.lt.s32.totalorder %v128, 16
  %vm137 = vcmp.lt.s32.totalorder %v129, 16
  %vm138 = vcmp.lt.s32.totalorder %v130, 16
  %vm139 = vmand %vm131, %vm135
  %vm140 = vmand %vm132, %vm136
  %vm141 = vmand %vm133, %vm137
  %vm142 = vmand %vm134, %vm138
  %v143 = vand.u32 %v51, 1
  %v144 = vand.u32 %v52, 1
  %v145 = vand.u32 %v53, 1
  %v146 = vand.u32 %v54, 1
  %vm147 = vcmp.eq.s32.totalorder %v143, 0
  %vm148 = vcmp.eq.s32.totalorder %v144, 0
  %vm149 = vcmp.eq.s32.totalorder %v145, 0
  %vm150 = vcmp.eq.s32.totalorder %v146, 0
  %v151 = vand.u32 %v43, 1
  %v152 = vand.u32 %v44, 1
  %v153 = vand.u32 %v45, 1
  %v154 = vand.u32 %v46, 1
  %vm155 = vcmp.eq.s32.totalorder %v151, 0
  %vm156 = vcmp.eq.s32.totalorder %v152, 0
  %vm157 = vcmp.eq.s32.totalorder %v153, 0
  %vm158 = vcmp.eq.s32.totalorder %v154, 0
  %v159 = vld [vmem:[%s0] sm:$0x77]
  %s160 = scalar_lea.vmem %s0, 8
  %v161 = vld [vmem:[%s160] sm:$0x77]
  %163 = vst [vmem:[#allocation1] ss:$2 sm:$0xff] %v159
  %v164 = vld.sshfl [vmem:[#allocation1] sm:$0xff pattern:$0x75316420]
  %v165 = vld.sshfl [vmem:[#allocation1 + $0x8] sm:$0xff pattern:$0x75316420]
  %169 = vst [vmem:[#allocation1] ss:$2 sm:$0xff] %v161
  %v170 = vld.sshfl [vmem:[#allocation1] sm:$0xff pattern:$0x75316420]
  %v171 = vld.sshfl [vmem:[#allocation1 + $0x8] sm:$0xff pattern:$0x75316420]
  %v174 = vld [vmem:[%s1] sm:$0xff]
  %v175 = vld [vmem:[%s1 + $0x8] sm:$0xff]
  %176 = vrot.lane.b32.xlu0 %v164, 17
  %v177 = vpop.permute.xlu0 %176
  %178 = vrot.lane.b32.xlu0 %v165, 17
  %v179 = vpop.permute.xlu0 %178
  %180 = vrot.lane.b32.xlu0 %v170, 17
  %v181 = vpop.permute.xlu0 %180
  %182 = vrot.lane.b32.xlu0 %v171, 17
  %v183 = vpop.permute.xlu0 %182
  %vm184 = vcmp.lt.s32.totalorder %v39, 17
  %v185 = vsel %vm184, %v181, %v183
  %v186 = vsel %vm184, %v179, %v181
  %v187 = vsel %vm184, %v177, %v179
  %v188 = vsel %vm184, %v183, %v177
  %vm189 = vmand %vm67, %vm111
  %vm190 = vmand %vm68, %vm112
  %vm191 = vmand %vm69, %vm113
  %vm192 = vmand %vm70, %vm114
  %v193 = vsel %vm189, 1, 0
  %v194 = vsel %vm190, 1, 0
  %v195 = vsel %vm191, 1, 0
  %v196 = vsel %vm192, 1, 0
  %vm197 = vcmp.eq.s32.totalorder %v193, 1
  %vm198 = vcmp.eq.s32.totalorder %v194, 1
  %vm199 = vcmp.eq.s32.totalorder %v195, 1
  %vm200 = vcmp.eq.s32.totalorder %v196, 1
  %v201 = vsel %vm197, %v188, 0.0
  %v202 = vsel %vm198, %v187, 0.0
  %v203 = vsel %vm199, %v186, 0.0
  %v204 = vsel %vm200, %v185, 0.0
  %s205 = scalar_lea.vmem %s1, 16
  %v206 = vld [vmem:[%s205] sm:$0xff]
  %v207 = vld [vmem:[%s205 + $0x8] sm:$0xff]
  %208 = vrot.lane.b32.xlu0 %v164, 16
  %v209 = vpop.permute.xlu0 %208
  %210 = vrot.lane.b32.xlu0 %v165, 16
  %v211 = vpop.permute.xlu0 %210
  %212 = vrot.lane.b32.xlu0 %v170, 16
  %v213 = vpop.permute.xlu0 %212
  %214 = vrot.lane.b32.xlu0 %v171, 16
  %v215 = vpop.permute.xlu0 %214
  %vm216 = vcmp.lt.s32.totalorder %v39, 16
  %v217 = vsel %vm216, %v213, %v215
  %v218 = vsel %vm216, %v211, %v213
  %v219 = vsel %vm216, %v209, %v211
  %v220 = vsel %vm216, %v215, %v209
  %vm221 = vmand %vm67, %vm123
  %vm222 = vmand %vm68, %vm124
  %vm223 = vmand %vm69, %vm125
  %vm224 = vmand %vm70, %vm126
  %v225 = vsel %vm221, 1, 0
  %v226 = vsel %vm222, 1, 0
  %v227 = vsel %vm223, 1, 0
  %v228 = vsel %vm224, 1, 0
  %vm229 = vcmp.eq.s32.totalorder %v225, 1
  %vm230 = vcmp.eq.s32.totalorder %v226, 1
  %vm231 = vcmp.eq.s32.totalorder %v227, 1
  %vm232 = vcmp.eq.s32.totalorder %v228, 1
  %v233 = vsel %vm229, %v220, 0.0
  %v234 = vsel %vm230, %v219, 0.0
  %v235 = vsel %vm231, %v218, 0.0
  %v236 = vsel %vm232, %v217, 0.0
  %vm237 = vcmask 23552
  %v239 = vsel %vm237, %v206, 0
  %v242 = vsel %vm237, %v207, 0
  %vm244 = vcmask 1042432
  %v246 = vsel %vm244, %v233, 0
  %v249 = vsel %vm244, %v234, 0
  %v252 = vsel %vm244, %v235, 0
  %v255 = vsel %vm244, %v236, 0
  %257 = vmatpush.msra.mxu0 0.0
  %258 = vmatpush.msra.mxu0 0.0
  %259 = vmatpush.msra.mxu0 0.0
  %260 = vmatpush.msra.mxu0 0.0
  %261 = vmatpush.msra.mxu0 0.0
  %262 = vmatpush.msra.mxu0 0.0
  %263 = vmatpush.msra.mxu0 0.0
  %264 = vmatpush.msra.mxu0 0.0
  %265 = vmatpush.msra.mxu0 0.0
  %266 = vmatpush.msra.mxu0 0.0
  %267 = vmatpush.msra.mxu0 0.0
  %268 = vmatpush.msra.mxu0 0.0
  %269 = vmatpush.msra.mxu0 0.0
  %270 = vmatpush.msra.mxu0 0.0
  %271 = vmatpush.msra.mxu0 0.0
  %272 = vmatpush.msra.mxu0 %v246
  %273 = vmatmul.f32.gmra.mxu0 %v239
  %v274 = vpop.f32.mrf.mxu0
  %v275 = vadd.f32 0.0, %v274
  %276 = vmatmul.f32.gmra.mxu0 %v242
  %v277 = vpop.f32.mrf.mxu0
  %v278 = vadd.f32 0.0, %v277
  %279 = vdwg.mxu0
  %280 = vmatpush.msra.mxu0 0.0
  %281 = vmatpush.msra.mxu0 0.0
  %282 = vmatpush.msra.mxu0 0.0
  %283 = vmatpush.msra.mxu0 0.0
  %284 = vmatpush.msra.mxu0 0.0
  %285 = vmatpush.msra.mxu0 0.0
  %286 = vmatpush.msra.mxu0 0.0
  %287 = vmatpush.msra.mxu0 0.0
  %288 = vmatpush.msra.mxu0 0.0
  %289 = vmatpush.msra.mxu0 0.0
  %290 = vmatpush.msra.mxu0 0.0
  %291 = vmatpush.msra.mxu0 0.0
  %292 = vmatpush.msra.mxu0 0.0
  %293 = vmatpush.msra.mxu0 0.0
  %294 = vmatpush.msra.mxu0 0.0
  %295 = vmatpush.msra.mxu0 %v249
  %296 = vmatmul.f32.gmra.mxu0 %v239
  %v297 = vpop.f32.mrf.mxu0
  %v298 = vadd.f32 0.0, %v297
  %299 = vmatmul.f32.gmra.mxu0 %v242
  %v300 = vpop.f32.mrf.mxu0
  %v301 = vadd.f32 0.0, %v300
  %302 = vdwg.mxu0
  %303 = vmatpush.msra.mxu0 0.0
  %304 = vmatpush.msra.mxu0 0.0
  %305 = vmatpush.msra.mxu0 0.0
  %306 = vmatpush.msra.mxu0 0.0
  %307 = vmatpush.msra.mxu0 0.0
  %308 = vmatpush.msra.mxu0 0.0
  %309 = vmatpush.msra.mxu0 0.0
  %310 = vmatpush.msra.mxu0 0.0
  %311 = vmatpush.msra.mxu0 0.0
  %312 = vmatpush.msra.mxu0 0.0
  %313 = vmatpush.msra.mxu0 0.0
  %314 = vmatpush.msra.mxu0 0.0
  %315 = vmatpush.msra.mxu0 0.0
  %316 = vmatpush.msra.mxu0 0.0
  %317 = vmatpush.msra.mxu0 0.0
  %318 = vmatpush.msra.mxu0 %v252
  %319 = vmatmul.f32.gmra.mxu0 %v239
  %v320 = vpop.f32.mrf.mxu0
  %v321 = vadd.f32 0.0, %v320
  %322 = vmatmul.f32.gmra.mxu0 %v242
  %v323 = vpop.f32.mrf.mxu0
  %v324 = vadd.f32 0.0, %v323
  %325 = vdwg.mxu0
  %326 = vmatpush.msra.mxu0 0.0
  %327 = vmatpush.msra.mxu0 0.0
  %328 = vmatpush.msra.mxu0 0.0
  %329 = vmatpush.msra.mxu0 0.0
  %330 = vmatpush.msra.mxu0 0.0
  %331 = vmatpush.msra.mxu0 0.0
  %332 = vmatpush.msra.mxu0 0.0
  %333 = vmatpush.msra.mxu0 0.0
  %334 = vmatpush.msra.mxu0 0.0
  %335 = vmatpush.msra.mxu0 0.0
  %336 = vmatpush.msra.mxu0 0.0
  %337 = vmatpush.msra.mxu0 0.0
  %338 = vmatpush.msra.mxu0 0.0
  %339 = vmatpush.msra.mxu0 0.0
  %340 = vmatpush.msra.mxu0 0.0
  %341 = vmatpush.msra.mxu0 %v255
  %342 = vmatmul.f32.gmra.mxu0 %v239
  %v343 = vpop.f32.mrf.mxu0
  %v344 = vadd.f32 0.0, %v343
  %345 = vmatmul.f32.gmra.mxu0 %v242
  %v346 = vpop.f32.mrf.mxu0
  %v347 = vadd.f32 0.0, %v346
  %348 = vdwg.mxu0
  %v350 = vsel %vm237, %v174, 0
  %v353 = vsel %vm237, %v175, 0
  %v356 = vsel %vm244, %v201, 0
  %v359 = vsel %vm244, %v202, 0
  %v362 = vsel %vm244, %v203, 0
  %v365 = vsel %vm244, %v204, 0
  %367 = vmatpush.msra.mxu0 0.0
  %368 = vmatpush.msra.mxu0 0.0
  %369 = vmatpush.msra.mxu0 0.0
  %370 = vmatpush.msra.mxu0 0.0
  %371 = vmatpush.msra.mxu0 0.0
  %372 = vmatpush.msra.mxu0 0.0
  %373 = vmatpush.msra.mxu0 0.0
  %374 = vmatpush.msra.mxu0 0.0
  %375 = vmatpush.msra.mxu0 0.0
  %376 = vmatpush.msra.mxu0 0.0
  %377 = vmatpush.msra.mxu0 0.0
  %378 = vmatpush.msra.mxu0 0.0
  %379 = vmatpush.msra.mxu0 0.0
  %380 = vmatpush.msra.mxu0 0.0
  %381 = vmatpush.msra.mxu0 0.0
  %382 = vmatpush.msra.mxu0 %v356
  %383 = vmatmul.f32.gmra.mxu0 %v350
  %v384 = vpop.f32.mrf.mxu0
  %v385 = vadd.f32 %v275, %v384
  %386 = vmatmul.f32.gmra.mxu0 %v353
  %v387 = vpop.f32.mrf.mxu0
  %v388 = vadd.f32 %v278, %v387
  %389 = vdwg.mxu0
  %390 = vmatpush.msra.mxu0 0.0
  %391 = vmatpush.msra.mxu0 0.0
  %392 = vmatpush.msra.mxu0 0.0
  %393 = vmatpush.msra.mxu0 0.0
  %394 = vmatpush.msra.mxu0 0.0
  %395 = vmatpush.msra.mxu0 0.0
  %396 = vmatpush.msra.mxu0 0.0
  %397 = vmatpush.msra.mxu0 0.0
  %398 = vmatpush.msra.mxu0 0.0
  %399 = vmatpush.msra.mxu0 0.0
  %400 = vmatpush.msra.mxu0 0.0
  %401 = vmatpush.msra.mxu0 0.0
  %402 = vmatpush.msra.mxu0 0.0
  %403 = vmatpush.msra.mxu0 0.0
  %404 = vmatpush.msra.mxu0 0.0
  %405 = vmatpush.msra.mxu0 %v359
  %406 = vmatmul.f32.gmra.mxu0 %v350
  %v407 = vpop.f32.mrf.mxu0
  %v408 = vadd.f32 %v298, %v407
  %409 = vmatmul.f32.gmra.mxu0 %v353
  %v410 = vpop.f32.mrf.mxu0
  %v411 = vadd.f32 %v301, %v410
  %412 = vdwg.mxu0
  %413 = vmatpush.msra.mxu0 0.0
  %414 = vmatpush.msra.mxu0 0.0
  %415 = vmatpush.msra.mxu0 0.0
  %416 = vmatpush.msra.mxu0 0.0
  %417 = vmatpush.msra.mxu0 0.0
  %418 = vmatpush.msra.mxu0 0.0
  %419 = vmatpush.msra.mxu0 0.0
  %420 = vmatpush.msra.mxu0 0.0
  %421 = vmatpush.msra.mxu0 0.0
  %422 = vmatpush.msra.mxu0 0.0
  %423 = vmatpush.msra.mxu0 0.0
  %424 = vmatpush.msra.mxu0 0.0
  %425 = vmatpush.msra.mxu0 0.0
  %426 = vmatpush.msra.mxu0 0.0
  %427 = vmatpush.msra.mxu0 0.0
  %428 = vmatpush.msra.mxu0 %v362
  %429 = vmatmul.f32.gmra.mxu0 %v350
  %v430 = vpop.f32.mrf.mxu0
  %v431 = vadd.f32 %v321, %v430
  %432 = vmatmul.f32.gmra.mxu0 %v353
  %v433 = vpop.f32.mrf.mxu0
  %v434 = vadd.f32 %v324, %v433
  %435 = vdwg.mxu0
  %436 = vmatpush.msra.mxu0 0.0
  %437 = vmatpush.msra.mxu0 0.0
  %438 = vmatpush.msra.mxu0 0.0
  %439 = vmatpush.msra.mxu0 0.0
  %440 = vmatpush.msra.mxu0 0.0
  %441 = vmatpush.msra.mxu0 0.0
  %442 = vmatpush.msra.mxu0 0.0
  %443 = vmatpush.msra.mxu0 0.0
  %444 = vmatpush.msra.mxu0 0.0
  %445 = vmatpush.msra.mxu0 0.0
  %446 = vmatpush.msra.mxu0 0.0
  %447 = vmatpush.msra.mxu0 0.0
  %448 = vmatpush.msra.mxu0 0.0
  %449 = vmatpush.msra.mxu0 0.0
  %450 = vmatpush.msra.mxu0 0.0
  %451 = vmatpush.msra.mxu0 %v365
  %452 = vmatmul.f32.gmra.mxu0 %v350
  %v453 = vpop.f32.mrf.mxu0
  %v454 = vadd.f32 %v344, %v453
  %455 = vmatmul.f32.gmra.mxu0 %v353
  %v456 = vpop.f32.mrf.mxu0
  %v457 = vadd.f32 %v347, %v456
  %458 = vdwg.mxu0
  %s459 = scalar_lea.vmem %s1, 32
  %v460 = vld [vmem:[%s459] sm:$0xff]
  %v461 = vld [vmem:[%s459 + $0x8] sm:$0xff]
  %462 = vrot.lane.b32.xlu0 %v164, 15
  %v463 = vpop.permute.xlu0 %462
  %464 = vrot.lane.b32.xlu0 %v165, 15
  %v465 = vpop.permute.xlu0 %464
  %466 = vrot.lane.b32.xlu0 %v170, 15
  %v467 = vpop.permute.xlu0 %466
  %468 = vrot.lane.b32.xlu0 %v171, 15
  %v469 = vpop.permute.xlu0 %468
  %vm470 = vcmp.lt.s32.totalorder %v39, 15
  %v471 = vsel %vm470, %v467, %v469
  %v472 = vsel %vm470, %v465, %v467
  %v473 = vsel %vm470, %v463, %v465
  %v474 = vsel %vm470, %v469, %v463
  %vm475 = vmand %vm67, %vm139
  %vm476 = vmand %vm68, %vm140
  %vm477 = vmand %vm69, %vm141
  %vm478 = vmand %vm70, %vm142
  %v479 = vsel %vm475, 1, 0
  %v480 = vsel %vm476, 1, 0
  %v481 = vsel %vm477, 1, 0
  %v482 = vsel %vm478, 1, 0
  %vm483 = vcmp.eq.s32.totalorder %v479, 1
  %vm484 = vcmp.eq.s32.totalorder %v480, 1
  %vm485 = vcmp.eq.s32.totalorder %v481, 1
  %vm486 = vcmp.eq.s32.totalorder %v482, 1
  %v487 = vsel %vm483, %v474, 0.0
  %v488 = vsel %vm484, %v473, 0.0
  %v489 = vsel %vm485, %v472, 0.0
  %v490 = vsel %vm486, %v471, 0.0
  %v492 = vsel %vm237, %v460, 0
  %v495 = vsel %vm237, %v461, 0
  %v498 = vsel %vm244, %v487, 0
  %v501 = vsel %vm244, %v488, 0
  %v504 = vsel %vm244, %v489, 0
  %v507 = vsel %vm244, %v490, 0
  %509 = vmatpush.msra.mxu0 0.0
  %510 = vmatpush.msra.mxu0 0.0
  %511 = vmatpush.msra.mxu0 0.0
  %512 = vmatpush.msra.mxu0 0.0
  %513 = vmatpush.msra.mxu0 0.0
  %514 = vmatpush.msra.mxu0 0.0
  %515 = vmatpush.msra.mxu0 0.0
  %516 = vmatpush.msra.mxu0 0.0
  %517 = vmatpush.msra.mxu0 0.0
  %518 = vmatpush.msra.mxu0 0.0
  %519 = vmatpush.msra.mxu0 0.0
  %520 = vmatpush.msra.mxu0 0.0
  %521 = vmatpush.msra.mxu0 0.0
  %522 = vmatpush.msra.mxu0 0.0
  %523 = vmatpush.msra.mxu0 0.0
  %524 = vmatpush.msra.mxu0 %v498
  %525 = vmatmul.f32.gmra.mxu0 %v492
  %v526 = vpop.f32.mrf.mxu0
  %v527 = vadd.f32 0.0, %v526
  %528 = vmatmul.f32.gmra.mxu0 %v495
  %v529 = vpop.f32.mrf.mxu0
  %v530 = vadd.f32 0.0, %v529
  %531 = vdwg.mxu0
  %532 = vmatpush.msra.mxu0 0.0
  %533 = vmatpush.msra.mxu0 0.0
  %534 = vmatpush.msra.mxu0 0.0
  %535 = vmatpush.msra.mxu0 0.0
  %536 = vmatpush.msra.mxu0 0.0
  %537 = vmatpush.msra.mxu0 0.0
  %538 = vmatpush.msra.mxu0 0.0
  %539 = vmatpush.msra.mxu0 0.0
  %540 = vmatpush.msra.mxu0 0.0
  %541 = vmatpush.msra.mxu0 0.0
  %542 = vmatpush.msra.mxu0 0.0
  %543 = vmatpush.msra.mxu0 0.0
  %544 = vmatpush.msra.mxu0 0.0
  %545 = vmatpush.msra.mxu0 0.0
  %546 = vmatpush.msra.mxu0 0.0
  %547 = vmatpush.msra.mxu0 %v501
  %548 = vmatmul.f32.gmra.mxu0 %v492
  %v549 = vpop.f32.mrf.mxu0
  %v550 = vadd.f32 0.0, %v549
  %551 = vmatmul.f32.gmra.mxu0 %v495
  %v552 = vpop.f32.mrf.mxu0
  %v553 = vadd.f32 0.0, %v552
  %554 = vdwg.mxu0
  %555 = vmatpush.msra.mxu0 0.0
  %556 = vmatpush.msra.mxu0 0.0
  %557 = vmatpush.msra.mxu0 0.0
  %558 = vmatpush.msra.mxu0 0.0
  %559 = vmatpush.msra.mxu0 0.0
  %560 = vmatpush.msra.mxu0 0.0
  %561 = vmatpush.msra.mxu0 0.0
  %562 = vmatpush.msra.mxu0 0.0
  %563 = vmatpush.msra.mxu0 0.0
  %564 = vmatpush.msra.mxu0 0.0
  %565 = vmatpush.msra.mxu0 0.0
  %566 = vmatpush.msra.mxu0 0.0
  %567 = vmatpush.msra.mxu0 0.0
  %568 = vmatpush.msra.mxu0 0.0
  %569 = vmatpush.msra.mxu0 0.0
  %570 = vmatpush.msra.mxu0 %v504
  %571 = vmatmul.f32.gmra.mxu0 %v492
  %v572 = vpop.f32.mrf.mxu0
  %v573 = vadd.f32 0.0, %v572
  %574 = vmatmul.f32.gmra.mxu0 %v495
  %v575 = vpop.f32.mrf.mxu0
  %v576 = vadd.f32 0.0, %v575
  %577 = vdwg.mxu0
  %578 = vmatpush.msra.mxu0 0.0
  %579 = vmatpush.msra.mxu0 0.0
  %580 = vmatpush.msra.mxu0 0.0
  %581 = vmatpush.msra.mxu0 0.0
  %582 = vmatpush.msra.mxu0 0.0
  %583 = vmatpush.msra.mxu0 0.0
  %584 = vmatpush.msra.mxu0 0.0
  %585 = vmatpush.msra.mxu0 0.0
  %586 = vmatpush.msra.mxu0 0.0
  %587 = vmatpush.msra.mxu0 0.0
  %588 = vmatpush.msra.mxu0 0.0
  %589 = vmatpush.msra.mxu0 0.0
  %590 = vmatpush.msra.mxu0 0.0
  %591 = vmatpush.msra.mxu0 0.0
  %592 = vmatpush.msra.mxu0 0.0
  %593 = vmatpush.msra.mxu0 %v507
  %594 = vmatmul.f32.gmra.mxu0 %v492
  %v595 = vpop.f32.mrf.mxu0
  %v596 = vadd.f32 0.0, %v595
  %597 = vmatmul.f32.gmra.mxu0 %v495
  %v598 = vpop.f32.mrf.mxu0
  %v599 = vadd.f32 0.0, %v598
  %600 = vdwg.mxu0
  %v601 = vadd.f32 %v385, %v527
  %v602 = vadd.f32 %v408, %v550
  %v603 = vadd.f32 %v431, %v573
  %v604 = vadd.f32 %v454, %v596
  %v605 = vadd.f32 %v388, %v530
  %v606 = vadd.f32 %v411, %v553
  %v607 = vadd.f32 %v434, %v576
  %v608 = vadd.f32 %v457, %v599
  %s609 = scalar_lea.vmem %s1, 48
  %v610 = vld [vmem:[%s609] sm:$0xff]
  %v611 = vld [vmem:[%s609 + $0x8] sm:$0xff]
  %612 = vrot.lane.b32.xlu0 %v164, 1
  %v613 = vpop.permute.xlu0 %612
  %614 = vrot.lane.b32.xlu0 %v165, 1
  %v615 = vpop.permute.xlu0 %614
  %616 = vrot.lane.b32.xlu0 %v170, 1
  %v617 = vpop.permute.xlu0 %616
  %618 = vrot.lane.b32.xlu0 %v171, 1
  %v619 = vpop.permute.xlu0 %618
  %vm620 = vcmp.lt.s32.totalorder %v39, 1
  %v621 = vsel %vm620, %v617, %v619
  %v622 = vsel %vm620, %v615, %v617
  %v623 = vsel %vm620, %v613, %v615
  %v624 = vsel %vm620, %v619, %v613
  %vm625 = vmand %vm79, %vm111
  %vm626 = vmand %vm80, %vm112
  %vm627 = vmand %vm81, %vm113
  %vm628 = vmand %vm82, %vm114
  %v629 = vsel %vm625, 1, 0
  %v630 = vsel %vm626, 1, 0
  %v631 = vsel %vm627, 1, 0
  %v632 = vsel %vm628, 1, 0
  %vm633 = vcmp.eq.s32.totalorder %v629, 1
  %vm634 = vcmp.eq.s32.totalorder %v630, 1
  %vm635 = vcmp.eq.s32.totalorder %v631, 1
  %vm636 = vcmp.eq.s32.totalorder %v632, 1
  %v637 = vsel %vm633, %v624, 0.0
  %v638 = vsel %vm634, %v623, 0.0
  %v639 = vsel %vm635, %v622, 0.0
  %v640 = vsel %vm636, %v621, 0.0
  %v642 = vsel %vm237, %v610, 0
  %v645 = vsel %vm237, %v611, 0
  %v648 = vsel %vm244, %v637, 0
  %v651 = vsel %vm244, %v638, 0
  %v654 = vsel %vm244, %v639, 0
  %v657 = vsel %vm244, %v640, 0
  %659 = vmatpush.msra.mxu0 0.0
  %660 = vmatpush.msra.mxu0 0.0
  %661 = vmatpush.msra.mxu0 0.0
  %662 = vmatpush.msra.mxu0 0.0
  %663 = vmatpush.msra.mxu0 0.0
  %664 = vmatpush.msra.mxu0 0.0
  %665 = vmatpush.msra.mxu0 0.0
  %666 = vmatpush.msra.mxu0 0.0
  %667 = vmatpush.msra.mxu0 0.0
  %668 = vmatpush.msra.mxu0 0.0
  %669 = vmatpush.msra.mxu0 0.0
  %670 = vmatpush.msra.mxu0 0.0
  %671 = vmatpush.msra.mxu0 0.0
  %672 = vmatpush.msra.mxu0 0.0
  %673 = vmatpush.msra.mxu0 0.0
  %674 = vmatpush.msra.mxu0 %v648
  %675 = vmatmul.f32.gmra.mxu0 %v642
  %v676 = vpop.f32.mrf.mxu0
  %v677 = vadd.f32 0.0, %v676
  %678 = vmatmul.f32.gmra.mxu0 %v645
  %v679 = vpop.f32.mrf.mxu0
  %v680 = vadd.f32 0.0, %v679
  %681 = vdwg.mxu0
  %682 = vmatpush.msra.mxu0 0.0
  %683 = vmatpush.msra.mxu0 0.0
  %684 = vmatpush.msra.mxu0 0.0
  %685 = vmatpush.msra.mxu0 0.0
  %686 = vmatpush.msra.mxu0 0.0
  %687 = vmatpush.msra.mxu0 0.0
  %688 = vmatpush.msra.mxu0 0.0
  %689 = vmatpush.msra.mxu0 0.0
  %690 = vmatpush.msra.mxu0 0.0
  %691 = vmatpush.msra.mxu0 0.0
  %692 = vmatpush.msra.mxu0 0.0
  %693 = vmatpush.msra.mxu0 0.0
  %694 = vmatpush.msra.mxu0 0.0
  %695 = vmatpush.msra.mxu0 0.0
  %696 = vmatpush.msra.mxu0 0.0
  %697 = vmatpush.msra.mxu0 %v651
  %698 = vmatmul.f32.gmra.mxu0 %v642
  %v699 = vpop.f32.mrf.mxu0
  %v700 = vadd.f32 0.0, %v699
  %701 = vmatmul.f32.gmra.mxu0 %v645
  %v702 = vpop.f32.mrf.mxu0
  %v703 = vadd.f32 0.0, %v702
  %704 = vdwg.mxu0
  %705 = vmatpush.msra.mxu0 0.0
  %706 = vmatpush.msra.mxu0 0.0
  %707 = vmatpush.msra.mxu0 0.0
  %708 = vmatpush.msra.mxu0 0.0
  %709 = vmatpush.msra.mxu0 0.0
  %710 = vmatpush.msra.mxu0 0.0
  %711 = vmatpush.msra.mxu0 0.0
  %712 = vmatpush.msra.mxu0 0.0
  %713 = vmatpush.msra.mxu0 0.0
  %714 = vmatpush.msra.mxu0 0.0
  %715 = vmatpush.msra.mxu0 0.0
  %716 = vmatpush.msra.mxu0 0.0
  %717 = vmatpush.msra.mxu0 0.0
  %718 = vmatpush.msra.mxu0 0.0
  %719 = vmatpush.msra.mxu0 0.0
  %720 = vmatpush.msra.mxu0 %v654
  %721 = vmatmul.f32.gmra.mxu0 %v642
  %v722 = vpop.f32.mrf.mxu0
  %v723 = vadd.f32 0.0, %v722
  %724 = vmatmul.f32.gmra.mxu0 %v645
  %v725 = vpop.f32.mrf.mxu0
  %v726 = vadd.f32 0.0, %v725
  %727 = vdwg.mxu0
  %728 = vmatpush.msra.mxu0 0.0
  %729 = vmatpush.msra.mxu0 0.0
  %730 = vmatpush.msra.mxu0 0.0
  %731 = vmatpush.msra.mxu0 0.0
  %732 = vmatpush.msra.mxu0 0.0
  %733 = vmatpush.msra.mxu0 0.0
  %734 = vmatpush.msra.mxu0 0.0
  %735 = vmatpush.msra.mxu0 0.0
  %736 = vmatpush.msra.mxu0 0.0
  %737 = vmatpush.msra.mxu0 0.0
  %738 = vmatpush.msra.mxu0 0.0
  %739 = vmatpush.msra.mxu0 0.0
  %740 = vmatpush.msra.mxu0 0.0
  %741 = vmatpush.msra.mxu0 0.0
  %742 = vmatpush.msra.mxu0 0.0
  %743 = vmatpush.msra.mxu0 %v657
  %744 = vmatmul.f32.gmra.mxu0 %v642
  %v745 = vpop.f32.mrf.mxu0
  %v746 = vadd.f32 0.0, %v745
  %747 = vmatmul.f32.gmra.mxu0 %v645
  %v748 = vpop.f32.mrf.mxu0
  %v749 = vadd.f32 0.0, %v748
  %750 = vdwg.mxu0
  %v751 = vadd.f32 %v601, %v677
  %v752 = vadd.f32 %v602, %v700
  %v753 = vadd.f32 %v603, %v723
  %v754 = vadd.f32 %v604, %v746
  %v755 = vadd.f32 %v605, %v680
  %v756 = vadd.f32 %v606, %v703
  %v757 = vadd.f32 %v607, %v726
  %v758 = vadd.f32 %v608, %v749
  %s759 = scalar_lea.vmem %s1, 64
  %v760 = vld [vmem:[%s759] sm:$0xff]
  %v761 = vld [vmem:[%s759 + $0x8] sm:$0xff]
  %v763 = vsel %vm237, %v760, 0
  %v766 = vsel %vm237, %v761, 0
  %v768 = vsel %vm244, %v164, 0
  %v770 = vsel %vm244, %v165, 0
  %v772 = vsel %vm244, %v170, 0
  %v774 = vsel %vm244, %v171, 0
  %776 = vmatpush.msra.mxu0 0.0
  %777 = vmatpush.msra.mxu0 0.0
  %778 = vmatpush.msra.mxu0 0.0
  %779 = vmatpush.msra.mxu0 0.0
  %780 = vmatpush.msra.mxu0 0.0
  %781 = vmatpush.msra.mxu0 0.0
  %782 = vmatpush.msra.mxu0 0.0
  %783 = vmatpush.msra.mxu0 0.0
  %784 = vmatpush.msra.mxu0 0.0
  %785 = vmatpush.msra.mxu0 0.0
  %786 = vmatpush.msra.mxu0 0.0
  %787 = vmatpush.msra.mxu0 0.0
  %788 = vmatpush.msra.mxu0 0.0
  %789 = vmatpush.msra.mxu0 0.0
  %790 = vmatpush.msra.mxu0 0.0
  %791 = vmatpush.msra.mxu0 %v768
  %792 = vmatmul.f32.gmra.mxu0 %v763
  %v793 = vpop.f32.mrf.mxu0
  %v794 = vadd.f32 0.0, %v793
  %795 = vmatmul.f32.gmra.mxu0 %v766
  %v796 = vpop.f32.mrf.mxu0
  %v797 = vadd.f32 0.0, %v796
  %798 = vdwg.mxu0
  %799 = vmatpush.msra.mxu0 0.0
  %800 = vmatpush.msra.mxu0 0.0
  %801 = vmatpush.msra.mxu0 0.0
  %802 = vmatpush.msra.mxu0 0.0
  %803 = vmatpush.msra.mxu0 0.0
  %804 = vmatpush.msra.mxu0 0.0
  %805 = vmatpush.msra.mxu0 0.0
  %806 = vmatpush.msra.mxu0 0.0
  %807 = vmatpush.msra.mxu0 0.0
  %808 = vmatpush.msra.mxu0 0.0
  %809 = vmatpush.msra.mxu0 0.0
  %810 = vmatpush.msra.mxu0 0.0
  %811 = vmatpush.msra.mxu0 0.0
  %812 = vmatpush.msra.mxu0 0.0
  %813 = vmatpush.msra.mxu0 0.0
  %814 = vmatpush.msra.mxu0 %v770
  %815 = vmatmul.f32.gmra.mxu0 %v763
  %v816 = vpop.f32.mrf.mxu0
  %v817 = vadd.f32 0.0, %v816
  %818 = vmatmul.f32.gmra.mxu0 %v766
  %v819 = vpop.f32.mrf.mxu0
  %v820 = vadd.f32 0.0, %v819
  %821 = vdwg.mxu0
  %822 = vmatpush.msra.mxu0 0.0
  %823 = vmatpush.msra.mxu0 0.0
  %824 = vmatpush.msra.mxu0 0.0
  %825 = vmatpush.msra.mxu0 0.0
  %826 = vmatpush.msra.mxu0 0.0
  %827 = vmatpush.msra.mxu0 0.0
  %828 = vmatpush.msra.mxu0 0.0
  %829 = vmatpush.msra.mxu0 0.0
  %830 = vmatpush.msra.mxu0 0.0
  %831 = vmatpush.msra.mxu0 0.0
  %832 = vmatpush.msra.mxu0 0.0
  %833 = vmatpush.msra.mxu0 0.0
  %834 = vmatpush.msra.mxu0 0.0
  %835 = vmatpush.msra.mxu0 0.0
  %836 = vmatpush.msra.mxu0 0.0
  %837 = vmatpush.msra.mxu0 %v772
  %838 = vmatmul.f32.gmra.mxu0 %v763
  %v839 = vpop.f32.mrf.mxu0
  %v840 = vadd.f32 0.0, %v839
  %841 = vmatmul.f32.gmra.mxu0 %v766
  %v842 = vpop.f32.mrf.mxu0
  %v843 = vadd.f32 0.0, %v842
  %844 = vdwg.mxu0
  %845 = vmatpush.msra.mxu0 0.0
  %846 = vmatpush.msra.mxu0 0.0
  %847 = vmatpush.msra.mxu0 0.0
  %848 = vmatpush.msra.mxu0 0.0
  %849 = vmatpush.msra.mxu0 0.0
  %850 = vmatpush.msra.mxu0 0.0
  %851 = vmatpush.msra.mxu0 0.0
  %852 = vmatpush.msra.mxu0 0.0
  %853 = vmatpush.msra.mxu0 0.0
  %854 = vmatpush.msra.mxu0 0.0
  %855 = vmatpush.msra.mxu0 0.0
  %856 = vmatpush.msra.mxu0 0.0
  %857 = vmatpush.msra.mxu0 0.0
  %858 = vmatpush.msra.mxu0 0.0
  %859 = vmatpush.msra.mxu0 0.0
  %860 = vmatpush.msra.mxu0 %v774
  %861 = vmatmul.f32.gmra.mxu0 %v763
  %v862 = vpop.f32.mrf.mxu0
  %v863 = vadd.f32 0.0, %v862
  %864 = vmatmul.f32.gmra.mxu0 %v766
  %v865 = vpop.f32.mrf.mxu0
  %v866 = vadd.f32 0.0, %v865
  %867 = vdwg.mxu0
  %v868 = vadd.f32 %v751, %v794
  %v869 = vadd.f32 %v752, %v817
  %v870 = vadd.f32 %v753, %v840
  %v871 = vadd.f32 %v754, %v863
  %v872 = vadd.f32 %v755, %v797
  %v873 = vadd.f32 %v756, %v820
  %v874 = vadd.f32 %v757, %v843
  %v875 = vadd.f32 %v758, %v866
  %s876 = scalar_lea.vmem %s1, 80
  %v877 = vld [vmem:[%s876] sm:$0xff]
  %v878 = vld [vmem:[%s876 + $0x8] sm:$0xff]
  %879 = vrot.lane.b32.xlu0 %v164, 127
  %v880 = vpop.permute.xlu0 %879
  %881 = vrot.lane.b32.xlu0 %v165, 127
  %v882 = vpop.permute.xlu0 %881
  %883 = vrot.lane.b32.xlu0 %v170, 127
  %v884 = vpop.permute.xlu0 %883
  %885 = vrot.lane.b32.xlu0 %v171, 127
  %v886 = vpop.permute.xlu0 %885
  %vm887 = vcmp.lt.s32.totalorder %v39, 127
  %v888 = vsel %vm887, %v884, %v886
  %v889 = vsel %vm887, %v882, %v884
  %v890 = vsel %vm887, %v880, %v882
  %v891 = vsel %vm887, %v886, %v880
  %vm892 = vmand %vm79, %vm139
  %vm893 = vmand %vm80, %vm140
  %vm894 = vmand %vm81, %vm141
  %vm895 = vmand %vm82, %vm142
  %v896 = vsel %vm892, 1, 0
  %v897 = vsel %vm893, 1, 0
  %v898 = vsel %vm894, 1, 0
  %v899 = vsel %vm895, 1, 0
  %vm900 = vcmp.eq.s32.totalorder %v896, 1
  %vm901 = vcmp.eq.s32.totalorder %v897, 1
  %vm902 = vcmp.eq.s32.totalorder %v898, 1
  %vm903 = vcmp.eq.s32.totalorder %v899, 1
  %v904 = vsel %vm900, %v890, 0.0
  %v905 = vsel %vm901, %v889, 0.0
  %v906 = vsel %vm902, %v888, 0.0
  %v907 = vsel %vm903, %v891, 0.0
  %v909 = vsel %vm237, %v877, 0
  %v912 = vsel %vm237, %v878, 0
  %v915 = vsel %vm244, %v904, 0
  %v918 = vsel %vm244, %v905, 0
  %v921 = vsel %vm244, %v906, 0
  %v924 = vsel %vm244, %v907, 0
  %926 = vmatpush.msra.mxu0 0.0
  %927 = vmatpush.msra.mxu0 0.0
  %928 = vmatpush.msra.mxu0 0.0
  %929 = vmatpush.msra.mxu0 0.0
  %930 = vmatpush.msra.mxu0 0.0
  %931 = vmatpush.msra.mxu0 0.0
  %932 = vmatpush.msra.mxu0 0.0
  %933 = vmatpush.msra.mxu0 0.0
  %934 = vmatpush.msra.mxu0 0.0
  %935 = vmatpush.msra.mxu0 0.0
  %936 = vmatpush.msra.mxu0 0.0
  %937 = vmatpush.msra.mxu0 0.0
  %938 = vmatpush.msra.mxu0 0.0
  %939 = vmatpush.msra.mxu0 0.0
  %940 = vmatpush.msra.mxu0 0.0
  %941 = vmatpush.msra.mxu0 %v915
  %942 = vmatmul.f32.gmra.mxu0 %v909
  %v943 = vpop.f32.mrf.mxu0
  %v944 = vadd.f32 0.0, %v943
  %945 = vmatmul.f32.gmra.mxu0 %v912
  %v946 = vpop.f32.mrf.mxu0
  %v947 = vadd.f32 0.0, %v946
  %948 = vdwg.mxu0
  %949 = vmatpush.msra.mxu0 0.0
  %950 = vmatpush.msra.mxu0 0.0
  %951 = vmatpush.msra.mxu0 0.0
  %952 = vmatpush.msra.mxu0 0.0
  %953 = vmatpush.msra.mxu0 0.0
  %954 = vmatpush.msra.mxu0 0.0
  %955 = vmatpush.msra.mxu0 0.0
  %956 = vmatpush.msra.mxu0 0.0
  %957 = vmatpush.msra.mxu0 0.0
  %958 = vmatpush.msra.mxu0 0.0
  %959 = vmatpush.msra.mxu0 0.0
  %960 = vmatpush.msra.mxu0 0.0
  %961 = vmatpush.msra.mxu0 0.0
  %962 = vmatpush.msra.mxu0 0.0
  %963 = vmatpush.msra.mxu0 0.0
  %964 = vmatpush.msra.mxu0 %v918
  %965 = vmatmul.f32.gmra.mxu0 %v909
  %v966 = vpop.f32.mrf.mxu0
  %v967 = vadd.f32 0.0, %v966
  %968 = vmatmul.f32.gmra.mxu0 %v912
  %v969 = vpop.f32.mrf.mxu0
  %v970 = vadd.f32 0.0, %v969
  %971 = vdwg.mxu0
  %972 = vmatpush.msra.mxu0 0.0
  %973 = vmatpush.msra.mxu0 0.0
  %974 = vmatpush.msra.mxu0 0.0
  %975 = vmatpush.msra.mxu0 0.0
  %976 = vmatpush.msra.mxu0 0.0
  %977 = vmatpush.msra.mxu0 0.0
  %978 = vmatpush.msra.mxu0 0.0
  %979 = vmatpush.msra.mxu0 0.0
  %980 = vmatpush.msra.mxu0 0.0
  %981 = vmatpush.msra.mxu0 0.0
  %982 = vmatpush.msra.mxu0 0.0
  %983 = vmatpush.msra.mxu0 0.0
  %984 = vmatpush.msra.mxu0 0.0
  %985 = vmatpush.msra.mxu0 0.0
  %986 = vmatpush.msra.mxu0 0.0
  %987 = vmatpush.msra.mxu0 %v921
  %988 = vmatmul.f32.gmra.mxu0 %v909
  %v989 = vpop.f32.mrf.mxu0
  %v990 = vadd.f32 0.0, %v989
  %991 = vmatmul.f32.gmra.mxu0 %v912
  %v992 = vpop.f32.mrf.mxu0
  %v993 = vadd.f32 0.0, %v992
  %994 = vdwg.mxu0
  %995 = vmatpush.msra.mxu0 0.0
  %996 = vmatpush.msra.mxu0 0.0
  %997 = vmatpush.msra.mxu0 0.0
  %998 = vmatpush.msra.mxu0 0.0
  %999 = vmatpush.msra.mxu0 0.0
  %1000 = vmatpush.msra.mxu0 0.0
  %1001 = vmatpush.msra.mxu0 0.0
  %1002 = vmatpush.msra.mxu0 0.0
  %1003 = vmatpush.msra.mxu0 0.0
  %1004 = vmatpush.msra.mxu0 0.0
  %1005 = vmatpush.msra.mxu0 0.0
  %1006 = vmatpush.msra.mxu0 0.0
  %1007 = vmatpush.msra.mxu0 0.0
  %1008 = vmatpush.msra.mxu0 0.0
  %1009 = vmatpush.msra.mxu0 0.0
  %1010 = vmatpush.msra.mxu0 %v924
  %1011 = vmatmul.f32.gmra.mxu0 %v909
  %v1012 = vpop.f32.mrf.mxu0
  %v1013 = vadd.f32 0.0, %v1012
  %1014 = vmatmul.f32.gmra.mxu0 %v912
  %v1015 = vpop.f32.mrf.mxu0
  %v1016 = vadd.f32 0.0, %v1015
  %1017 = vdwg.mxu0
  %v1018 = vadd.f32 %v868, %v944
  %v1019 = vadd.f32 %v869, %v967
  %v1020 = vadd.f32 %v870, %v990
  %v1021 = vadd.f32 %v871, %v1013
  %v1022 = vadd.f32 %v872, %v947
  %v1023 = vadd.f32 %v873, %v970
  %v1024 = vadd.f32 %v874, %v993
  %v1025 = vadd.f32 %v875, %v1016
  %s1026 = scalar_lea.vmem %s1, 96
  %v1027 = vld [vmem:[%s1026] sm:$0xff]
  %v1028 = vld [vmem:[%s1026 + $0x8] sm:$0xff]
  %1029 = vrot.lane.b32.xlu0 %v164, 113
  %v1030 = vpop.permute.xlu0 %1029
  %1031 = vrot.lane.b32.xlu0 %v165, 113
  %v1032 = vpop.permute.xlu0 %1031
  %1033 = vrot.lane.b32.xlu0 %v170, 113
  %v1034 = vpop.permute.xlu0 %1033
  %1035 = vrot.lane.b32.xlu0 %v171, 113
  %v1036 = vpop.permute.xlu0 %1035
  %vm1037 = vcmp.lt.s32.totalorder %v39, 113
  %v1038 = vsel %vm1037, %v1034, %v1036
  %v1039 = vsel %vm1037, %v1032, %v1034
  %v1040 = vsel %vm1037, %v1030, %v1032
  %v1041 = vsel %vm1037, %v1036, %v1030
  %vm1042 = vmand %vm95, %vm111
  %vm1043 = vmand %vm96, %vm112
  %vm1044 = vmand %vm97, %vm113
  %vm1045 = vmand %vm98, %vm114
  %v1046 = vsel %vm1042, 1, 0
  %v1047 = vsel %vm1043, 1, 0
  %v1048 = vsel %vm1044, 1, 0
  %v1049 = vsel %vm1045, 1, 0
  %vm1050 = vcmp.eq.s32.totalorder %v1046, 1
  %vm1051 = vcmp.eq.s32.totalorder %v1047, 1
  %vm1052 = vcmp.eq.s32.totalorder %v1048, 1
  %vm1053 = vcmp.eq.s32.totalorder %v1049, 1
  %v1054 = vsel %vm1050, %v1040, 0.0
  %v1055 = vsel %vm1051, %v1039, 0.0
  %v1056 = vsel %vm1052, %v1038, 0.0
  %v1057 = vsel %vm1053, %v1041, 0.0
  %v1059 = vsel %vm237, %v1027, 0
  %v1062 = vsel %vm237, %v1028, 0
  %v1065 = vsel %vm244, %v1054, 0
  %v1068 = vsel %vm244, %v1055, 0
  %v1071 = vsel %vm244, %v1056, 0
  %v1074 = vsel %vm244, %v1057, 0
  %1076 = vmatpush.msra.mxu0 0.0
  %1077 = vmatpush.msra.mxu0 0.0
  %1078 = vmatpush.msra.mxu0 0.0
  %1079 = vmatpush.msra.mxu0 0.0
  %1080 = vmatpush.msra.mxu0 0.0
  %1081 = vmatpush.msra.mxu0 0.0
  %1082 = vmatpush.msra.mxu0 0.0
  %1083 = vmatpush.msra.mxu0 0.0
  %1084 = vmatpush.msra.mxu0 0.0
  %1085 = vmatpush.msra.mxu0 0.0
  %1086 = vmatpush.msra.mxu0 0.0
  %1087 = vmatpush.msra.mxu0 0.0
  %1088 = vmatpush.msra.mxu0 0.0
  %1089 = vmatpush.msra.mxu0 0.0
  %1090 = vmatpush.msra.mxu0 0.0
  %1091 = vmatpush.msra.mxu0 %v1065
  %1092 = vmatmul.f32.gmra.mxu0 %v1059
  %v1093 = vpop.f32.mrf.mxu0
  %v1094 = vadd.f32 0.0, %v1093
  %1095 = vmatmul.f32.gmra.mxu0 %v1062
  %v1096 = vpop.f32.mrf.mxu0
  %v1097 = vadd.f32 0.0, %v1096
  %1098 = vdwg.mxu0
  %1099 = vmatpush.msra.mxu0 0.0
  %1100 = vmatpush.msra.mxu0 0.0
  %1101 = vmatpush.msra.mxu0 0.0
  %1102 = vmatpush.msra.mxu0 0.0
  %1103 = vmatpush.msra.mxu0 0.0
  %1104 = vmatpush.msra.mxu0 0.0
  %1105 = vmatpush.msra.mxu0 0.0
  %1106 = vmatpush.msra.mxu0 0.0
  %1107 = vmatpush.msra.mxu0 0.0
  %1108 = vmatpush.msra.mxu0 0.0
  %1109 = vmatpush.msra.mxu0 0.0
  %1110 = vmatpush.msra.mxu0 0.0
  %1111 = vmatpush.msra.mxu0 0.0
  %1112 = vmatpush.msra.mxu0 0.0
  %1113 = vmatpush.msra.mxu0 0.0
  %1114 = vmatpush.msra.mxu0 %v1068
  %1115 = vmatmul.f32.gmra.mxu0 %v1059
  %v1116 = vpop.f32.mrf.mxu0
  %v1117 = vadd.f32 0.0, %v1116
  %1118 = vmatmul.f32.gmra.mxu0 %v1062
  %v1119 = vpop.f32.mrf.mxu0
  %v1120 = vadd.f32 0.0, %v1119
  %1121 = vdwg.mxu0
  %1122 = vmatpush.msra.mxu0 0.0
  %1123 = vmatpush.msra.mxu0 0.0
  %1124 = vmatpush.msra.mxu0 0.0
  %1125 = vmatpush.msra.mxu0 0.0
  %1126 = vmatpush.msra.mxu0 0.0
  %1127 = vmatpush.msra.mxu0 0.0
  %1128 = vmatpush.msra.mxu0 0.0
  %1129 = vmatpush.msra.mxu0 0.0
  %1130 = vmatpush.msra.mxu0 0.0
  %1131 = vmatpush.msra.mxu0 0.0
  %1132 = vmatpush.msra.mxu0 0.0
  %1133 = vmatpush.msra.mxu0 0.0
  %1134 = vmatpush.msra.mxu0 0.0
  %1135 = vmatpush.msra.mxu0 0.0
  %1136 = vmatpush.msra.mxu0 0.0
  %1137 = vmatpush.msra.mxu0 %v1071
  %1138 = vmatmul.f32.gmra.mxu0 %v1059
  %v1139 = vpop.f32.mrf.mxu0
  %v1140 = vadd.f32 0.0, %v1139
  %1141 = vmatmul.f32.gmra.mxu0 %v1062
  %v1142 = vpop.f32.mrf.mxu0
  %v1143 = vadd.f32 0.0, %v1142
  %1144 = vdwg.mxu0
  %1145 = vmatpush.msra.mxu0 0.0
  %1146 = vmatpush.msra.mxu0 0.0
  %1147 = vmatpush.msra.mxu0 0.0
  %1148 = vmatpush.msra.mxu0 0.0
  %1149 = vmatpush.msra.mxu0 0.0
  %1150 = vmatpush.msra.mxu0 0.0
  %1151 = vmatpush.msra.mxu0 0.0
  %1152 = vmatpush.msra.mxu0 0.0
  %1153 = vmatpush.msra.mxu0 0.0
  %1154 = vmatpush.msra.mxu0 0.0
  %1155 = vmatpush.msra.mxu0 0.0
  %1156 = vmatpush.msra.mxu0 0.0
  %1157 = vmatpush.msra.mxu0 0.0
  %1158 = vmatpush.msra.mxu0 0.0
  %1159 = vmatpush.msra.mxu0 0.0
  %1160 = vmatpush.msra.mxu0 %v1074
  %1161 = vmatmul.f32.gmra.mxu0 %v1059
  %v1162 = vpop.f32.mrf.mxu0
  %v1163 = vadd.f32 0.0, %v1162
  %1164 = vmatmul.f32.gmra.mxu0 %v1062
  %v1165 = vpop.f32.mrf.mxu0
  %v1166 = vadd.f32 0.0, %v1165
  %1167 = vdwg.mxu0
  %v1168 = vadd.f32 %v1018, %v1094
  %v1169 = vadd.f32 %v1019, %v1117
  %v1170 = vadd.f32 %v1020, %v1140
  %v1171 = vadd.f32 %v1021, %v1163
  %v1172 = vadd.f32 %v1022, %v1097
  %v1173 = vadd.f32 %v1023, %v1120
  %v1174 = vadd.f32 %v1024, %v1143
  %v1175 = vadd.f32 %v1025, %v1166
  %s1176 = scalar_lea.vmem %s1, 112
  %v1177 = vld [vmem:[%s1176] sm:$0xff]
  %v1178 = vld [vmem:[%s1176 + $0x8] sm:$0xff]
  %1179 = vrot.lane.b32.xlu0 %v164, 112
  %v1180 = vpop.permute.xlu0 %1179
  %1181 = vrot.lane.b32.xlu0 %v165, 112
  %v1182 = vpop.permute.xlu0 %1181
  %1183 = vrot.lane.b32.xlu0 %v170, 112
  %v1184 = vpop.permute.xlu0 %1183
  %1185 = vrot.lane.b32.xlu0 %v171, 112
  %v1186 = vpop.permute.xlu0 %1185
  %vm1187 = vcmp.lt.s32.totalorder %v39, 112
  %v1188 = vsel %vm1187, %v1184, %v1186
  %v1189 = vsel %vm1187, %v1182, %v1184
  %v1190 = vsel %vm1187, %v1180, %v1182
  %v1191 = vsel %vm1187, %v1186, %v1180
  %vm1192 = vmand %vm95, %vm123
  %vm1193 = vmand %vm96, %vm124
  %vm1194 = vmand %vm97, %vm125
  %vm1195 = vmand %vm98, %vm126
  %v1196 = vsel %vm1192, 1, 0
  %v1197 = vsel %vm1193, 1, 0
  %v1198 = vsel %vm1194, 1, 0
  %v1199 = vsel %vm1195, 1, 0
  %vm1200 = vcmp.eq.s32.totalorder %v1196, 1
  %vm1201 = vcmp.eq.s32.totalorder %v1197, 1
  %vm1202 = vcmp.eq.s32.totalorder %v1198, 1
  %vm1203 = vcmp.eq.s32.totalorder %v1199, 1
  %v1204 = vsel %vm1200, %v1190, 0.0
  %v1205 = vsel %vm1201, %v1189, 0.0
  %v1206 = vsel %vm1202, %v1188, 0.0
  %v1207 = vsel %vm1203, %v1191, 0.0
  %v1209 = vsel %vm237, %v1177, 0
  %v1212 = vsel %vm237, %v1178, 0
  %v1215 = vsel %vm244, %v1204, 0
  %v1218 = vsel %vm244, %v1205, 0
  %v1221 = vsel %vm244, %v1206, 0
  %v1224 = vsel %vm244, %v1207, 0
  %1226 = vmatpush.msra.mxu0 0.0
  %1227 = vmatpush.msra.mxu0 0.0
  %1228 = vmatpush.msra.mxu0 0.0
  %1229 = vmatpush.msra.mxu0 0.0
  %1230 = vmatpush.msra.mxu0 0.0
  %1231 = vmatpush.msra.mxu0 0.0
  %1232 = vmatpush.msra.mxu0 0.0
  %1233 = vmatpush.msra.mxu0 0.0
  %1234 = vmatpush.msra.mxu0 0.0
  %1235 = vmatpush.msra.mxu0 0.0
  %1236 = vmatpush.msra.mxu0 0.0
  %1237 = vmatpush.msra.mxu0 0.0
  %1238 = vmatpush.msra.mxu0 0.0
  %1239 = vmatpush.msra.mxu0 0.0
  %1240 = vmatpush.msra.mxu0 0.0
  %1241 = vmatpush.msra.mxu0 %v1215
  %1242 = vmatmul.f32.gmra.mxu0 %v1209
  %v1243 = vpop.f32.mrf.mxu0
  %v1244 = vadd.f32 0.0, %v1243
  %1245 = vmatmul.f32.gmra.mxu0 %v1212
  %v1246 = vpop.f32.mrf.mxu0
  %v1247 = vadd.f32 0.0, %v1246
  %1248 = vdwg.mxu0
  %1249 = vmatpush.msra.mxu0 0.0
  %1250 = vmatpush.msra.mxu0 0.0
  %1251 = vmatpush.msra.mxu0 0.0
  %1252 = vmatpush.msra.mxu0 0.0
  %1253 = vmatpush.msra.mxu0 0.0
  %1254 = vmatpush.msra.mxu0 0.0
  %1255 = vmatpush.msra.mxu0 0.0
  %1256 = vmatpush.msra.mxu0 0.0
  %1257 = vmatpush.msra.mxu0 0.0
  %1258 = vmatpush.msra.mxu0 0.0
  %1259 = vmatpush.msra.mxu0 0.0
  %1260 = vmatpush.msra.mxu0 0.0
  %1261 = vmatpush.msra.mxu0 0.0
  %1262 = vmatpush.msra.mxu0 0.0
  %1263 = vmatpush.msra.mxu0 0.0
  %1264 = vmatpush.msra.mxu0 %v1218
  %1265 = vmatmul.f32.gmra.mxu0 %v1209
  %v1266 = vpop.f32.mrf.mxu0
  %v1267 = vadd.f32 0.0, %v1266
  %1268 = vmatmul.f32.gmra.mxu0 %v1212
  %v1269 = vpop.f32.mrf.mxu0
  %v1270 = vadd.f32 0.0, %v1269
  %1271 = vdwg.mxu0
  %1272 = vmatpush.msra.mxu0 0.0
  %1273 = vmatpush.msra.mxu0 0.0
  %1274 = vmatpush.msra.mxu0 0.0
  %1275 = vmatpush.msra.mxu0 0.0
  %1276 = vmatpush.msra.mxu0 0.0
  %1277 = vmatpush.msra.mxu0 0.0
  %1278 = vmatpush.msra.mxu0 0.0
  %1279 = vmatpush.msra.mxu0 0.0
  %1280 = vmatpush.msra.mxu0 0.0
  %1281 = vmatpush.msra.mxu0 0.0
  %1282 = vmatpush.msra.mxu0 0.0
  %1283 = vmatpush.msra.mxu0 0.0
  %1284 = vmatpush.msra.mxu0 0.0
  %1285 = vmatpush.msra.mxu0 0.0
  %1286 = vmatpush.msra.mxu0 0.0
  %1287 = vmatpush.msra.mxu0 %v1221
  %1288 = vmatmul.f32.gmra.mxu0 %v1209
  %v1289 = vpop.f32.mrf.mxu0
  %v1290 = vadd.f32 0.0, %v1289
  %1291 = vmatmul.f32.gmra.mxu0 %v1212
  %v1292 = vpop.f32.mrf.mxu0
  %v1293 = vadd.f32 0.0, %v1292
  %1294 = vdwg.mxu0
  %1295 = vmatpush.msra.mxu0 0.0
  %1296 = vmatpush.msra.mxu0 0.0
  %1297 = vmatpush.msra.mxu0 0.0
  %1298 = vmatpush.msra.mxu0 0.0
  %1299 = vmatpush.msra.mxu0 0.0
  %1300 = vmatpush.msra.mxu0 0.0
  %1301 = vmatpush.msra.mxu0 0.0
  %1302 = vmatpush.msra.mxu0 0.0
  %1303 = vmatpush.msra.mxu0 0.0
  %1304 = vmatpush.msra.mxu0 0.0
  %1305 = vmatpush.msra.mxu0 0.0
  %1306 = vmatpush.msra.mxu0 0.0
  %1307 = vmatpush.msra.mxu0 0.0
  %1308 = vmatpush.msra.mxu0 0.0
  %1309 = vmatpush.msra.mxu0 0.0
  %1310 = vmatpush.msra.mxu0 %v1224
  %1311 = vmatmul.f32.gmra.mxu0 %v1209
  %v1312 = vpop.f32.mrf.mxu0
  %v1313 = vadd.f32 0.0, %v1312
  %1314 = vmatmul.f32.gmra.mxu0 %v1212
  %v1315 = vpop.f32.mrf.mxu0
  %v1316 = vadd.f32 0.0, %v1315
  %1317 = vdwg.mxu0
  %v1318 = vadd.f32 %v1168, %v1244
  %v1319 = vadd.f32 %v1169, %v1267
  %v1320 = vadd.f32 %v1170, %v1290
  %v1321 = vadd.f32 %v1171, %v1313
  %v1322 = vadd.f32 %v1172, %v1247
  %v1323 = vadd.f32 %v1173, %v1270
  %v1324 = vadd.f32 %v1174, %v1293
  %v1325 = vadd.f32 %v1175, %v1316
  %s1326 = scalar_lea.vmem %s1, 128
  %v1327 = vld [vmem:[%s1326] sm:$0xff]
  %v1328 = vld [vmem:[%s1326 + $0x8] sm:$0xff]
  %1329 = vrot.lane.b32.xlu0 %v164, 111
  %v1330 = vpop.permute.xlu0 %1329
  %1331 = vrot.lane.b32.xlu0 %v165, 111
  %v1332 = vpop.permute.xlu0 %1331
  %1333 = vrot.lane.b32.xlu0 %v170, 111
  %v1334 = vpop.permute.xlu0 %1333
  %1335 = vrot.lane.b32.xlu0 %v171, 111
  %v1336 = vpop.permute.xlu0 %1335
  %vm1337 = vcmp.lt.s32.totalorder %v39, 111
  %v1338 = vsel %vm1337, %v1334, %v1336
  %v1339 = vsel %vm1337, %v1332, %v1334
  %v1340 = vsel %vm1337, %v1330, %v1332
  %v1341 = vsel %vm1337, %v1336, %v1330
  %vm1342 = vmand %vm95, %vm139
  %vm1343 = vmand %vm96, %vm140
  %vm1344 = vmand %vm97, %vm141
  %vm1345 = vmand %vm98, %vm142
  %v1346 = vsel %vm1342, 1, 0
  %v1347 = vsel %vm1343, 1, 0
  %v1348 = vsel %vm1344, 1, 0
  %v1349 = vsel %vm1345, 1, 0
  %vm1350 = vcmp.eq.s32.totalorder %v1346, 1
  %vm1351 = vcmp.eq.s32.totalorder %v1347, 1
  %vm1352 = vcmp.eq.s32.totalorder %v1348, 1
  %vm1353 = vcmp.eq.s32.totalorder %v1349, 1
  %v1354 = vsel %vm1350, %v1340, 0.0
  %v1355 = vsel %vm1351, %v1339, 0.0
  %v1356 = vsel %vm1352, %v1338, 0.0
  %v1357 = vsel %vm1353, %v1341, 0.0
  %v1359 = vsel %vm237, %v1327, 0
  %v1362 = vsel %vm237, %v1328, 0
  %v1365 = vsel %vm244, %v1354, 0
  %v1368 = vsel %vm244, %v1355, 0
  %v1371 = vsel %vm244, %v1356, 0
  %v1374 = vsel %vm244, %v1357, 0
  %1376 = vmatpush.msra.mxu0 0.0
  %1377 = vmatpush.msra.mxu0 0.0
  %1378 = vmatpush.msra.mxu0 0.0
  %1379 = vmatpush.msra.mxu0 0.0
  %1380 = vmatpush.msra.mxu0 0.0
  %1381 = vmatpush.msra.mxu0 0.0
  %1382 = vmatpush.msra.mxu0 0.0
  %1383 = vmatpush.msra.mxu0 0.0
  %1384 = vmatpush.msra.mxu0 0.0
  %1385 = vmatpush.msra.mxu0 0.0
  %1386 = vmatpush.msra.mxu0 0.0
  %1387 = vmatpush.msra.mxu0 0.0
  %1388 = vmatpush.msra.mxu0 0.0
  %1389 = vmatpush.msra.mxu0 0.0
  %1390 = vmatpush.msra.mxu0 0.0
  %1391 = vmatpush.msra.mxu0 %v1365
  %1392 = vmatmul.f32.gmra.mxu0 %v1359
  %v1393 = vpop.f32.mrf.mxu0
  %v1394 = vadd.f32 0.0, %v1393
  %1395 = vmatmul.f32.gmra.mxu0 %v1362
  %v1396 = vpop.f32.mrf.mxu0
  %v1397 = vadd.f32 0.0, %v1396
  %1398 = vdwg.mxu0
  %1399 = vmatpush.msra.mxu0 0.0
  %1400 = vmatpush.msra.mxu0 0.0
  %1401 = vmatpush.msra.mxu0 0.0
  %1402 = vmatpush.msra.mxu0 0.0
  %1403 = vmatpush.msra.mxu0 0.0
  %1404 = vmatpush.msra.mxu0 0.0
  %1405 = vmatpush.msra.mxu0 0.0
  %1406 = vmatpush.msra.mxu0 0.0
  %1407 = vmatpush.msra.mxu0 0.0
  %1408 = vmatpush.msra.mxu0 0.0
  %1409 = vmatpush.msra.mxu0 0.0
  %1410 = vmatpush.msra.mxu0 0.0
  %1411 = vmatpush.msra.mxu0 0.0
  %1412 = vmatpush.msra.mxu0 0.0
  %1413 = vmatpush.msra.mxu0 0.0
  %1414 = vmatpush.msra.mxu0 %v1368
  %1415 = vmatmul.f32.gmra.mxu0 %v1359
  %v1416 = vpop.f32.mrf.mxu0
  %v1417 = vadd.f32 0.0, %v1416
  %1418 = vmatmul.f32.gmra.mxu0 %v1362
  %v1419 = vpop.f32.mrf.mxu0
  %v1420 = vadd.f32 0.0, %v1419
  %1421 = vdwg.mxu0
  %1422 = vmatpush.msra.mxu0 0.0
  %1423 = vmatpush.msra.mxu0 0.0
  %1424 = vmatpush.msra.mxu0 0.0
  %1425 = vmatpush.msra.mxu0 0.0
  %1426 = vmatpush.msra.mxu0 0.0
  %1427 = vmatpush.msra.mxu0 0.0
  %1428 = vmatpush.msra.mxu0 0.0
  %1429 = vmatpush.msra.mxu0 0.0
  %1430 = vmatpush.msra.mxu0 0.0
  %1431 = vmatpush.msra.mxu0 0.0
  %1432 = vmatpush.msra.mxu0 0.0
  %1433 = vmatpush.msra.mxu0 0.0
  %1434 = vmatpush.msra.mxu0 0.0
  %1435 = vmatpush.msra.mxu0 0.0
  %1436 = vmatpush.msra.mxu0 0.0
  %1437 = vmatpush.msra.mxu0 %v1371
  %1438 = vmatmul.f32.gmra.mxu0 %v1359
  %v1439 = vpop.f32.mrf.mxu0
  %v1440 = vadd.f32 0.0, %v1439
  %1441 = vmatmul.f32.gmra.mxu0 %v1362
  %v1442 = vpop.f32.mrf.mxu0
  %v1443 = vadd.f32 0.0, %v1442
  %1444 = vdwg.mxu0
  %1445 = vmatpush.msra.mxu0 0.0
  %1446 = vmatpush.msra.mxu0 0.0
  %1447 = vmatpush.msra.mxu0 0.0
  %1448 = vmatpush.msra.mxu0 0.0
  %1449 = vmatpush.msra.mxu0 0.0
  %1450 = vmatpush.msra.mxu0 0.0
  %1451 = vmatpush.msra.mxu0 0.0
  %1452 = vmatpush.msra.mxu0 0.0
  %1453 = vmatpush.msra.mxu0 0.0
  %1454 = vmatpush.msra.mxu0 0.0
  %1455 = vmatpush.msra.mxu0 0.0
  %1456 = vmatpush.msra.mxu0 0.0
  %1457 = vmatpush.msra.mxu0 0.0
  %1458 = vmatpush.msra.mxu0 0.0
  %1459 = vmatpush.msra.mxu0 0.0
  %1460 = vmatpush.msra.mxu0 %v1374
  %1461 = vmatmul.f32.gmra.mxu0 %v1359
  %v1462 = vpop.f32.mrf.mxu0
  %v1463 = vadd.f32 0.0, %v1462
  %1464 = vmatmul.f32.gmra.mxu0 %v1362
  %v1465 = vpop.f32.mrf.mxu0
  %v1466 = vadd.f32 0.0, %v1465
  %1467 = vdwg.mxu0
  %v1468 = vadd.f32 %v1318, %v1394
  %v1469 = vadd.f32 %v1319, %v1417
  %v1470 = vadd.f32 %v1320, %v1440
  %v1471 = vadd.f32 %v1321, %v1463
  %v1472 = vadd.f32 %v1322, %v1397
  %v1473 = vadd.f32 %v1323, %v1420
  %v1474 = vadd.f32 %v1324, %v1443
  %v1475 = vadd.f32 %v1325, %v1466
  %v1476 = vld [vmem:[%s2] sm:$0xff]
  %v1477 = vld [vmem:[%s2 + $0x8] sm:$0xff]
  %1479 = vset.pattern.permute.xlu0 0
  %1480 = vperm.xlu0 %1479, %v1476
  %v1481 = vpop.permute.xlu0 %1480
  %1484 = vset.pattern.permute.xlu0 0
  %1485 = vperm.xlu0 %1484, %v1477
  %v1486 = vpop.permute.xlu0 %1485
  %v1488 = vadd.f32 %v1468, %v1481
  %v1489 = vadd.f32 %v1469, %v1481
  %v1490 = vadd.f32 %v1470, %v1481
  %v1491 = vadd.f32 %v1471, %v1481
  %v1492 = vadd.f32 %v1472, %v1486
  %v1493 = vadd.f32 %v1473, %v1486
  %v1494 = vadd.f32 %v1474, %v1486
  %v1495 = vadd.f32 %v1475, %v1486
  %v1496 = vadd.f32 %v1488, %v1489
  %v1497 = vadd.f32 %v1496, %v1490
  %v1498 = vadd.f32 %v1497, %v1491
  %1499 = vadd.xlane.f32.xlu0 %v1498
  %v1500 = vpop.xlane.xlu0 %1499
  %v1501 = vadd.f32 %v1492, %v1493
  %v1502 = vadd.f32 %v1501, %v1494
  %v1503 = vadd.f32 %v1502, %v1495
  %1504 = vadd.xlane.f32.xlu0 %v1503
  %v1505 = vpop.xlane.xlu0 %1504
  %v1506 = vmul.f32 %v1500, 0.001953125
  %v1507 = vmul.f32 %v1505, 0.001953125
  %v1508 = vsub.f32 %v1488, %v1506
  %v1509 = vsub.f32 %v1489, %v1506
  %v1510 = vsub.f32 %v1490, %v1506
  %v1511 = vsub.f32 %v1491, %v1506
  %v1512 = vsub.f32 %v1492, %v1507
  %v1513 = vsub.f32 %v1493, %v1507
  %v1514 = vsub.f32 %v1494, %v1507
  %v1515 = vsub.f32 %v1495, %v1507
  %v1516 = vmul.f32 %v1508, %v1508
  %v1517 = vmul.f32 %v1509, %v1509
  %v1518 = vmul.f32 %v1510, %v1510
  %v1519 = vmul.f32 %v1511, %v1511
  %v1520 = vmul.f32 %v1512, %v1512
  %v1521 = vmul.f32 %v1513, %v1513
  %v1522 = vmul.f32 %v1514, %v1514
  %v1523 = vmul.f32 %v1515, %v1515
  %v1524 = vadd.f32 %v1516, %v1517
  %v1525 = vadd.f32 %v1524, %v1518
  %v1526 = vadd.f32 %v1525, %v1519
  %1527 = vadd.xlane.f32.xlu0 %v1526
  %v1528 = vpop.xlane.xlu0 %1527
  %v1529 = vadd.f32 %v1520, %v1521
  %v1530 = vadd.f32 %v1529, %v1522
  %v1531 = vadd.f32 %v1530, %v1523
  %1532 = vadd.xlane.f32.xlu0 %v1531
  %v1533 = vpop.xlane.xlu0 %1532
  %v1534 = vmul.f32 %v1528, 0.001953125
  %v1535 = vmul.f32 %v1533, 0.001953125
  %v1536 = vmax.f32 %v1534, 0.0
  %v1537 = vmax.f32 %v1535, 0.0
  %v1538 = vld [vmem:[%s3] sm:$0xff]
  %v1539 = vld [vmem:[%s3 + $0x8] sm:$0xff]
  %v1540 = vadd.f32 %v1536, 1e-05
  %v1541 = vadd.f32 %v1537, 1e-05
  %v1542 = vrsqrt.pop %v1540
  %v1543 = vmul.f32 %v1542, %v1540
  %v1544 = vmul.f32 %v1543, %v1542
  %v1545 = vmul.f32 0.5, %v1544
  %v1546 = vsub.f32 1.5, %v1545
  %v1547 = vmul.f32 %v1542, %v1546
  %vm1548 = vweird.f32 %v1540
  %vm1549 = vweird.f32 %v1542
  %vm1550 = vmor %vm1548, %vm1549
  %v1551 = vsel %vm1550, %v1542, %v1547
  %v1552 = vrsqrt.pop %v1541
  %v1553 = vmul.f32 %v1552, %v1541
  %v1554 = vmul.f32 %v1553, %v1552
  %v1555 = vmul.f32 0.5, %v1554
  %v1556 = vsub.f32 1.5, %v1555
  %v1557 = vmul.f32 %v1552, %v1556
  %vm1558 = vweird.f32 %v1541
  %vm1559 = vweird.f32 %v1552
  %vm1560 = vmor %vm1558, %vm1559
  %v1561 = vsel %vm1560, %v1552, %v1557
  %v1562 = vmul.f32 %v1538, %v1551
  %v1563 = vmul.f32 %v1539, %v1561
  %v1564 = vld [vmem:[%s4] sm:$0xff]
  %v1565 = vld [vmem:[%s4 + $0x8] sm:$0xff]
  %v1566 = vmul.f32 %v1506, %v1562
  %v1567 = vmul.f32 %v1507, %v1563
  %v1568 = vsub.f32 %v1564, %v1566
  %v1569 = vsub.f32 %v1565, %v1567
  %1571 = vset.pattern.permute.xlu0 0
  %1572 = vperm.xlu0 %1571, %v1562
  %v1573 = vpop.permute.xlu0 %1572
  %1576 = vset.pattern.permute.xlu0 0
  %1577 = vperm.xlu0 %1576, %v1563
  %v1578 = vpop.permute.xlu0 %1577
  %v1580 = vmul.f32 %v1488, %v1573
  %v1581 = vmul.f32 %v1489, %v1573
  %v1582 = vmul.f32 %v1490, %v1573
  %v1583 = vmul.f32 %v1491, %v1573
  %v1584 = vmul.f32 %v1492, %v1578
  %v1585 = vmul.f32 %v1493, %v1578
  %v1586 = vmul.f32 %v1494, %v1578
  %v1587 = vmul.f32 %v1495, %v1578
  %1589 = vset.pattern.permute.xlu0 0
  %1590 = vperm.xlu0 %1589, %v1568
  %v1591 = vpop.permute.xlu0 %1590
  %1594 = vset.pattern.permute.xlu0 0
  %1595 = vperm.xlu0 %1594, %v1569
  %v1596 = vpop.permute.xlu0 %1595
  %v1598 = vadd.f32 %v1580, %v1591
  %v1599 = vadd.f32 %v1581, %v1591
  %v1600 = vadd.f32 %v1582, %v1591
  %v1601 = vadd.f32 %v1583, %v1591
  %v1602 = vadd.f32 %v1584, %v1596
  %v1603 = vadd.f32 %v1585, %v1596
  %v1604 = vadd.f32 %v1586, %v1596
  %v1605 = vadd.f32 %v1587, %v1596
  %v1606 = vmax.f32 %v1598, 0.0
  %v1607 = vmax.f32 %v1599, 0.0
  %v1608 = vmax.f32 %v1600, 0.0
  %v1609 = vmax.f32 %v1601, 0.0
  %v1610 = vmax.f32 %v1602, 0.0
  %v1611 = vmax.f32 %v1603, 0.0
  %v1612 = vmax.f32 %v1604, 0.0
  %v1613 = vmax.f32 %v1605, 0.0
  %1614 = vrot.lane.b32.xlu0 %v1606, 112
  %v1615 = vpop.permute.xlu0 %1614
  %1616 = vrot.lane.b32.xlu0 %v1610, 112
  %v1617 = vpop.permute.xlu0 %1616
  %1618 = vrot.lane.b32.xlu0 %v1607, 112
  %v1619 = vpop.permute.xlu0 %1618
  %1620 = vrot.lane.b32.xlu0 %v1611, 112
  %v1621 = vpop.permute.xlu0 %1620
  %1622 = vrot.lane.b32.xlu0 %v1608, 112
  %v1623 = vpop.permute.xlu0 %1622
  %1624 = vrot.lane.b32.xlu0 %v1612, 112
  %v1625 = vpop.permute.xlu0 %1624
  %1626 = vrot.lane.b32.xlu0 %v1609, 112
  %v1627 = vpop.permute.xlu0 %1626
  %1628 = vrot.lane.b32.xlu0 %v1613, 112
  %v1629 = vpop.permute.xlu0 %1628
  %v1630 = vsel %vm1187, %v1623, %v1627
  %v1631 = vsel %vm1187, %v1625, %v1629
  %v1632 = vsel %vm1187, %v1619, %v1623
  %v1633 = vsel %vm1187, %v1621, %v1625
  %v1634 = vsel %vm1187, %v1615, %v1619
  %v1635 = vsel %vm1187, %v1617, %v1621
  %v1636 = vsel %vm1187, %v1627, %v1615
  %v1637 = vsel %vm1187, %v1629, %v1617
  %1638 = vrot.lane.b32.xlu0 %v1606, 16
  %v1639 = vpop.permute.xlu0 %1638
  %1640 = vrot.lane.b32.xlu0 %v1610, 16
  %v1641 = vpop.permute.xlu0 %1640
  %1642 = vrot.lane.b32.xlu0 %v1607, 16
  %v1643 = vpop.permute.xlu0 %1642
  %1644 = vrot.lane.b32.xlu0 %v1611, 16
  %v1645 = vpop.permute.xlu0 %1644
  %1646 = vrot.lane.b32.xlu0 %v1608, 16
  %v1647 = vpop.permute.xlu0 %1646
  %1648 = vrot.lane.b32.xlu0 %v1612, 16
  %v1649 = vpop.permute.xlu0 %1648
  %1650 = vrot.lane.b32.xlu0 %v1609, 16
  %v1651 = vpop.permute.xlu0 %1650
  %1652 = vrot.lane.b32.xlu0 %v1613, 16
  %v1653 = vpop.permute.xlu0 %1652
  %v1654 = vsel %vm216, %v1647, %v1651
  %v1655 = vsel %vm216, %v1649, %v1653
  %v1656 = vsel %vm216, %v1643, %v1647
  %v1657 = vsel %vm216, %v1645, %v1649
  %v1658 = vsel %vm216, %v1639, %v1643
  %v1659 = vsel %vm216, %v1641, %v1645
  %v1660 = vsel %vm216, %v1651, %v1639
  %v1661 = vsel %vm216, %v1653, %v1641
  %v1662 = vsel %vm147, 1, 0
  %v1663 = vsel %vm148, 1, 0
  %v1664 = vsel %vm149, 1, 0
  %v1665 = vsel %vm150, 1, 0
  %vm1666 = vcmp.eq.s32.totalorder %v1662, 1
  %vm1667 = vcmp.eq.s32.totalorder %v1663, 1
  %vm1668 = vcmp.eq.s32.totalorder %v1664, 1
  %vm1669 = vcmp.eq.s32.totalorder %v1665, 1
  %v1670 = vsel %vm1666, %v1634, %v1660
  %v1671 = vsel %vm1667, %v1632, %v1658
  %v1672 = vsel %vm1668, %v1630, %v1656
  %v1673 = vsel %vm1669, %v1636, %v1654
  %v1674 = vsel %vm1666, %v1635, %v1661
  %v1675 = vsel %vm1667, %v1633, %v1659
  %v1676 = vsel %vm1668, %v1631, %v1657
  %v1677 = vsel %vm1669, %v1637, %v1655
  %v1678 = vmax.f32 %v1606, %v1670
  %v1679 = vmax.f32 %v1607, %v1671
  %v1680 = vmax.f32 %v1608, %v1672
  %v1681 = vmax.f32 %v1609, %v1673
  %v1682 = vmax.f32 %v1610, %v1674
  %v1683 = vmax.f32 %v1611, %v1675
  %v1684 = vmax.f32 %v1612, %v1676
  %v1685 = vmax.f32 %v1613, %v1677
  %1686 = vrot.lane.b32.xlu0 %v1678, 127
  %v1687 = vpop.permute.xlu0 %1686
  %1688 = vrot.lane.b32.xlu0 %v1682, 127
  %v1689 = vpop.permute.xlu0 %1688
  %1690 = vrot.lane.b32.xlu0 %v1679, 127
  %v1691 = vpop.permute.xlu0 %1690
  %1692 = vrot.lane.b32.xlu0 %v1683, 127
  %v1693 = vpop.permute.xlu0 %1692
  %1694 = vrot.lane.b32.xlu0 %v1680, 127
  %v1695 = vpop.permute.xlu0 %1694
  %1696 = vrot.lane.b32.xlu0 %v1684, 127
  %v1697 = vpop.permute.xlu0 %1696
  %1698 = vrot.lane.b32.xlu0 %v1681, 127
  %v1699 = vpop.permute.xlu0 %1698
  %1700 = vrot.lane.b32.xlu0 %v1685, 127
  %v1701 = vpop.permute.xlu0 %1700
  %v1702 = vsel %vm887, %v1695, %v1699
  %v1703 = vsel %vm887, %v1697, %v1701
  %v1704 = vsel %vm887, %v1691, %v1695
  %v1705 = vsel %vm887, %v1693, %v1697
  %v1706 = vsel %vm887, %v1687, %v1691
  %v1707 = vsel %vm887, %v1689, %v1693
  %v1708 = vsel %vm887, %v1699, %v1687
  %v1709 = vsel %vm887, %v1701, %v1689
  %1710 = vrot.lane.b32.xlu0 %v1678, 1
  %v1711 = vpop.permute.xlu0 %1710
  %1712 = vrot.lane.b32.xlu0 %v1682, 1
  %v1713 = vpop.permute.xlu0 %1712
  %1714 = vrot.lane.b32.xlu0 %v1679, 1
  %v1715 = vpop.permute.xlu0 %1714
  %1716 = vrot.lane.b32.xlu0 %v1683, 1
  %v1717 = vpop.permute.xlu0 %1716
  %1718 = vrot.lane.b32.xlu0 %v1680, 1
  %v1719 = vpop.permute.xlu0 %1718
  %1720 = vrot.lane.b32.xlu0 %v1684, 1
  %v1721 = vpop.permute.xlu0 %1720
  %1722 = vrot.lane.b32.xlu0 %v1681, 1
  %v1723 = vpop.permute.xlu0 %1722
  %1724 = vrot.lane.b32.xlu0 %v1685, 1
  %v1725 = vpop.permute.xlu0 %1724
  %v1726 = vsel %vm620, %v1719, %v1723
  %v1727 = vsel %vm620, %v1721, %v1725
  %v1728 = vsel %vm620, %v1715, %v1719
  %v1729 = vsel %vm620, %v1717, %v1721
  %v1730 = vsel %vm620, %v1711, %v1715
  %v1731 = vsel %vm620, %v1713, %v1717
  %v1732 = vsel %vm620, %v1723, %v1711
  %v1733 = vsel %vm620, %v1725, %v1713
  %v1734 = vsel %vm155, 1, 0
  %v1735 = vsel %vm156, 1, 0
  %v1736 = vsel %vm157, 1, 0
  %v1737 = vsel %vm158, 1, 0
  %vm1738 = vcmp.eq.s32.totalorder %v1734, 1
  %vm1739 = vcmp.eq.s32.totalorder %v1735, 1
  %vm1740 = vcmp.eq.s32.totalorder %v1736, 1
  %vm1741 = vcmp.eq.s32.totalorder %v1737, 1
  %v1742 = vsel %vm1738, %v1706, %v1732
  %v1743 = vsel %vm1739, %v1704, %v1730
  %v1744 = vsel %vm1740, %v1702, %v1728
  %v1745 = vsel %vm1741, %v1708, %v1726
  %v1746 = vsel %vm1738, %v1707, %v1733
  %v1747 = vsel %vm1739, %v1705, %v1731
  %v1748 = vsel %vm1740, %v1703, %v1729
  %v1749 = vsel %vm1741, %v1709, %v1727
  %v1750 = vmax.f32 %v1678, %v1742
  %v1751 = vmax.f32 %v1679, %v1743
  %v1752 = vmax.f32 %v1680, %v1744
  %v1753 = vmax.f32 %v1681, %v1745
  %v1754 = vmax.f32 %v1682, %v1746
  %v1755 = vmax.f32 %v1683, %v1747
  %v1756 = vmax.f32 %v1684, %v1748
  %v1757 = vmax.f32 %v1685, %v1749
  %vm1758 = vmand %vm147, %vm155
  %vm1759 = vmand %vm148, %vm156
  %vm1760 = vmand %vm149, %vm157
  %vm1761 = vmand %vm150, %vm158
  %v1762 = vld [vmem:[%s5] sm:$0xff]
  %v1763 = vld [vmem:[%s5 + $0x8] sm:$0xff]
  %vm1764 = vcmask 130048
  %v1766 = vsel %vm1764, %v1762, 0
  %v1769 = vsel %vm1764, %v1763, 0
  %1771 = vmatpush.msra.mxu0 0.0
  %1772 = vmatpush.msra.mxu0 0.0
  %1773 = vmatpush.msra.mxu0 0.0
  %1774 = vmatpush.msra.mxu0 0.0
  %1775 = vmatpush.msra.mxu0 0.0
  %1776 = vmatpush.msra.mxu0 0.0
  %1777 = vmatpush.msra.mxu0 0.0
  %1778 = vmatpush.msra.mxu0 0.0
  %1779 = vmatpush.msra.mxu0 0.0
  %1780 = vmatpush.msra.mxu0 0.0
  %1781 = vmatpush.msra.mxu0 0.0
  %1782 = vmatpush.msra.mxu0 0.0
  %1783 = vmatpush.msra.mxu0 0.0
  %1784 = vmatpush.msra.mxu0 0.0
  %1785 = vmatpush.msra.mxu0 %v1754
  %1786 = vmatpush.msra.mxu0 %v1750
  %1787 = vmatmul.f32.gmra.mxu0 %v1766
  %v1788 = vpop.f32.mrf.mxu0
  %v1789 = vadd.f32 0.0, %v1788
  %1790 = vmatmul.f32.gmra.mxu0 %v1769
  %v1791 = vpop.f32.mrf.mxu0
  %v1792 = vadd.f32 0.0, %v1791
  %1793 = vdwg.mxu0
  %1794 = vmatpush.msra.mxu0 0.0
  %1795 = vmatpush.msra.mxu0 0.0
  %1796 = vmatpush.msra.mxu0 0.0
  %1797 = vmatpush.msra.mxu0 0.0
  %1798 = vmatpush.msra.mxu0 0.0
  %1799 = vmatpush.msra.mxu0 0.0
  %1800 = vmatpush.msra.mxu0 0.0
  %1801 = vmatpush.msra.mxu0 0.0
  %1802 = vmatpush.msra.mxu0 0.0
  %1803 = vmatpush.msra.mxu0 0.0
  %1804 = vmatpush.msra.mxu0 0.0
  %1805 = vmatpush.msra.mxu0 0.0
  %1806 = vmatpush.msra.mxu0 0.0
  %1807 = vmatpush.msra.mxu0 0.0
  %1808 = vmatpush.msra.mxu0 %v1755
  %1809 = vmatpush.msra.mxu0 %v1751
  %1810 = vmatmul.f32.gmra.mxu0 %v1766
  %v1811 = vpop.f32.mrf.mxu0
  %v1812 = vadd.f32 0.0, %v1811
  %1813 = vmatmul.f32.gmra.mxu0 %v1769
  %v1814 = vpop.f32.mrf.mxu0
  %v1815 = vadd.f32 0.0, %v1814
  %1816 = vdwg.mxu0
  %1817 = vmatpush.msra.mxu0 0.0
  %1818 = vmatpush.msra.mxu0 0.0
  %1819 = vmatpush.msra.mxu0 0.0
  %1820 = vmatpush.msra.mxu0 0.0
  %1821 = vmatpush.msra.mxu0 0.0
  %1822 = vmatpush.msra.mxu0 0.0
  %1823 = vmatpush.msra.mxu0 0.0
  %1824 = vmatpush.msra.mxu0 0.0
  %1825 = vmatpush.msra.mxu0 0.0
  %1826 = vmatpush.msra.mxu0 0.0
  %1827 = vmatpush.msra.mxu0 0.0
  %1828 = vmatpush.msra.mxu0 0.0
  %1829 = vmatpush.msra.mxu0 0.0
  %1830 = vmatpush.msra.mxu0 0.0
  %1831 = vmatpush.msra.mxu0 %v1756
  %1832 = vmatpush.msra.mxu0 %v1752
  %1833 = vmatmul.f32.gmra.mxu0 %v1766
  %v1834 = vpop.f32.mrf.mxu0
  %v1835 = vadd.f32 0.0, %v1834
  %1836 = vmatmul.f32.gmra.mxu0 %v1769
  %v1837 = vpop.f32.mrf.mxu0
  %v1838 = vadd.f32 0.0, %v1837
  %1839 = vdwg.mxu0
  %1840 = vmatpush.msra.mxu0 0.0
  %1841 = vmatpush.msra.mxu0 0.0
  %1842 = vmatpush.msra.mxu0 0.0
  %1843 = vmatpush.msra.mxu0 0.0
  %1844 = vmatpush.msra.mxu0 0.0
  %1845 = vmatpush.msra.mxu0 0.0
  %1846 = vmatpush.msra.mxu0 0.0
  %1847 = vmatpush.msra.mxu0 0.0
  %1848 = vmatpush.msra.mxu0 0.0
  %1849 = vmatpush.msra.mxu0 0.0
  %1850 = vmatpush.msra.mxu0 0.0
  %1851 = vmatpush.msra.mxu0 0.0
  %1852 = vmatpush.msra.mxu0 0.0
  %1853 = vmatpush.msra.mxu0 0.0
  %1854 = vmatpush.msra.mxu0 %v1757
  %1855 = vmatpush.msra.mxu0 %v1753
  %1856 = vmatmul.f32.gmra.mxu0 %v1766
  %v1857 = vpop.f32.mrf.mxu0
  %v1858 = vadd.f32 0.0, %v1857
  %1859 = vmatmul.f32.gmra.mxu0 %v1769
  %v1860 = vpop.f32.mrf.mxu0
  %v1861 = vadd.f32 0.0, %v1860
  %1862 = vdwg.mxu0
  %v1863 = vsel %vm1758, 1, 0
  %v1864 = vsel %vm1759, 1, 0
  %v1865 = vsel %vm1760, 1, 0
  %v1866 = vsel %vm1761, 1, 0
  %vm1867 = vcmp.eq.s32.totalorder %v1863, 1
  %vm1868 = vcmp.eq.s32.totalorder %v1864, 1
  %vm1869 = vcmp.eq.s32.totalorder %v1865, 1
  %vm1870 = vcmp.eq.s32.totalorder %v1866, 1
  %v1871 = vsel %vm1867, %v1789, 0.0
  %v1872 = vsel %vm1868, %v1812, 0.0
  %v1873 = vsel %vm1869, %v1835, 0.0
  %v1874 = vsel %vm1870, %v1858, 0.0
  %v1875 = vsel %vm1867, %v1792, 0.0
  %v1876 = vsel %vm1868, %v1815, 0.0
  %v1877 = vsel %vm1869, %v1838, 0.0
  %v1878 = vsel %vm1870, %v1861, 0.0
  %v1879 = vadd.f32 %v1871, 0.0
  %v1880 = vadd.f32 %v1872, 0.0
  %v1881 = vadd.f32 %v1873, 0.0
  %v1882 = vadd.f32 %v1874, 0.0
  %v1883 = vadd.f32 %v1875, 0.0
  %v1884 = vadd.f32 %v1876, 0.0
  %v1885 = vadd.f32 %v1877, 0.0
  %v1886 = vadd.f32 %v1878, 0.0
  %vm1887 = vcmp.eq.s32.totalorder %v151, 1
  %vm1888 = vcmp.eq.s32.totalorder %v152, 1
  %vm1889 = vcmp.eq.s32.totalorder %v153, 1
  %vm1890 = vcmp.eq.s32.totalorder %v154, 1
  %vm1891 = vmand %vm147, %vm1887
  %vm1892 = vmand %vm148, %vm1888
  %vm1893 = vmand %vm149, %vm1889
  %vm1894 = vmand %vm150, %vm1890
  %s1895 = scalar_lea.vmem %s5, 16
  %v1896 = vld [vmem:[%s1895] sm:$0xff]
  %v1897 = vld [vmem:[%s1895 + $0x8] sm:$0xff]
  %v1899 = vsel %vm1764, %v1896, 0
  %v1902 = vsel %vm1764, %v1897, 0
  %1904 = vmatpush.msra.mxu0 0.0
  %1905 = vmatpush.msra.mxu0 0.0
  %1906 = vmatpush.msra.mxu0 0.0
  %1907 = vmatpush.msra.mxu0 0.0
  %1908 = vmatpush.msra.mxu0 0.0
  %1909 = vmatpush.msra.mxu0 0.0
  %1910 = vmatpush.msra.mxu0 0.0
  %1911 = vmatpush.msra.mxu0 0.0
  %1912 = vmatpush.msra.mxu0 0.0
  %1913 = vmatpush.msra.mxu0 0.0
  %1914 = vmatpush.msra.mxu0 0.0
  %1915 = vmatpush.msra.mxu0 0.0
  %1916 = vmatpush.msra.mxu0 0.0
  %1917 = vmatpush.msra.mxu0 0.0
  %1918 = vmatpush.msra.mxu0 %v1754
  %1919 = vmatpush.msra.mxu0 %v1750
  %1920 = vmatmul.f32.gmra.mxu0 %v1899
  %v1921 = vpop.f32.mrf.mxu0
  %v1922 = vadd.f32 0.0, %v1921
  %1923 = vmatmul.f32.gmra.mxu0 %v1902
  %v1924 = vpop.f32.mrf.mxu0
  %v1925 = vadd.f32 0.0, %v1924
  %1926 = vdwg.mxu0
  %1927 = vmatpush.msra.mxu0 0.0
  %1928 = vmatpush.msra.mxu0 0.0
  %1929 = vmatpush.msra.mxu0 0.0
  %1930 = vmatpush.msra.mxu0 0.0
  %1931 = vmatpush.msra.mxu0 0.0
  %1932 = vmatpush.msra.mxu0 0.0
  %1933 = vmatpush.msra.mxu0 0.0
  %1934 = vmatpush.msra.mxu0 0.0
  %1935 = vmatpush.msra.mxu0 0.0
  %1936 = vmatpush.msra.mxu0 0.0
  %1937 = vmatpush.msra.mxu0 0.0
  %1938 = vmatpush.msra.mxu0 0.0
  %1939 = vmatpush.msra.mxu0 0.0
  %1940 = vmatpush.msra.mxu0 0.0
  %1941 = vmatpush.msra.mxu0 %v1755
  %1942 = vmatpush.msra.mxu0 %v1751
  %1943 = vmatmul.f32.gmra.mxu0 %v1899
  %v1944 = vpop.f32.mrf.mxu0
  %v1945 = vadd.f32 0.0, %v1944
  %1946 = vmatmul.f32.gmra.mxu0 %v1902
  %v1947 = vpop.f32.mrf.mxu0
  %v1948 = vadd.f32 0.0, %v1947
  %1949 = vdwg.mxu0
  %1950 = vmatpush.msra.mxu0 0.0
  %1951 = vmatpush.msra.mxu0 0.0
  %1952 = vmatpush.msra.mxu0 0.0
  %1953 = vmatpush.msra.mxu0 0.0
  %1954 = vmatpush.msra.mxu0 0.0
  %1955 = vmatpush.msra.mxu0 0.0
  %1956 = vmatpush.msra.mxu0 0.0
  %1957 = vmatpush.msra.mxu0 0.0
  %1958 = vmatpush.msra.mxu0 0.0
  %1959 = vmatpush.msra.mxu0 0.0
  %1960 = vmatpush.msra.mxu0 0.0
  %1961 = vmatpush.msra.mxu0 0.0
  %1962 = vmatpush.msra.mxu0 0.0
  %1963 = vmatpush.msra.mxu0 0.0
  %1964 = vmatpush.msra.mxu0 %v1756
  %1965 = vmatpush.msra.mxu0 %v1752
  %1966 = vmatmul.f32.gmra.mxu0 %v1899
  %v1967 = vpop.f32.mrf.mxu0
  %v1968 = vadd.f32 0.0, %v1967
  %1969 = vmatmul.f32.gmra.mxu0 %v1902
  %v1970 = vpop.f32.mrf.mxu0
  %v1971 = vadd.f32 0.0, %v1970
  %1972 = vdwg.mxu0
  %1973 = vmatpush.msra.mxu0 0.0
  %1974 = vmatpush.msra.mxu0 0.0
  %1975 = vmatpush.msra.mxu0 0.0
  %1976 = vmatpush.msra.mxu0 0.0
  %1977 = vmatpush.msra.mxu0 0.0
  %1978 = vmatpush.msra.mxu0 0.0
  %1979 = vmatpush.msra.mxu0 0.0
  %1980 = vmatpush.msra.mxu0 0.0
  %1981 = vmatpush.msra.mxu0 0.0
  %1982 = vmatpush.msra.mxu0 0.0
  %1983 = vmatpush.msra.mxu0 0.0
  %1984 = vmatpush.msra.mxu0 0.0
  %1985 = vmatpush.msra.mxu0 0.0
  %1986 = vmatpush.msra.mxu0 0.0
  %1987 = vmatpush.msra.mxu0 %v1757
  %1988 = vmatpush.msra.mxu0 %v1753
  %1989 = vmatmul.f32.gmra.mxu0 %v1899
  %v1990 = vpop.f32.mrf.mxu0
  %v1991 = vadd.f32 0.0, %v1990
  %1992 = vmatmul.f32.gmra.mxu0 %v1902
  %v1993 = vpop.f32.mrf.mxu0
  %v1994 = vadd.f32 0.0, %v1993
  %1995 = vdwg.mxu0
  %v1996 = vsel %vm1891, 1, 0
  %v1997 = vsel %vm1892, 1, 0
  %v1998 = vsel %vm1893, 1, 0
  %v1999 = vsel %vm1894, 1, 0
  %vm2000 = vcmp.eq.s32.totalorder %v1996, 1
  %vm2001 = vcmp.eq.s32.totalorder %v1997, 1
  %vm2002 = vcmp.eq.s32.totalorder %v1998, 1
  %vm2003 = vcmp.eq.s32.totalorder %v1999, 1
  %v2004 = vsel %vm2000, %v1922, 0.0
  %v2005 = vsel %vm2001, %v1945, 0.0
  %v2006 = vsel %vm2002, %v1968, 0.0
  %v2007 = vsel %vm2003, %v1991, 0.0
  %v2008 = vsel %vm2000, %v1925, 0.0
  %v2009 = vsel %vm2001, %v1948, 0.0
  %v2010 = vsel %vm2002, %v1971, 0.0
  %v2011 = vsel %vm2003, %v1994, 0.0
  %v2012 = vadd.f32 %v1879, %v2004
  %v2013 = vadd.f32 %v1880, %v2005
  %v2014 = vadd.f32 %v1881, %v2006
  %v2015 = vadd.f32 %v1882, %v2007
  %v2016 = vadd.f32 %v1883, %v2008
  %v2017 = vadd.f32 %v1884, %v2009
  %v2018 = vadd.f32 %v1885, %v2010
  %v2019 = vadd.f32 %v1886, %v2011
  %vm2020 = vcmp.eq.s32.totalorder %v143, 1
  %vm2021 = vcmp.eq.s32.totalorder %v144, 1
  %vm2022 = vcmp.eq.s32.totalorder %v145, 1
  %vm2023 = vcmp.eq.s32.totalorder %v146, 1
  %vm2024 = vmand %vm2020, %vm155
  %vm2025 = vmand %vm2021, %vm156
  %vm2026 = vmand %vm2022, %vm157
  %vm2027 = vmand %vm2023, %vm158
  %s2028 = scalar_lea.vmem %s5, 32
  %v2029 = vld [vmem:[%s2028] sm:$0xff]
  %v2030 = vld [vmem:[%s2028 + $0x8] sm:$0xff]
  %v2032 = vsel %vm1764, %v2029, 0
  %v2035 = vsel %vm1764, %v2030, 0
  %2037 = vmatpush.msra.mxu0 0.0
  %2038 = vmatpush.msra.mxu0 0.0
  %2039 = vmatpush.msra.mxu0 0.0
  %2040 = vmatpush.msra.mxu0 0.0
  %2041 = vmatpush.msra.mxu0 0.0
  %2042 = vmatpush.msra.mxu0 0.0
  %2043 = vmatpush.msra.mxu0 0.0
  %2044 = vmatpush.msra.mxu0 0.0
  %2045 = vmatpush.msra.mxu0 0.0
  %2046 = vmatpush.msra.mxu0 0.0
  %2047 = vmatpush.msra.mxu0 0.0
  %2048 = vmatpush.msra.mxu0 0.0
  %2049 = vmatpush.msra.mxu0 0.0
  %2050 = vmatpush.msra.mxu0 0.0
  %2051 = vmatpush.msra.mxu0 %v1754
  %2052 = vmatpush.msra.mxu0 %v1750
  %2053 = vmatmul.f32.gmra.mxu0 %v2032
  %v2054 = vpop.f32.mrf.mxu0
  %v2055 = vadd.f32 0.0, %v2054
  %2056 = vmatmul.f32.gmra.mxu0 %v2035
  %v2057 = vpop.f32.mrf.mxu0
  %v2058 = vadd.f32 0.0, %v2057
  %2059 = vdwg.mxu0
  %2060 = vmatpush.msra.mxu0 0.0
  %2061 = vmatpush.msra.mxu0 0.0
  %2062 = vmatpush.msra.mxu0 0.0
  %2063 = vmatpush.msra.mxu0 0.0
  %2064 = vmatpush.msra.mxu0 0.0
  %2065 = vmatpush.msra.mxu0 0.0
  %2066 = vmatpush.msra.mxu0 0.0
  %2067 = vmatpush.msra.mxu0 0.0
  %2068 = vmatpush.msra.mxu0 0.0
  %2069 = vmatpush.msra.mxu0 0.0
  %2070 = vmatpush.msra.mxu0 0.0
  %2071 = vmatpush.msra.mxu0 0.0
  %2072 = vmatpush.msra.mxu0 0.0
  %2073 = vmatpush.msra.mxu0 0.0
  %2074 = vmatpush.msra.mxu0 %v1755
  %2075 = vmatpush.msra.mxu0 %v1751
  %2076 = vmatmul.f32.gmra.mxu0 %v2032
  %v2077 = vpop.f32.mrf.mxu0
  %v2078 = vadd.f32 0.0, %v2077
  %2079 = vmatmul.f32.gmra.mxu0 %v2035
  %v2080 = vpop.f32.mrf.mxu0
  %v2081 = vadd.f32 0.0, %v2080
  %2082 = vdwg.mxu0
  %2083 = vmatpush.msra.mxu0 0.0
  %2084 = vmatpush.msra.mxu0 0.0
  %2085 = vmatpush.msra.mxu0 0.0
  %2086 = vmatpush.msra.mxu0 0.0
  %2087 = vmatpush.msra.mxu0 0.0
  %2088 = vmatpush.msra.mxu0 0.0
  %2089 = vmatpush.msra.mxu0 0.0
  %2090 = vmatpush.msra.mxu0 0.0
  %2091 = vmatpush.msra.mxu0 0.0
  %2092 = vmatpush.msra.mxu0 0.0
  %2093 = vmatpush.msra.mxu0 0.0
  %2094 = vmatpush.msra.mxu0 0.0
  %2095 = vmatpush.msra.mxu0 0.0
  %2096 = vmatpush.msra.mxu0 0.0
  %2097 = vmatpush.msra.mxu0 %v1756
  %2098 = vmatpush.msra.mxu0 %v1752
  %2099 = vmatmul.f32.gmra.mxu0 %v2032
  %v2100 = vpop.f32.mrf.mxu0
  %v2101 = vadd.f32 0.0, %v2100
  %2102 = vmatmul.f32.gmra.mxu0 %v2035
  %v2103 = vpop.f32.mrf.mxu0
  %v2104 = vadd.f32 0.0, %v2103
  %2105 = vdwg.mxu0
  %2106 = vmatpush.msra.mxu0 0.0
  %2107 = vmatpush.msra.mxu0 0.0
  %2108 = vmatpush.msra.mxu0 0.0
  %2109 = vmatpush.msra.mxu0 0.0
  %2110 = vmatpush.msra.mxu0 0.0
  %2111 = vmatpush.msra.mxu0 0.0
  %2112 = vmatpush.msra.mxu0 0.0
  %2113 = vmatpush.msra.mxu0 0.0
  %2114 = vmatpush.msra.mxu0 0.0
  %2115 = vmatpush.msra.mxu0 0.0
  %2116 = vmatpush.msra.mxu0 0.0
  %2117 = vmatpush.msra.mxu0 0.0
  %2118 = vmatpush.msra.mxu0 0.0
  %2119 = vmatpush.msra.mxu0 0.0
  %2120 = vmatpush.msra.mxu0 %v1757
  %2121 = vmatpush.msra.mxu0 %v1753
  %2122 = vmatmul.f32.gmra.mxu0 %v2032
  %v2123 = vpop.f32.mrf.mxu0
  %v2124 = vadd.f32 0.0, %v2123
  %2125 = vmatmul.f32.gmra.mxu0 %v2035
  %v2126 = vpop.f32.mrf.mxu0
  %v2127 = vadd.f32 0.0, %v2126
  %2128 = vdwg.mxu0
  %v2129 = vsel %vm2024, 1, 0
  %v2130 = vsel %vm2025, 1, 0
  %v2131 = vsel %vm2026, 1, 0
  %v2132 = vsel %vm2027, 1, 0
  %vm2133 = vcmp.eq.s32.totalorder %v2129, 1
  %vm2134 = vcmp.eq.s32.totalorder %v2130, 1
  %vm2135 = vcmp.eq.s32.totalorder %v2131, 1
  %vm2136 = vcmp.eq.s32.totalorder %v2132, 1
  %v2137 = vsel %vm2133, %v2055, 0.0
  %v2138 = vsel %vm2134, %v2078, 0.0
  %v2139 = vsel %vm2135, %v2101, 0.0
  %v2140 = vsel %vm2136, %v2124, 0.0
  %v2141 = vsel %vm2133, %v2058, 0.0
  %v2142 = vsel %vm2134, %v2081, 0.0
  %v2143 = vsel %vm2135, %v2104, 0.0
  %v2144 = vsel %vm2136, %v2127, 0.0
  %v2145 = vadd.f32 %v2012, %v2137
  %v2146 = vadd.f32 %v2013, %v2138
  %v2147 = vadd.f32 %v2014, %v2139
  %v2148 = vadd.f32 %v2015, %v2140
  %v2149 = vadd.f32 %v2016, %v2141
  %v2150 = vadd.f32 %v2017, %v2142
  %v2151 = vadd.f32 %v2018, %v2143
  %v2152 = vadd.f32 %v2019, %v2144
  %vm2153 = vmand %vm2020, %vm1887
  %vm2154 = vmand %vm2021, %vm1888
  %vm2155 = vmand %vm2022, %vm1889
  %vm2156 = vmand %vm2023, %vm1890
  %s2157 = scalar_lea.vmem %s5, 48
  %v2158 = vld [vmem:[%s2157] sm:$0xff]
  %v2159 = vld [vmem:[%s2157 + $0x8] sm:$0xff]
  %v2161 = vsel %vm1764, %v2158, 0
  %v2164 = vsel %vm1764, %v2159, 0
  %2166 = vmatpush.msra.mxu0 0.0
  %2167 = vmatpush.msra.mxu0 0.0
  %2168 = vmatpush.msra.mxu0 0.0
  %2169 = vmatpush.msra.mxu0 0.0
  %2170 = vmatpush.msra.mxu0 0.0
  %2171 = vmatpush.msra.mxu0 0.0
  %2172 = vmatpush.msra.mxu0 0.0
  %2173 = vmatpush.msra.mxu0 0.0
  %2174 = vmatpush.msra.mxu0 0.0
  %2175 = vmatpush.msra.mxu0 0.0
  %2176 = vmatpush.msra.mxu0 0.0
  %2177 = vmatpush.msra.mxu0 0.0
  %2178 = vmatpush.msra.mxu0 0.0
  %2179 = vmatpush.msra.mxu0 0.0
  %2180 = vmatpush.msra.mxu0 %v1754
  %2181 = vmatpush.msra.mxu0 %v1750
  %2182 = vmatmul.f32.gmra.mxu0 %v2161
  %v2183 = vpop.f32.mrf.mxu0
  %v2184 = vadd.f32 0.0, %v2183
  %2185 = vmatmul.f32.gmra.mxu0 %v2164
  %v2186 = vpop.f32.mrf.mxu0
  %v2187 = vadd.f32 0.0, %v2186
  %2188 = vdwg.mxu0
  %2189 = vmatpush.msra.mxu0 0.0
  %2190 = vmatpush.msra.mxu0 0.0
  %2191 = vmatpush.msra.mxu0 0.0
  %2192 = vmatpush.msra.mxu0 0.0
  %2193 = vmatpush.msra.mxu0 0.0
  %2194 = vmatpush.msra.mxu0 0.0
  %2195 = vmatpush.msra.mxu0 0.0
  %2196 = vmatpush.msra.mxu0 0.0
  %2197 = vmatpush.msra.mxu0 0.0
  %2198 = vmatpush.msra.mxu0 0.0
  %2199 = vmatpush.msra.mxu0 0.0
  %2200 = vmatpush.msra.mxu0 0.0
  %2201 = vmatpush.msra.mxu0 0.0
  %2202 = vmatpush.msra.mxu0 0.0
  %2203 = vmatpush.msra.mxu0 %v1755
  %2204 = vmatpush.msra.mxu0 %v1751
  %2205 = vmatmul.f32.gmra.mxu0 %v2161
  %v2206 = vpop.f32.mrf.mxu0
  %v2207 = vadd.f32 0.0, %v2206
  %2208 = vmatmul.f32.gmra.mxu0 %v2164
  %v2209 = vpop.f32.mrf.mxu0
  %v2210 = vadd.f32 0.0, %v2209
  %2211 = vdwg.mxu0
  %2212 = vmatpush.msra.mxu0 0.0
  %2213 = vmatpush.msra.mxu0 0.0
  %2214 = vmatpush.msra.mxu0 0.0
  %2215 = vmatpush.msra.mxu0 0.0
  %2216 = vmatpush.msra.mxu0 0.0
  %2217 = vmatpush.msra.mxu0 0.0
  %2218 = vmatpush.msra.mxu0 0.0
  %2219 = vmatpush.msra.mxu0 0.0
  %2220 = vmatpush.msra.mxu0 0.0
  %2221 = vmatpush.msra.mxu0 0.0
  %2222 = vmatpush.msra.mxu0 0.0
  %2223 = vmatpush.msra.mxu0 0.0
  %2224 = vmatpush.msra.mxu0 0.0
  %2225 = vmatpush.msra.mxu0 0.0
  %2226 = vmatpush.msra.mxu0 %v1756
  %2227 = vmatpush.msra.mxu0 %v1752
  %2228 = vmatmul.f32.gmra.mxu0 %v2161
  %v2229 = vpop.f32.mrf.mxu0
  %v2230 = vadd.f32 0.0, %v2229
  %2231 = vmatmul.f32.gmra.mxu0 %v2164
  %v2232 = vpop.f32.mrf.mxu0
  %v2233 = vadd.f32 0.0, %v2232
  %2234 = vdwg.mxu0
  %2235 = vmatpush.msra.mxu0 0.0
  %2236 = vmatpush.msra.mxu0 0.0
  %2237 = vmatpush.msra.mxu0 0.0
  %2238 = vmatpush.msra.mxu0 0.0
  %2239 = vmatpush.msra.mxu0 0.0
  %2240 = vmatpush.msra.mxu0 0.0
  %2241 = vmatpush.msra.mxu0 0.0
  %2242 = vmatpush.msra.mxu0 0.0
  %2243 = vmatpush.msra.mxu0 0.0
  %2244 = vmatpush.msra.mxu0 0.0
  %2245 = vmatpush.msra.mxu0 0.0
  %2246 = vmatpush.msra.mxu0 0.0
  %2247 = vmatpush.msra.mxu0 0.0
  %2248 = vmatpush.msra.mxu0 0.0
  %2249 = vmatpush.msra.mxu0 %v1757
  %2250 = vmatpush.msra.mxu0 %v1753
  %2251 = vmatmul.f32.gmra.mxu0 %v2161
  %v2252 = vpop.f32.mrf.mxu0
  %v2253 = vadd.f32 0.0, %v2252
  %2254 = vmatmul.f32.gmra.mxu0 %v2164
  %v2255 = vpop.f32.mrf.mxu0
  %v2256 = vadd.f32 0.0, %v2255
  %2257 = vdwg.mxu0
  %v2258 = vsel %vm2153, 1, 0
  %v2259 = vsel %vm2154, 1, 0
  %v2260 = vsel %vm2155, 1, 0
  %v2261 = vsel %vm2156, 1, 0
  %vm2262 = vcmp.eq.s32.totalorder %v2258, 1
  %vm2263 = vcmp.eq.s32.totalorder %v2259, 1
  %vm2264 = vcmp.eq.s32.totalorder %v2260, 1
  %vm2265 = vcmp.eq.s32.totalorder %v2261, 1
  %v2266 = vsel %vm2262, %v2184, 0.0
  %v2267 = vsel %vm2263, %v2207, 0.0
  %v2268 = vsel %vm2264, %v2230, 0.0
  %v2269 = vsel %vm2265, %v2253, 0.0
  %v2270 = vsel %vm2262, %v2187, 0.0
  %v2271 = vsel %vm2263, %v2210, 0.0
  %v2272 = vsel %vm2264, %v2233, 0.0
  %v2273 = vsel %vm2265, %v2256, 0.0
  %v2274 = vadd.f32 %v2145, %v2266
  %v2275 = vadd.f32 %v2146, %v2267
  %v2276 = vadd.f32 %v2147, %v2268
  %v2277 = vadd.f32 %v2148, %v2269
  %v2278 = vadd.f32 %v2149, %v2270
  %v2279 = vadd.f32 %v2150, %v2271
  %v2280 = vadd.f32 %v2151, %v2272
  %v2281 = vadd.f32 %v2152, %v2273
  %v2282 = vld [vmem:[%s6] sm:$0xff]
  %v2283 = vld [vmem:[%s6 + $0x8] sm:$0xff]
  %2285 = vset.pattern.permute.xlu0 0
  %2286 = vperm.xlu0 %2285, %v2282
  %v2287 = vpop.permute.xlu0 %2286
  %2290 = vset.pattern.permute.xlu0 0
  %2291 = vperm.xlu0 %2290, %v2283
  %v2292 = vpop.permute.xlu0 %2291
  %v2294 = vadd.f32 %v2274, %v2287
  %v2295 = vadd.f32 %v2275, %v2287
  %v2296 = vadd.f32 %v2276, %v2287
  %v2297 = vadd.f32 %v2277, %v2287
  %v2298 = vadd.f32 %v2278, %v2292
  %v2299 = vadd.f32 %v2279, %v2292
  %v2300 = vadd.f32 %v2280, %v2292
  %v2301 = vadd.f32 %v2281, %v2292
  %v2302 = vadd.f32 %v2294, %v2295
  %v2303 = vadd.f32 %v2302, %v2296
  %v2304 = vadd.f32 %v2303, %v2297
  %2305 = vadd.xlane.f32.xlu0 %v2304
  %v2306 = vpop.xlane.xlu0 %2305
  %v2307 = vadd.f32 %v2298, %v2299
  %v2308 = vadd.f32 %v2307, %v2300
  %v2309 = vadd.f32 %v2308, %v2301
  %2310 = vadd.xlane.f32.xlu0 %v2309
  %v2311 = vpop.xlane.xlu0 %2310
  %v2312 = vmul.f32 %v2306, 0.001953125
  %v2313 = vmul.f32 %v2311, 0.001953125
  %v2314 = vsub.f32 %v2294, %v2312
  %v2315 = vsub.f32 %v2295, %v2312
  %v2316 = vsub.f32 %v2296, %v2312
  %v2317 = vsub.f32 %v2297, %v2312
  %v2318 = vsub.f32 %v2298, %v2313
  %v2319 = vsub.f32 %v2299, %v2313
  %v2320 = vsub.f32 %v2300, %v2313
  %v2321 = vsub.f32 %v2301, %v2313
  %v2322 = vmul.f32 %v2314, %v2314
  %v2323 = vmul.f32 %v2315, %v2315
  %v2324 = vmul.f32 %v2316, %v2316
  %v2325 = vmul.f32 %v2317, %v2317
  %v2326 = vmul.f32 %v2318, %v2318
  %v2327 = vmul.f32 %v2319, %v2319
  %v2328 = vmul.f32 %v2320, %v2320
  %v2329 = vmul.f32 %v2321, %v2321
  %v2330 = vadd.f32 %v2322, %v2323
  %v2331 = vadd.f32 %v2330, %v2324
  %v2332 = vadd.f32 %v2331, %v2325
  %2333 = vadd.xlane.f32.xlu0 %v2332
  %v2334 = vpop.xlane.xlu0 %2333
  %v2335 = vadd.f32 %v2326, %v2327
  %v2336 = vadd.f32 %v2335, %v2328
  %v2337 = vadd.f32 %v2336, %v2329
  %2338 = vadd.xlane.f32.xlu0 %v2337
  %v2339 = vpop.xlane.xlu0 %2338
  %v2340 = vmul.f32 %v2334, 0.001953125
  %v2341 = vmul.f32 %v2339, 0.001953125
  %v2342 = vmax.f32 %v2340, 0.0
  %v2343 = vmax.f32 %v2341, 0.0
  %v2344 = vld [vmem:[%s7] sm:$0xff]
  %v2345 = vld [vmem:[%s7 + $0x8] sm:$0xff]
  %v2346 = vadd.f32 %v2342, 1e-05
  %v2347 = vadd.f32 %v2343, 1e-05
  %v2348 = vrsqrt.pop %v2346
  %v2349 = vmul.f32 %v2348, %v2346
  %v2350 = vmul.f32 %v2349, %v2348
  %v2351 = vmul.f32 0.5, %v2350
  %v2352 = vsub.f32 1.5, %v2351
  %v2353 = vmul.f32 %v2348, %v2352
  %vm2354 = vweird.f32 %v2346
  %vm2355 = vweird.f32 %v2348
  %vm2356 = vmor %vm2354, %vm2355
  %v2357 = vsel %vm2356, %v2348, %v2353
  %v2358 = vrsqrt.pop %v2347
  %v2359 = vmul.f32 %v2358, %v2347
  %v2360 = vmul.f32 %v2359, %v2358
  %v2361 = vmul.f32 0.5, %v2360
  %v2362 = vsub.f32 1.5, %v2361
  %v2363 = vmul.f32 %v2358, %v2362
  %vm2364 = vweird.f32 %v2347
  %vm2365 = vweird.f32 %v2358
  %vm2366 = vmor %vm2364, %vm2365
  %v2367 = vsel %vm2366, %v2358, %v2363
  %v2368 = vmul.f32 %v2344, %v2357
  %v2369 = vmul.f32 %v2345, %v2367
  %v2370 = vld [vmem:[%s8] sm:$0xff]
  %v2371 = vld [vmem:[%s8 + $0x8] sm:$0xff]
  %v2372 = vmul.f32 %v2312, %v2368
  %v2373 = vmul.f32 %v2313, %v2369
  %v2374 = vsub.f32 %v2370, %v2372
  %v2375 = vsub.f32 %v2371, %v2373
  %2377 = vset.pattern.permute.xlu0 0
  %2378 = vperm.xlu0 %2377, %v2368
  %v2379 = vpop.permute.xlu0 %2378
  %2382 = vset.pattern.permute.xlu0 0
  %2383 = vperm.xlu0 %2382, %v2369
  %v2384 = vpop.permute.xlu0 %2383
  %v2386 = vmul.f32 %v2294, %v2379
  %v2387 = vmul.f32 %v2295, %v2379
  %v2388 = vmul.f32 %v2296, %v2379
  %v2389 = vmul.f32 %v2297, %v2379
  %v2390 = vmul.f32 %v2298, %v2384
  %v2391 = vmul.f32 %v2299, %v2384
  %v2392 = vmul.f32 %v2300, %v2384
  %v2393 = vmul.f32 %v2301, %v2384
  %2395 = vset.pattern.permute.xlu0 0
  %2396 = vperm.xlu0 %2395, %v2374
  %v2397 = vpop.permute.xlu0 %2396
  %2400 = vset.pattern.permute.xlu0 0
  %2401 = vperm.xlu0 %2400, %v2375
  %v2402 = vpop.permute.xlu0 %2401
  %v2404 = vadd.f32 %v2386, %v2397
  %v2405 = vadd.f32 %v2387, %v2397
  %v2406 = vadd.f32 %v2388, %v2397
  %v2407 = vadd.f32 %v2389, %v2397
  %v2408 = vadd.f32 %v2390, %v2402
  %v2409 = vadd.f32 %v2391, %v2402
  %v2410 = vadd.f32 %v2392, %v2402
  %v2411 = vadd.f32 %v2393, %v2402
  %v2412 = vmax.f32 %v2404, 0.0
  %v2413 = vmax.f32 %v2405, 0.0
  %v2414 = vmax.f32 %v2406, 0.0
  %v2415 = vmax.f32 %v2407, 0.0
  %v2416 = vmax.f32 %v2408, 0.0
  %v2417 = vmax.f32 %v2409, 0.0
  %v2418 = vmax.f32 %v2410, 0.0
  %v2419 = vmax.f32 %v2411, 0.0
  %v2420 = vld [vmem:[%s9] sm:$0x7]
  %2421 = vrot.lane.b32.xlu0 %v2412, 17
  %v2422 = vpop.permute.xlu0 %2421
  %2423 = vrot.lane.b32.xlu0 %v2416, 17
  %v2424 = vpop.permute.xlu0 %2423
  %2425 = vrot.lane.b32.xlu0 %v2413, 17
  %v2426 = vpop.permute.xlu0 %2425
  %2427 = vrot.lane.b32.xlu0 %v2417, 17
  %v2428 = vpop.permute.xlu0 %2427
  %2429 = vrot.lane.b32.xlu0 %v2414, 17
  %v2430 = vpop.permute.xlu0 %2429
  %2431 = vrot.lane.b32.xlu0 %v2418, 17
  %v2432 = vpop.permute.xlu0 %2431
  %2433 = vrot.lane.b32.xlu0 %v2415, 17
  %v2434 = vpop.permute.xlu0 %2433
  %2435 = vrot.lane.b32.xlu0 %v2419, 17
  %v2436 = vpop.permute.xlu0 %2435
  %v2437 = vsel %vm184, %v2430, %v2434
  %v2438 = vsel %vm184, %v2432, %v2436
  %v2439 = vsel %vm184, %v2426, %v2430
  %v2440 = vsel %vm184, %v2428, %v2432
  %v2441 = vsel %vm184, %v2422, %v2426
  %v2442 = vsel %vm184, %v2424, %v2428
  %v2443 = vsel %vm184, %v2434, %v2422
  %v2444 = vsel %vm184, %v2436, %v2424
  %v2445 = vsel %vm197, %v2443, 0.0
  %v2446 = vsel %vm198, %v2441, 0.0
  %v2447 = vsel %vm199, %v2439, 0.0
  %v2448 = vsel %vm200, %v2437, 0.0
  %v2449 = vsel %vm197, %v2444, 0.0
  %v2450 = vsel %vm198, %v2442, 0.0
  %v2451 = vsel %vm199, %v2440, 0.0
  %v2452 = vsel %vm200, %v2438, 0.0
  %s2453 = scalar_lea.vmem %s9, 4
  %v2454 = vld [vmem:[%s2453] sm:$0x7]
  %2455 = vrot.lane.b32.xlu0 %v2412, 16
  %v2456 = vpop.permute.xlu0 %2455
  %2457 = vrot.lane.b32.xlu0 %v2416, 16
  %v2458 = vpop.permute.xlu0 %2457
  %2459 = vrot.lane.b32.xlu0 %v2413, 16
  %v2460 = vpop.permute.xlu0 %2459
  %2461 = vrot.lane.b32.xlu0 %v2417, 16
  %v2462 = vpop.permute.xlu0 %2461
  %2463 = vrot.lane.b32.xlu0 %v2414, 16
  %v2464 = vpop.permute.xlu0 %2463
  %2465 = vrot.lane.b32.xlu0 %v2418, 16
  %v2466 = vpop.permute.xlu0 %2465
  %2467 = vrot.lane.b32.xlu0 %v2415, 16
  %v2468 = vpop.permute.xlu0 %2467
  %2469 = vrot.lane.b32.xlu0 %v2419, 16
  %v2470 = vpop.permute.xlu0 %2469
  %v2471 = vsel %vm216, %v2464, %v2468
  %v2472 = vsel %vm216, %v2466, %v2470
  %v2473 = vsel %vm216, %v2460, %v2464
  %v2474 = vsel %vm216, %v2462, %v2466
  %v2475 = vsel %vm216, %v2456, %v2460
  %v2476 = vsel %vm216, %v2458, %v2462
  %v2477 = vsel %vm216, %v2468, %v2456
  %v2478 = vsel %vm216, %v2470, %v2458
  %v2479 = vsel %vm229, %v2477, 0.0
  %v2480 = vsel %vm230, %v2475, 0.0
  %v2481 = vsel %vm231, %v2473, 0.0
  %v2482 = vsel %vm232, %v2471, 0.0
  %v2483 = vsel %vm229, %v2478, 0.0
  %v2484 = vsel %vm230, %v2476, 0.0
  %v2485 = vsel %vm231, %v2474, 0.0
  %v2486 = vsel %vm232, %v2472, 0.0
  %v2488 = vsel %vm1764, %v2454, 0
  %2490 = vmatpush.msra.mxu0 0.0
  %2491 = vmatpush.msra.mxu0 0.0
  %2492 = vmatpush.msra.mxu0 0.0
  %2493 = vmatpush.msra.mxu0 0.0
  %2494 = vmatpush.msra.mxu0 0.0
  %2495 = vmatpush.msra.mxu0 0.0
  %2496 = vmatpush.msra.mxu0 0.0
  %2497 = vmatpush.msra.mxu0 0.0
  %2498 = vmatpush.msra.mxu0 0.0
  %2499 = vmatpush.msra.mxu0 0.0
  %2500 = vmatpush.msra.mxu0 0.0
  %2501 = vmatpush.msra.mxu0 0.0
  %2502 = vmatpush.msra.mxu0 0.0
  %2503 = vmatpush.msra.mxu0 0.0
  %2504 = vmatpush.msra.mxu0 %v2483
  %2505 = vmatpush.msra.mxu0 %v2479
  %2506 = vmatmul.f32.gmra.mxu0 %v2488
  %v2507 = vpop.f32.mrf.mxu0
  %v2508 = vadd.f32 0.0, %v2507
  %2509 = vdwg.mxu0
  %2510 = vmatpush.msra.mxu0 0.0
  %2511 = vmatpush.msra.mxu0 0.0
  %2512 = vmatpush.msra.mxu0 0.0
  %2513 = vmatpush.msra.mxu0 0.0
  %2514 = vmatpush.msra.mxu0 0.0
  %2515 = vmatpush.msra.mxu0 0.0
  %2516 = vmatpush.msra.mxu0 0.0
  %2517 = vmatpush.msra.mxu0 0.0
  %2518 = vmatpush.msra.mxu0 0.0
  %2519 = vmatpush.msra.mxu0 0.0
  %2520 = vmatpush.msra.mxu0 0.0
  %2521 = vmatpush.msra.mxu0 0.0
  %2522 = vmatpush.msra.mxu0 0.0
  %2523 = vmatpush.msra.mxu0 0.0
  %2524 = vmatpush.msra.mxu0 %v2484
  %2525 = vmatpush.msra.mxu0 %v2480
  %2526 = vmatmul.f32.gmra.mxu0 %v2488
  %v2527 = vpop.f32.mrf.mxu0
  %v2528 = vadd.f32 0.0, %v2527
  %2529 = vdwg.mxu0
  %2530 = vmatpush.msra.mxu0 0.0
  %2531 = vmatpush.msra.mxu0 0.0
  %2532 = vmatpush.msra.mxu0 0.0
  %2533 = vmatpush.msra.mxu0 0.0
  %2534 = vmatpush.msra.mxu0 0.0
  %2535 = vmatpush.msra.mxu0 0.0
  %2536 = vmatpush.msra.mxu0 0.0
  %2537 = vmatpush.msra.mxu0 0.0
  %2538 = vmatpush.msra.mxu0 0.0
  %2539 = vmatpush.msra.mxu0 0.0
  %2540 = vmatpush.msra.mxu0 0.0
  %2541 = vmatpush.msra.mxu0 0.0
  %2542 = vmatpush.msra.mxu0 0.0
  %2543 = vmatpush.msra.mxu0 0.0
  %2544 = vmatpush.msra.mxu0 %v2485
  %2545 = vmatpush.msra.mxu0 %v2481
  %2546 = vmatmul.f32.gmra.mxu0 %v2488
  %v2547 = vpop.f32.mrf.mxu0
  %v2548 = vadd.f32 0.0, %v2547
  %2549 = vdwg.mxu0
  %2550 = vmatpush.msra.mxu0 0.0
  %2551 = vmatpush.msra.mxu0 0.0
  %2552 = vmatpush.msra.mxu0 0.0
  %2553 = vmatpush.msra.mxu0 0.0
  %2554 = vmatpush.msra.mxu0 0.0
  %2555 = vmatpush.msra.mxu0 0.0
  %2556 = vmatpush.msra.mxu0 0.0
  %2557 = vmatpush.msra.mxu0 0.0
  %2558 = vmatpush.msra.mxu0 0.0
  %2559 = vmatpush.msra.mxu0 0.0
  %2560 = vmatpush.msra.mxu0 0.0
  %2561 = vmatpush.msra.mxu0 0.0
  %2562 = vmatpush.msra.mxu0 0.0
  %2563 = vmatpush.msra.mxu0 0.0
  %2564 = vmatpush.msra.mxu0 %v2486
  %2565 = vmatpush.msra.mxu0 %v2482
  %2566 = vmatmul.f32.gmra.mxu0 %v2488
  %v2567 = vpop.f32.mrf.mxu0
  %v2568 = vadd.f32 0.0, %v2567
  %2569 = vdwg.mxu0
  %v2571 = vsel %vm1764, %v2420, 0
  %2573 = vmatpush.msra.mxu0 0.0
  %2574 = vmatpush.msra.mxu0 0.0
  %2575 = vmatpush.msra.mxu0 0.0
  %2576 = vmatpush.msra.mxu0 0.0
  %2577 = vmatpush.msra.mxu0 0.0
  %2578 = vmatpush.msra.mxu0 0.0
  %2579 = vmatpush.msra.mxu0 0.0
  %2580 = vmatpush.msra.mxu0 0.0
  %2581 = vmatpush.msra.mxu0 0.0
  %2582 = vmatpush.msra.mxu0 0.0
  %2583 = vmatpush.msra.mxu0 0.0
  %2584 = vmatpush.msra.mxu0 0.0
  %2585 = vmatpush.msra.mxu0 0.0
  %2586 = vmatpush.msra.mxu0 0.0
  %2587 = vmatpush.msra.mxu0 %v2449
  %2588 = vmatpush.msra.mxu0 %v2445
  %2589 = vmatmul.f32.gmra.mxu0 %v2571
  %v2590 = vpop.f32.mrf.mxu0
  %v2591 = vadd.f32 %v2508, %v2590
  %2592 = vdwg.mxu0
  %2593 = vmatpush.msra.mxu0 0.0
  %2594 = vmatpush.msra.mxu0 0.0
  %2595 = vmatpush.msra.mxu0 0.0
  %2596 = vmatpush.msra.mxu0 0.0
  %2597 = vmatpush.msra.mxu0 0.0
  %2598 = vmatpush.msra.mxu0 0.0
  %2599 = vmatpush.msra.mxu0 0.0
  %2600 = vmatpush.msra.mxu0 0.0
  %2601 = vmatpush.msra.mxu0 0.0
  %2602 = vmatpush.msra.mxu0 0.0
  %2603 = vmatpush.msra.mxu0 0.0
  %2604 = vmatpush.msra.mxu0 0.0
  %2605 = vmatpush.msra.mxu0 0.0
  %2606 = vmatpush.msra.mxu0 0.0
  %2607 = vmatpush.msra.mxu0 %v2450
  %2608 = vmatpush.msra.mxu0 %v2446
  %2609 = vmatmul.f32.gmra.mxu0 %v2571
  %v2610 = vpop.f32.mrf.mxu0
  %v2611 = vadd.f32 %v2528, %v2610
  %2612 = vdwg.mxu0
  %2613 = vmatpush.msra.mxu0 0.0
  %2614 = vmatpush.msra.mxu0 0.0
  %2615 = vmatpush.msra.mxu0 0.0
  %2616 = vmatpush.msra.mxu0 0.0
  %2617 = vmatpush.msra.mxu0 0.0
  %2618 = vmatpush.msra.mxu0 0.0
  %2619 = vmatpush.msra.mxu0 0.0
  %2620 = vmatpush.msra.mxu0 0.0
  %2621 = vmatpush.msra.mxu0 0.0
  %2622 = vmatpush.msra.mxu0 0.0
  %2623 = vmatpush.msra.mxu0 0.0
  %2624 = vmatpush.msra.mxu0 0.0
  %2625 = vmatpush.msra.mxu0 0.0
  %2626 = vmatpush.msra.mxu0 0.0
  %2627 = vmatpush.msra.mxu0 %v2451
  %2628 = vmatpush.msra.mxu0 %v2447
  %2629 = vmatmul.f32.gmra.mxu0 %v2571
  %v2630 = vpop.f32.mrf.mxu0
  %v2631 = vadd.f32 %v2548, %v2630
  %2632 = vdwg.mxu0
  %2633 = vmatpush.msra.mxu0 0.0
  %2634 = vmatpush.msra.mxu0 0.0
  %2635 = vmatpush.msra.mxu0 0.0
  %2636 = vmatpush.msra.mxu0 0.0
  %2637 = vmatpush.msra.mxu0 0.0
  %2638 = vmatpush.msra.mxu0 0.0
  %2639 = vmatpush.msra.mxu0 0.0
  %2640 = vmatpush.msra.mxu0 0.0
  %2641 = vmatpush.msra.mxu0 0.0
  %2642 = vmatpush.msra.mxu0 0.0
  %2643 = vmatpush.msra.mxu0 0.0
  %2644 = vmatpush.msra.mxu0 0.0
  %2645 = vmatpush.msra.mxu0 0.0
  %2646 = vmatpush.msra.mxu0 0.0
  %2647 = vmatpush.msra.mxu0 %v2452
  %2648 = vmatpush.msra.mxu0 %v2448
  %2649 = vmatmul.f32.gmra.mxu0 %v2571
  %v2650 = vpop.f32.mrf.mxu0
  %v2651 = vadd.f32 %v2568, %v2650
  %2652 = vdwg.mxu0
  %s2653 = scalar_lea.vmem %s9, 8
  %v2654 = vld [vmem:[%s2653] sm:$0x7]
  %2655 = vrot.lane.b32.xlu0 %v2412, 15
  %v2656 = vpop.permute.xlu0 %2655
  %2657 = vrot.lane.b32.xlu0 %v2416, 15
  %v2658 = vpop.permute.xlu0 %2657
  %2659 = vrot.lane.b32.xlu0 %v2413, 15
  %v2660 = vpop.permute.xlu0 %2659
  %2661 = vrot.lane.b32.xlu0 %v2417, 15
  %v2662 = vpop.permute.xlu0 %2661
  %2663 = vrot.lane.b32.xlu0 %v2414, 15
  %v2664 = vpop.permute.xlu0 %2663
  %2665 = vrot.lane.b32.xlu0 %v2418, 15
  %v2666 = vpop.permute.xlu0 %2665
  %2667 = vrot.lane.b32.xlu0 %v2415, 15
  %v2668 = vpop.permute.xlu0 %2667
  %2669 = vrot.lane.b32.xlu0 %v2419, 15
  %v2670 = vpop.permute.xlu0 %2669
  %v2671 = vsel %vm470, %v2664, %v2668
  %v2672 = vsel %vm470, %v2666, %v2670
  %v2673 = vsel %vm470, %v2660, %v2664
  %v2674 = vsel %vm470, %v2662, %v2666
  %v2675 = vsel %vm470, %v2656, %v2660
  %v2676 = vsel %vm470, %v2658, %v2662
  %v2677 = vsel %vm470, %v2668, %v2656
  %v2678 = vsel %vm470, %v2670, %v2658
  %v2679 = vsel %vm483, %v2677, 0.0
  %v2680 = vsel %vm484, %v2675, 0.0
  %v2681 = vsel %vm485, %v2673, 0.0
  %v2682 = vsel %vm486, %v2671, 0.0
  %v2683 = vsel %vm483, %v2678, 0.0
  %v2684 = vsel %vm484, %v2676, 0.0
  %v2685 = vsel %vm485, %v2674, 0.0
  %v2686 = vsel %vm486, %v2672, 0.0
  %v2688 = vsel %vm1764, %v2654, 0
  %2690 = vmatpush.msra.mxu0 0.0
  %2691 = vmatpush.msra.mxu0 0.0
  %2692 = vmatpush.msra.mxu0 0.0
  %2693 = vmatpush.msra.mxu0 0.0
  %2694 = vmatpush.msra.mxu0 0.0
  %2695 = vmatpush.msra.mxu0 0.0
  %2696 = vmatpush.msra.mxu0 0.0
  %2697 = vmatpush.msra.mxu0 0.0
  %2698 = vmatpush.msra.mxu0 0.0
  %2699 = vmatpush.msra.mxu0 0.0
  %2700 = vmatpush.msra.mxu0 0.0
  %2701 = vmatpush.msra.mxu0 0.0
  %2702 = vmatpush.msra.mxu0 0.0
  %2703 = vmatpush.msra.mxu0 0.0
  %2704 = vmatpush.msra.mxu0 %v2683
  %2705 = vmatpush.msra.mxu0 %v2679
  %2706 = vmatmul.f32.gmra.mxu0 %v2688
  %v2707 = vpop.f32.mrf.mxu0
  %v2708 = vadd.f32 0.0, %v2707
  %2709 = vdwg.mxu0
  %2710 = vmatpush.msra.mxu0 0.0
  %2711 = vmatpush.msra.mxu0 0.0
  %2712 = vmatpush.msra.mxu0 0.0
  %2713 = vmatpush.msra.mxu0 0.0
  %2714 = vmatpush.msra.mxu0 0.0
  %2715 = vmatpush.msra.mxu0 0.0
  %2716 = vmatpush.msra.mxu0 0.0
  %2717 = vmatpush.msra.mxu0 0.0
  %2718 = vmatpush.msra.mxu0 0.0
  %2719 = vmatpush.msra.mxu0 0.0
  %2720 = vmatpush.msra.mxu0 0.0
  %2721 = vmatpush.msra.mxu0 0.0
  %2722 = vmatpush.msra.mxu0 0.0
  %2723 = vmatpush.msra.mxu0 0.0
  %2724 = vmatpush.msra.mxu0 %v2684
  %2725 = vmatpush.msra.mxu0 %v2680
  %2726 = vmatmul.f32.gmra.mxu0 %v2688
  %v2727 = vpop.f32.mrf.mxu0
  %v2728 = vadd.f32 0.0, %v2727
  %2729 = vdwg.mxu0
  %2730 = vmatpush.msra.mxu0 0.0
  %2731 = vmatpush.msra.mxu0 0.0
  %2732 = vmatpush.msra.mxu0 0.0
  %2733 = vmatpush.msra.mxu0 0.0
  %2734 = vmatpush.msra.mxu0 0.0
  %2735 = vmatpush.msra.mxu0 0.0
  %2736 = vmatpush.msra.mxu0 0.0
  %2737 = vmatpush.msra.mxu0 0.0
  %2738 = vmatpush.msra.mxu0 0.0
  %2739 = vmatpush.msra.mxu0 0.0
  %2740 = vmatpush.msra.mxu0 0.0
  %2741 = vmatpush.msra.mxu0 0.0
  %2742 = vmatpush.msra.mxu0 0.0
  %2743 = vmatpush.msra.mxu0 0.0
  %2744 = vmatpush.msra.mxu0 %v2685
  %2745 = vmatpush.msra.mxu0 %v2681
  %2746 = vmatmul.f32.gmra.mxu0 %v2688
  %v2747 = vpop.f32.mrf.mxu0
  %v2748 = vadd.f32 0.0, %v2747
  %2749 = vdwg.mxu0
  %2750 = vmatpush.msra.mxu0 0.0
  %2751 = vmatpush.msra.mxu0 0.0
  %2752 = vmatpush.msra.mxu0 0.0
  %2753 = vmatpush.msra.mxu0 0.0
  %2754 = vmatpush.msra.mxu0 0.0
  %2755 = vmatpush.msra.mxu0 0.0
  %2756 = vmatpush.msra.mxu0 0.0
  %2757 = vmatpush.msra.mxu0 0.0
  %2758 = vmatpush.msra.mxu0 0.0
  %2759 = vmatpush.msra.mxu0 0.0
  %2760 = vmatpush.msra.mxu0 0.0
  %2761 = vmatpush.msra.mxu0 0.0
  %2762 = vmatpush.msra.mxu0 0.0
  %2763 = vmatpush.msra.mxu0 0.0
  %2764 = vmatpush.msra.mxu0 %v2686
  %2765 = vmatpush.msra.mxu0 %v2682
  %2766 = vmatmul.f32.gmra.mxu0 %v2688
  %v2767 = vpop.f32.mrf.mxu0
  %v2768 = vadd.f32 0.0, %v2767
  %2769 = vdwg.mxu0
  %v2770 = vadd.f32 %v2591, %v2708
  %v2771 = vadd.f32 %v2611, %v2728
  %v2772 = vadd.f32 %v2631, %v2748
  %v2773 = vadd.f32 %v2651, %v2768
  %s2774 = scalar_lea.vmem %s9, 12
  %v2775 = vld [vmem:[%s2774] sm:$0x7]
  %2776 = vrot.lane.b32.xlu0 %v2412, 1
  %v2777 = vpop.permute.xlu0 %2776
  %2778 = vrot.lane.b32.xlu0 %v2416, 1
  %v2779 = vpop.permute.xlu0 %2778
  %2780 = vrot.lane.b32.xlu0 %v2413, 1
  %v2781 = vpop.permute.xlu0 %2780
  %2782 = vrot.lane.b32.xlu0 %v2417, 1
  %v2783 = vpop.permute.xlu0 %2782
  %2784 = vrot.lane.b32.xlu0 %v2414, 1
  %v2785 = vpop.permute.xlu0 %2784
  %2786 = vrot.lane.b32.xlu0 %v2418, 1
  %v2787 = vpop.permute.xlu0 %2786
  %2788 = vrot.lane.b32.xlu0 %v2415, 1
  %v2789 = vpop.permute.xlu0 %2788
  %2790 = vrot.lane.b32.xlu0 %v2419, 1
  %v2791 = vpop.permute.xlu0 %2790
  %v2792 = vsel %vm620, %v2785, %v2789
  %v2793 = vsel %vm620, %v2787, %v2791
  %v2794 = vsel %vm620, %v2781, %v2785
  %v2795 = vsel %vm620, %v2783, %v2787
  %v2796 = vsel %vm620, %v2777, %v2781
  %v2797 = vsel %vm620, %v2779, %v2783
  %v2798 = vsel %vm620, %v2789, %v2777
  %v2799 = vsel %vm620, %v2791, %v2779
  %v2800 = vsel %vm633, %v2798, 0.0
  %v2801 = vsel %vm634, %v2796, 0.0
  %v2802 = vsel %vm635, %v2794, 0.0
  %v2803 = vsel %vm636, %v2792, 0.0
  %v2804 = vsel %vm633, %v2799, 0.0
  %v2805 = vsel %vm634, %v2797, 0.0
  %v2806 = vsel %vm635, %v2795, 0.0
  %v2807 = vsel %vm636, %v2793, 0.0
  %v2809 = vsel %vm1764, %v2775, 0
  %2811 = vmatpush.msra.mxu0 0.0
  %2812 = vmatpush.msra.mxu0 0.0
  %2813 = vmatpush.msra.mxu0 0.0
  %2814 = vmatpush.msra.mxu0 0.0
  %2815 = vmatpush.msra.mxu0 0.0
  %2816 = vmatpush.msra.mxu0 0.0
  %2817 = vmatpush.msra.mxu0 0.0
  %2818 = vmatpush.msra.mxu0 0.0
  %2819 = vmatpush.msra.mxu0 0.0
  %2820 = vmatpush.msra.mxu0 0.0
  %2821 = vmatpush.msra.mxu0 0.0
  %2822 = vmatpush.msra.mxu0 0.0
  %2823 = vmatpush.msra.mxu0 0.0
  %2824 = vmatpush.msra.mxu0 0.0
  %2825 = vmatpush.msra.mxu0 %v2804
  %2826 = vmatpush.msra.mxu0 %v2800
  %2827 = vmatmul.f32.gmra.mxu0 %v2809
  %v2828 = vpop.f32.mrf.mxu0
  %v2829 = vadd.f32 0.0, %v2828
  %2830 = vdwg.mxu0
  %2831 = vmatpush.msra.mxu0 0.0
  %2832 = vmatpush.msra.mxu0 0.0
  %2833 = vmatpush.msra.mxu0 0.0
  %2834 = vmatpush.msra.mxu0 0.0
  %2835 = vmatpush.msra.mxu0 0.0
  %2836 = vmatpush.msra.mxu0 0.0
  %2837 = vmatpush.msra.mxu0 0.0
  %2838 = vmatpush.msra.mxu0 0.0
  %2839 = vmatpush.msra.mxu0 0.0
  %2840 = vmatpush.msra.mxu0 0.0
  %2841 = vmatpush.msra.mxu0 0.0
  %2842 = vmatpush.msra.mxu0 0.0
  %2843 = vmatpush.msra.mxu0 0.0
  %2844 = vmatpush.msra.mxu0 0.0
  %2845 = vmatpush.msra.mxu0 %v2805
  %2846 = vmatpush.msra.mxu0 %v2801
  %2847 = vmatmul.f32.gmra.mxu0 %v2809
  %v2848 = vpop.f32.mrf.mxu0
  %v2849 = vadd.f32 0.0, %v2848
  %2850 = vdwg.mxu0
  %2851 = vmatpush.msra.mxu0 0.0
  %2852 = vmatpush.msra.mxu0 0.0
  %2853 = vmatpush.msra.mxu0 0.0
  %2854 = vmatpush.msra.mxu0 0.0
  %2855 = vmatpush.msra.mxu0 0.0
  %2856 = vmatpush.msra.mxu0 0.0
  %2857 = vmatpush.msra.mxu0 0.0
  %2858 = vmatpush.msra.mxu0 0.0
  %2859 = vmatpush.msra.mxu0 0.0
  %2860 = vmatpush.msra.mxu0 0.0
  %2861 = vmatpush.msra.mxu0 0.0
  %2862 = vmatpush.msra.mxu0 0.0
  %2863 = vmatpush.msra.mxu0 0.0
  %2864 = vmatpush.msra.mxu0 0.0
  %2865 = vmatpush.msra.mxu0 %v2806
  %2866 = vmatpush.msra.mxu0 %v2802
  %2867 = vmatmul.f32.gmra.mxu0 %v2809
  %v2868 = vpop.f32.mrf.mxu0
  %v2869 = vadd.f32 0.0, %v2868
  %2870 = vdwg.mxu0
  %2871 = vmatpush.msra.mxu0 0.0
  %2872 = vmatpush.msra.mxu0 0.0
  %2873 = vmatpush.msra.mxu0 0.0
  %2874 = vmatpush.msra.mxu0 0.0
  %2875 = vmatpush.msra.mxu0 0.0
  %2876 = vmatpush.msra.mxu0 0.0
  %2877 = vmatpush.msra.mxu0 0.0
  %2878 = vmatpush.msra.mxu0 0.0
  %2879 = vmatpush.msra.mxu0 0.0
  %2880 = vmatpush.msra.mxu0 0.0
  %2881 = vmatpush.msra.mxu0 0.0
  %2882 = vmatpush.msra.mxu0 0.0
  %2883 = vmatpush.msra.mxu0 0.0
  %2884 = vmatpush.msra.mxu0 0.0
  %2885 = vmatpush.msra.mxu0 %v2807
  %2886 = vmatpush.msra.mxu0 %v2803
  %2887 = vmatmul.f32.gmra.mxu0 %v2809
  %v2888 = vpop.f32.mrf.mxu0
  %v2889 = vadd.f32 0.0, %v2888
  %2890 = vdwg.mxu0
  %v2891 = vadd.f32 %v2770, %v2829
  %v2892 = vadd.f32 %v2771, %v2849
  %v2893 = vadd.f32 %v2772, %v2869
  %v2894 = vadd.f32 %v2773, %v2889
  %s2895 = scalar_lea.vmem %s9, 16
  %v2896 = vld [vmem:[%s2895] sm:$0x7]
  %v2898 = vsel %vm1764, %v2896, 0
  %2900 = vmatpush.msra.mxu0 0.0
  %2901 = vmatpush.msra.mxu0 0.0
  %2902 = vmatpush.msra.mxu0 0.0
  %2903 = vmatpush.msra.mxu0 0.0
  %2904 = vmatpush.msra.mxu0 0.0
  %2905 = vmatpush.msra.mxu0 0.0
  %2906 = vmatpush.msra.mxu0 0.0
  %2907 = vmatpush.msra.mxu0 0.0
  %2908 = vmatpush.msra.mxu0 0.0
  %2909 = vmatpush.msra.mxu0 0.0
  %2910 = vmatpush.msra.mxu0 0.0
  %2911 = vmatpush.msra.mxu0 0.0
  %2912 = vmatpush.msra.mxu0 0.0
  %2913 = vmatpush.msra.mxu0 0.0
  %2914 = vmatpush.msra.mxu0 %v2416
  %2915 = vmatpush.msra.mxu0 %v2412
  %2916 = vmatmul.f32.gmra.mxu0 %v2898
  %v2917 = vpop.f32.mrf.mxu0
  %v2918 = vadd.f32 0.0, %v2917
  %2919 = vdwg.mxu0
  %2920 = vmatpush.msra.mxu0 0.0
  %2921 = vmatpush.msra.mxu0 0.0
  %2922 = vmatpush.msra.mxu0 0.0
  %2923 = vmatpush.msra.mxu0 0.0
  %2924 = vmatpush.msra.mxu0 0.0
  %2925 = vmatpush.msra.mxu0 0.0
  %2926 = vmatpush.msra.mxu0 0.0
  %2927 = vmatpush.msra.mxu0 0.0
  %2928 = vmatpush.msra.mxu0 0.0
  %2929 = vmatpush.msra.mxu0 0.0
  %2930 = vmatpush.msra.mxu0 0.0
  %2931 = vmatpush.msra.mxu0 0.0
  %2932 = vmatpush.msra.mxu0 0.0
  %2933 = vmatpush.msra.mxu0 0.0
  %2934 = vmatpush.msra.mxu0 %v2417
  %2935 = vmatpush.msra.mxu0 %v2413
  %2936 = vmatmul.f32.gmra.mxu0 %v2898
  %v2937 = vpop.f32.mrf.mxu0
  %v2938 = vadd.f32 0.0, %v2937
  %2939 = vdwg.mxu0
  %2940 = vmatpush.msra.mxu0 0.0
  %2941 = vmatpush.msra.mxu0 0.0
  %2942 = vmatpush.msra.mxu0 0.0
  %2943 = vmatpush.msra.mxu0 0.0
  %2944 = vmatpush.msra.mxu0 0.0
  %2945 = vmatpush.msra.mxu0 0.0
  %2946 = vmatpush.msra.mxu0 0.0
  %2947 = vmatpush.msra.mxu0 0.0
  %2948 = vmatpush.msra.mxu0 0.0
  %2949 = vmatpush.msra.mxu0 0.0
  %2950 = vmatpush.msra.mxu0 0.0
  %2951 = vmatpush.msra.mxu0 0.0
  %2952 = vmatpush.msra.mxu0 0.0
  %2953 = vmatpush.msra.mxu0 0.0
  %2954 = vmatpush.msra.mxu0 %v2418
  %2955 = vmatpush.msra.mxu0 %v2414
  %2956 = vmatmul.f32.gmra.mxu0 %v2898
  %v2957 = vpop.f32.mrf.mxu0
  %v2958 = vadd.f32 0.0, %v2957
  %2959 = vdwg.mxu0
  %2960 = vmatpush.msra.mxu0 0.0
  %2961 = vmatpush.msra.mxu0 0.0
  %2962 = vmatpush.msra.mxu0 0.0
  %2963 = vmatpush.msra.mxu0 0.0
  %2964 = vmatpush.msra.mxu0 0.0
  %2965 = vmatpush.msra.mxu0 0.0
  %2966 = vmatpush.msra.mxu0 0.0
  %2967 = vmatpush.msra.mxu0 0.0
  %2968 = vmatpush.msra.mxu0 0.0
  %2969 = vmatpush.msra.mxu0 0.0
  %2970 = vmatpush.msra.mxu0 0.0
  %2971 = vmatpush.msra.mxu0 0.0
  %2972 = vmatpush.msra.mxu0 0.0
  %2973 = vmatpush.msra.mxu0 0.0
  %2974 = vmatpush.msra.mxu0 %v2419
  %2975 = vmatpush.msra.mxu0 %v2415
  %2976 = vmatmul.f32.gmra.mxu0 %v2898
  %v2977 = vpop.f32.mrf.mxu0
  %v2978 = vadd.f32 0.0, %v2977
  %2979 = vdwg.mxu0
  %v2980 = vadd.f32 %v2891, %v2918
  %v2981 = vadd.f32 %v2892, %v2938
  %v2982 = vadd.f32 %v2893, %v2958
  %v2983 = vadd.f32 %v2894, %v2978
  %s2984 = scalar_lea.vmem %s9, 20
  %v2985 = vld [vmem:[%s2984] sm:$0x7]
  %2986 = vrot.lane.b32.xlu0 %v2412, 127
  %v2987 = vpop.permute.xlu0 %2986
  %2988 = vrot.lane.b32.xlu0 %v2416, 127
  %v2989 = vpop.permute.xlu0 %2988
  %2990 = vrot.lane.b32.xlu0 %v2413, 127
  %v2991 = vpop.permute.xlu0 %2990
  %2992 = vrot.lane.b32.xlu0 %v2417, 127
  %v2993 = vpop.permute.xlu0 %2992
  %2994 = vrot.lane.b32.xlu0 %v2414, 127
  %v2995 = vpop.permute.xlu0 %2994
  %2996 = vrot.lane.b32.xlu0 %v2418, 127
  %v2997 = vpop.permute.xlu0 %2996
  %2998 = vrot.lane.b32.xlu0 %v2415, 127
  %v2999 = vpop.permute.xlu0 %2998
  %3000 = vrot.lane.b32.xlu0 %v2419, 127
  %v3001 = vpop.permute.xlu0 %3000
  %v3002 = vsel %vm887, %v2995, %v2999
  %v3003 = vsel %vm887, %v2997, %v3001
  %v3004 = vsel %vm887, %v2991, %v2995
  %v3005 = vsel %vm887, %v2993, %v2997
  %v3006 = vsel %vm887, %v2987, %v2991
  %v3007 = vsel %vm887, %v2989, %v2993
  %v3008 = vsel %vm887, %v2999, %v2987
  %v3009 = vsel %vm887, %v3001, %v2989
  %v3010 = vsel %vm900, %v3006, 0.0
  %v3011 = vsel %vm901, %v3004, 0.0
  %v3012 = vsel %vm902, %v3002, 0.0
  %v3013 = vsel %vm903, %v3008, 0.0
  %v3014 = vsel %vm900, %v3007, 0.0
  %v3015 = vsel %vm901, %v3005, 0.0
  %v3016 = vsel %vm902, %v3003, 0.0
  %v3017 = vsel %vm903, %v3009, 0.0
  %v3019 = vsel %vm1764, %v2985, 0
  %3021 = vmatpush.msra.mxu0 0.0
  %3022 = vmatpush.msra.mxu0 0.0
  %3023 = vmatpush.msra.mxu0 0.0
  %3024 = vmatpush.msra.mxu0 0.0
  %3025 = vmatpush.msra.mxu0 0.0
  %3026 = vmatpush.msra.mxu0 0.0
  %3027 = vmatpush.msra.mxu0 0.0
  %3028 = vmatpush.msra.mxu0 0.0
  %3029 = vmatpush.msra.mxu0 0.0
  %3030 = vmatpush.msra.mxu0 0.0
  %3031 = vmatpush.msra.mxu0 0.0
  %3032 = vmatpush.msra.mxu0 0.0
  %3033 = vmatpush.msra.mxu0 0.0
  %3034 = vmatpush.msra.mxu0 0.0
  %3035 = vmatpush.msra.mxu0 %v3014
  %3036 = vmatpush.msra.mxu0 %v3010
  %3037 = vmatmul.f32.gmra.mxu0 %v3019
  %v3038 = vpop.f32.mrf.mxu0
  %v3039 = vadd.f32 0.0, %v3038
  %3040 = vdwg.mxu0
  %3041 = vmatpush.msra.mxu0 0.0
  %3042 = vmatpush.msra.mxu0 0.0
  %3043 = vmatpush.msra.mxu0 0.0
  %3044 = vmatpush.msra.mxu0 0.0
  %3045 = vmatpush.msra.mxu0 0.0
  %3046 = vmatpush.msra.mxu0 0.0
  %3047 = vmatpush.msra.mxu0 0.0
  %3048 = vmatpush.msra.mxu0 0.0
  %3049 = vmatpush.msra.mxu0 0.0
  %3050 = vmatpush.msra.mxu0 0.0
  %3051 = vmatpush.msra.mxu0 0.0
  %3052 = vmatpush.msra.mxu0 0.0
  %3053 = vmatpush.msra.mxu0 0.0
  %3054 = vmatpush.msra.mxu0 0.0
  %3055 = vmatpush.msra.mxu0 %v3015
  %3056 = vmatpush.msra.mxu0 %v3011
  %3057 = vmatmul.f32.gmra.mxu0 %v3019
  %v3058 = vpop.f32.mrf.mxu0
  %v3059 = vadd.f32 0.0, %v3058
  %3060 = vdwg.mxu0
  %3061 = vmatpush.msra.mxu0 0.0
  %3062 = vmatpush.msra.mxu0 0.0
  %3063 = vmatpush.msra.mxu0 0.0
  %3064 = vmatpush.msra.mxu0 0.0
  %3065 = vmatpush.msra.mxu0 0.0
  %3066 = vmatpush.msra.mxu0 0.0
  %3067 = vmatpush.msra.mxu0 0.0
  %3068 = vmatpush.msra.mxu0 0.0
  %3069 = vmatpush.msra.mxu0 0.0
  %3070 = vmatpush.msra.mxu0 0.0
  %3071 = vmatpush.msra.mxu0 0.0
  %3072 = vmatpush.msra.mxu0 0.0
  %3073 = vmatpush.msra.mxu0 0.0
  %3074 = vmatpush.msra.mxu0 0.0
  %3075 = vmatpush.msra.mxu0 %v3016
  %3076 = vmatpush.msra.mxu0 %v3012
  %3077 = vmatmul.f32.gmra.mxu0 %v3019
  %v3078 = vpop.f32.mrf.mxu0
  %v3079 = vadd.f32 0.0, %v3078
  %3080 = vdwg.mxu0
  %3081 = vmatpush.msra.mxu0 0.0
  %3082 = vmatpush.msra.mxu0 0.0
  %3083 = vmatpush.msra.mxu0 0.0
  %3084 = vmatpush.msra.mxu0 0.0
  %3085 = vmatpush.msra.mxu0 0.0
  %3086 = vmatpush.msra.mxu0 0.0
  %3087 = vmatpush.msra.mxu0 0.0
  %3088 = vmatpush.msra.mxu0 0.0
  %3089 = vmatpush.msra.mxu0 0.0
  %3090 = vmatpush.msra.mxu0 0.0
  %3091 = vmatpush.msra.mxu0 0.0
  %3092 = vmatpush.msra.mxu0 0.0
  %3093 = vmatpush.msra.mxu0 0.0
  %3094 = vmatpush.msra.mxu0 0.0
  %3095 = vmatpush.msra.mxu0 %v3017
  %3096 = vmatpush.msra.mxu0 %v3013
  %3097 = vmatmul.f32.gmra.mxu0 %v3019
  %v3098 = vpop.f32.mrf.mxu0
  %v3099 = vadd.f32 0.0, %v3098
  %3100 = vdwg.mxu0
  %v3101 = vadd.f32 %v2980, %v3039
  %v3102 = vadd.f32 %v2981, %v3059
  %v3103 = vadd.f32 %v2982, %v3079
  %v3104 = vadd.f32 %v2983, %v3099
  %s3105 = scalar_lea.vmem %s9, 24
  %v3106 = vld [vmem:[%s3105] sm:$0x7]
  %3107 = vrot.lane.b32.xlu0 %v2412, 113
  %v3108 = vpop.permute.xlu0 %3107
  %3109 = vrot.lane.b32.xlu0 %v2416, 113
  %v3110 = vpop.permute.xlu0 %3109
  %3111 = vrot.lane.b32.xlu0 %v2413, 113
  %v3112 = vpop.permute.xlu0 %3111
  %3113 = vrot.lane.b32.xlu0 %v2417, 113
  %v3114 = vpop.permute.xlu0 %3113
  %3115 = vrot.lane.b32.xlu0 %v2414, 113
  %v3116 = vpop.permute.xlu0 %3115
  %3117 = vrot.lane.b32.xlu0 %v2418, 113
  %v3118 = vpop.permute.xlu0 %3117
  %3119 = vrot.lane.b32.xlu0 %v2415, 113
  %v3120 = vpop.permute.xlu0 %3119
  %3121 = vrot.lane.b32.xlu0 %v2419, 113
  %v3122 = vpop.permute.xlu0 %3121
  %v3123 = vsel %vm1037, %v3116, %v3120
  %v3124 = vsel %vm1037, %v3118, %v3122
  %v3125 = vsel %vm1037, %v3112, %v3116
  %v3126 = vsel %vm1037, %v3114, %v3118
  %v3127 = vsel %vm1037, %v3108, %v3112
  %v3128 = vsel %vm1037, %v3110, %v3114
  %v3129 = vsel %vm1037, %v3120, %v3108
  %v3130 = vsel %vm1037, %v3122, %v3110
  %v3131 = vsel %vm1050, %v3127, 0.0
  %v3132 = vsel %vm1051, %v3125, 0.0
  %v3133 = vsel %vm1052, %v3123, 0.0
  %v3134 = vsel %vm1053, %v3129, 0.0
  %v3135 = vsel %vm1050, %v3128, 0.0
  %v3136 = vsel %vm1051, %v3126, 0.0
  %v3137 = vsel %vm1052, %v3124, 0.0
  %v3138 = vsel %vm1053, %v3130, 0.0
  %v3140 = vsel %vm1764, %v3106, 0
  %3142 = vmatpush.msra.mxu0 0.0
  %3143 = vmatpush.msra.mxu0 0.0
  %3144 = vmatpush.msra.mxu0 0.0
  %3145 = vmatpush.msra.mxu0 0.0
  %3146 = vmatpush.msra.mxu0 0.0
  %3147 = vmatpush.msra.mxu0 0.0
  %3148 = vmatpush.msra.mxu0 0.0
  %3149 = vmatpush.msra.mxu0 0.0
  %3150 = vmatpush.msra.mxu0 0.0
  %3151 = vmatpush.msra.mxu0 0.0
  %3152 = vmatpush.msra.mxu0 0.0
  %3153 = vmatpush.msra.mxu0 0.0
  %3154 = vmatpush.msra.mxu0 0.0
  %3155 = vmatpush.msra.mxu0 0.0
  %3156 = vmatpush.msra.mxu0 %v3135
  %3157 = vmatpush.msra.mxu0 %v3131
  %3158 = vmatmul.f32.gmra.mxu0 %v3140
  %v3159 = vpop.f32.mrf.mxu0
  %v3160 = vadd.f32 0.0, %v3159
  %3161 = vdwg.mxu0
  %3162 = vmatpush.msra.mxu0 0.0
  %3163 = vmatpush.msra.mxu0 0.0
  %3164 = vmatpush.msra.mxu0 0.0
  %3165 = vmatpush.msra.mxu0 0.0
  %3166 = vmatpush.msra.mxu0 0.0
  %3167 = vmatpush.msra.mxu0 0.0
  %3168 = vmatpush.msra.mxu0 0.0
  %3169 = vmatpush.msra.mxu0 0.0
  %3170 = vmatpush.msra.mxu0 0.0
  %3171 = vmatpush.msra.mxu0 0.0
  %3172 = vmatpush.msra.mxu0 0.0
  %3173 = vmatpush.msra.mxu0 0.0
  %3174 = vmatpush.msra.mxu0 0.0
  %3175 = vmatpush.msra.mxu0 0.0
  %3176 = vmatpush.msra.mxu0 %v3136
  %3177 = vmatpush.msra.mxu0 %v3132
  %3178 = vmatmul.f32.gmra.mxu0 %v3140
  %v3179 = vpop.f32.mrf.mxu0
  %v3180 = vadd.f32 0.0, %v3179
  %3181 = vdwg.mxu0
  %3182 = vmatpush.msra.mxu0 0.0
  %3183 = vmatpush.msra.mxu0 0.0
  %3184 = vmatpush.msra.mxu0 0.0
  %3185 = vmatpush.msra.mxu0 0.0
  %3186 = vmatpush.msra.mxu0 0.0
  %3187 = vmatpush.msra.mxu0 0.0
  %3188 = vmatpush.msra.mxu0 0.0
  %3189 = vmatpush.msra.mxu0 0.0
  %3190 = vmatpush.msra.mxu0 0.0
  %3191 = vmatpush.msra.mxu0 0.0
  %3192 = vmatpush.msra.mxu0 0.0
  %3193 = vmatpush.msra.mxu0 0.0
  %3194 = vmatpush.msra.mxu0 0.0
  %3195 = vmatpush.msra.mxu0 0.0
  %3196 = vmatpush.msra.mxu0 %v3137
  %3197 = vmatpush.msra.mxu0 %v3133
  %3198 = vmatmul.f32.gmra.mxu0 %v3140
  %v3199 = vpop.f32.mrf.mxu0
  %v3200 = vadd.f32 0.0, %v3199
  %3201 = vdwg.mxu0
  %3202 = vmatpush.msra.mxu0 0.0
  %3203 = vmatpush.msra.mxu0 0.0
  %3204 = vmatpush.msra.mxu0 0.0
  %3205 = vmatpush.msra.mxu0 0.0
  %3206 = vmatpush.msra.mxu0 0.0
  %3207 = vmatpush.msra.mxu0 0.0
  %3208 = vmatpush.msra.mxu0 0.0
  %3209 = vmatpush.msra.mxu0 0.0
  %3210 = vmatpush.msra.mxu0 0.0
  %3211 = vmatpush.msra.mxu0 0.0
  %3212 = vmatpush.msra.mxu0 0.0
  %3213 = vmatpush.msra.mxu0 0.0
  %3214 = vmatpush.msra.mxu0 0.0
  %3215 = vmatpush.msra.mxu0 0.0
  %3216 = vmatpush.msra.mxu0 %v3138
  %3217 = vmatpush.msra.mxu0 %v3134
  %3218 = vmatmul.f32.gmra.mxu0 %v3140
  %v3219 = vpop.f32.mrf.mxu0
  %v3220 = vadd.f32 0.0, %v3219
  %3221 = vdwg.mxu0
  %v3222 = vadd.f32 %v3101, %v3160
  %v3223 = vadd.f32 %v3102, %v3180
  %v3224 = vadd.f32 %v3103, %v3200
  %v3225 = vadd.f32 %v3104, %v3220
  %s3226 = scalar_lea.vmem %s9, 28
  %v3227 = vld [vmem:[%s3226] sm:$0x7]
  %3228 = vrot.lane.b32.xlu0 %v2412, 112
  %v3229 = vpop.permute.xlu0 %3228
  %3230 = vrot.lane.b32.xlu0 %v2416, 112
  %v3231 = vpop.permute.xlu0 %3230
  %3232 = vrot.lane.b32.xlu0 %v2413, 112
  %v3233 = vpop.permute.xlu0 %3232
  %3234 = vrot.lane.b32.xlu0 %v2417, 112
  %v3235 = vpop.permute.xlu0 %3234
  %3236 = vrot.lane.b32.xlu0 %v2414, 112
  %v3237 = vpop.permute.xlu0 %3236
  %3238 = vrot.lane.b32.xlu0 %v2418, 112
  %v3239 = vpop.permute.xlu0 %3238
  %3240 = vrot.lane.b32.xlu0 %v2415, 112
  %v3241 = vpop.permute.xlu0 %3240
  %3242 = vrot.lane.b32.xlu0 %v2419, 112
  %v3243 = vpop.permute.xlu0 %3242
  %v3244 = vsel %vm1187, %v3237, %v3241
  %v3245 = vsel %vm1187, %v3239, %v3243
  %v3246 = vsel %vm1187, %v3233, %v3237
  %v3247 = vsel %vm1187, %v3235, %v3239
  %v3248 = vsel %vm1187, %v3229, %v3233
  %v3249 = vsel %vm1187, %v3231, %v3235
  %v3250 = vsel %vm1187, %v3241, %v3229
  %v3251 = vsel %vm1187, %v3243, %v3231
  %v3252 = vsel %vm1200, %v3248, 0.0
  %v3253 = vsel %vm1201, %v3246, 0.0
  %v3254 = vsel %vm1202, %v3244, 0.0
  %v3255 = vsel %vm1203, %v3250, 0.0
  %v3256 = vsel %vm1200, %v3249, 0.0
  %v3257 = vsel %vm1201, %v3247, 0.0
  %v3258 = vsel %vm1202, %v3245, 0.0
  %v3259 = vsel %vm1203, %v3251, 0.0
  %v3261 = vsel %vm1764, %v3227, 0
  %3263 = vmatpush.msra.mxu0 0.0
  %3264 = vmatpush.msra.mxu0 0.0
  %3265 = vmatpush.msra.mxu0 0.0
  %3266 = vmatpush.msra.mxu0 0.0
  %3267 = vmatpush.msra.mxu0 0.0
  %3268 = vmatpush.msra.mxu0 0.0
  %3269 = vmatpush.msra.mxu0 0.0
  %3270 = vmatpush.msra.mxu0 0.0
  %3271 = vmatpush.msra.mxu0 0.0
  %3272 = vmatpush.msra.mxu0 0.0
  %3273 = vmatpush.msra.mxu0 0.0
  %3274 = vmatpush.msra.mxu0 0.0
  %3275 = vmatpush.msra.mxu0 0.0
  %3276 = vmatpush.msra.mxu0 0.0
  %3277 = vmatpush.msra.mxu0 %v3256
  %3278 = vmatpush.msra.mxu0 %v3252
  %3279 = vmatmul.f32.gmra.mxu0 %v3261
  %v3280 = vpop.f32.mrf.mxu0
  %v3281 = vadd.f32 0.0, %v3280
  %3282 = vdwg.mxu0
  %3283 = vmatpush.msra.mxu0 0.0
  %3284 = vmatpush.msra.mxu0 0.0
  %3285 = vmatpush.msra.mxu0 0.0
  %3286 = vmatpush.msra.mxu0 0.0
  %3287 = vmatpush.msra.mxu0 0.0
  %3288 = vmatpush.msra.mxu0 0.0
  %3289 = vmatpush.msra.mxu0 0.0
  %3290 = vmatpush.msra.mxu0 0.0
  %3291 = vmatpush.msra.mxu0 0.0
  %3292 = vmatpush.msra.mxu0 0.0
  %3293 = vmatpush.msra.mxu0 0.0
  %3294 = vmatpush.msra.mxu0 0.0
  %3295 = vmatpush.msra.mxu0 0.0
  %3296 = vmatpush.msra.mxu0 0.0
  %3297 = vmatpush.msra.mxu0 %v3257
  %3298 = vmatpush.msra.mxu0 %v3253
  %3299 = vmatmul.f32.gmra.mxu0 %v3261
  %v3300 = vpop.f32.mrf.mxu0
  %v3301 = vadd.f32 0.0, %v3300
  %3302 = vdwg.mxu0
  %3303 = vmatpush.msra.mxu0 0.0
  %3304 = vmatpush.msra.mxu0 0.0
  %3305 = vmatpush.msra.mxu0 0.0
  %3306 = vmatpush.msra.mxu0 0.0
  %3307 = vmatpush.msra.mxu0 0.0
  %3308 = vmatpush.msra.mxu0 0.0
  %3309 = vmatpush.msra.mxu0 0.0
  %3310 = vmatpush.msra.mxu0 0.0
  %3311 = vmatpush.msra.mxu0 0.0
  %3312 = vmatpush.msra.mxu0 0.0
  %3313 = vmatpush.msra.mxu0 0.0
  %3314 = vmatpush.msra.mxu0 0.0
  %3315 = vmatpush.msra.mxu0 0.0
  %3316 = vmatpush.msra.mxu0 0.0
  %3317 = vmatpush.msra.mxu0 %v3258
  %3318 = vmatpush.msra.mxu0 %v3254
  %3319 = vmatmul.f32.gmra.mxu0 %v3261
  %v3320 = vpop.f32.mrf.mxu0
  %v3321 = vadd.f32 0.0, %v3320
  %3322 = vdwg.mxu0
  %3323 = vmatpush.msra.mxu0 0.0
  %3324 = vmatpush.msra.mxu0 0.0
  %3325 = vmatpush.msra.mxu0 0.0
  %3326 = vmatpush.msra.mxu0 0.0
  %3327 = vmatpush.msra.mxu0 0.0
  %3328 = vmatpush.msra.mxu0 0.0
  %3329 = vmatpush.msra.mxu0 0.0
  %3330 = vmatpush.msra.mxu0 0.0
  %3331 = vmatpush.msra.mxu0 0.0
  %3332 = vmatpush.msra.mxu0 0.0
  %3333 = vmatpush.msra.mxu0 0.0
  %3334 = vmatpush.msra.mxu0 0.0
  %3335 = vmatpush.msra.mxu0 0.0
  %3336 = vmatpush.msra.mxu0 0.0
  %3337 = vmatpush.msra.mxu0 %v3259
  %3338 = vmatpush.msra.mxu0 %v3255
  %3339 = vmatmul.f32.gmra.mxu0 %v3261
  %v3340 = vpop.f32.mrf.mxu0
  %v3341 = vadd.f32 0.0, %v3340
  %3342 = vdwg.mxu0
  %v3343 = vadd.f32 %v3222, %v3281
  %v3344 = vadd.f32 %v3223, %v3301
  %v3345 = vadd.f32 %v3224, %v3321
  %v3346 = vadd.f32 %v3225, %v3341
  %s3347 = scalar_lea.vmem %s9, 32
  %v3348 = vld [vmem:[%s3347] sm:$0x7]
  %3349 = vrot.lane.b32.xlu0 %v2412, 111
  %v3350 = vpop.permute.xlu0 %3349
  %3351 = vrot.lane.b32.xlu0 %v2416, 111
  %v3352 = vpop.permute.xlu0 %3351
  %3353 = vrot.lane.b32.xlu0 %v2413, 111
  %v3354 = vpop.permute.xlu0 %3353
  %3355 = vrot.lane.b32.xlu0 %v2417, 111
  %v3356 = vpop.permute.xlu0 %3355
  %3357 = vrot.lane.b32.xlu0 %v2414, 111
  %v3358 = vpop.permute.xlu0 %3357
  %3359 = vrot.lane.b32.xlu0 %v2418, 111
  %v3360 = vpop.permute.xlu0 %3359
  %3361 = vrot.lane.b32.xlu0 %v2415, 111
  %v3362 = vpop.permute.xlu0 %3361
  %3363 = vrot.lane.b32.xlu0 %v2419, 111
  %v3364 = vpop.permute.xlu0 %3363
  %v3365 = vsel %vm1337, %v3358, %v3362
  %v3366 = vsel %vm1337, %v3360, %v3364
  %v3367 = vsel %vm1337, %v3354, %v3358
  %v3368 = vsel %vm1337, %v3356, %v3360
  %v3369 = vsel %vm1337, %v3350, %v3354
  %v3370 = vsel %vm1337, %v3352, %v3356
  %v3371 = vsel %vm1337, %v3362, %v3350
  %v3372 = vsel %vm1337, %v3364, %v3352
  %v3373 = vsel %vm1350, %v3369, 0.0
  %v3374 = vsel %vm1351, %v3367, 0.0
  %v3375 = vsel %vm1352, %v3365, 0.0
  %v3376 = vsel %vm1353, %v3371, 0.0
  %v3377 = vsel %vm1350, %v3370, 0.0
  %v3378 = vsel %vm1351, %v3368, 0.0
  %v3379 = vsel %vm1352, %v3366, 0.0
  %v3380 = vsel %vm1353, %v3372, 0.0
  %v3382 = vsel %vm1764, %v3348, 0
  %3384 = vmatpush.msra.mxu0 0.0
  %3385 = vmatpush.msra.mxu0 0.0
  %3386 = vmatpush.msra.mxu0 0.0
  %3387 = vmatpush.msra.mxu0 0.0
  %3388 = vmatpush.msra.mxu0 0.0
  %3389 = vmatpush.msra.mxu0 0.0
  %3390 = vmatpush.msra.mxu0 0.0
  %3391 = vmatpush.msra.mxu0 0.0
  %3392 = vmatpush.msra.mxu0 0.0
  %3393 = vmatpush.msra.mxu0 0.0
  %3394 = vmatpush.msra.mxu0 0.0
  %3395 = vmatpush.msra.mxu0 0.0
  %3396 = vmatpush.msra.mxu0 0.0
  %3397 = vmatpush.msra.mxu0 0.0
  %3398 = vmatpush.msra.mxu0 %v3377
  %3399 = vmatpush.msra.mxu0 %v3373
  %3400 = vmatmul.f32.gmra.mxu0 %v3382
  %v3401 = vpop.f32.mrf.mxu0
  %v3402 = vadd.f32 0.0, %v3401
  %3403 = vdwg.mxu0
  %3404 = vmatpush.msra.mxu0 0.0
  %3405 = vmatpush.msra.mxu0 0.0
  %3406 = vmatpush.msra.mxu0 0.0
  %3407 = vmatpush.msra.mxu0 0.0
  %3408 = vmatpush.msra.mxu0 0.0
  %3409 = vmatpush.msra.mxu0 0.0
  %3410 = vmatpush.msra.mxu0 0.0
  %3411 = vmatpush.msra.mxu0 0.0
  %3412 = vmatpush.msra.mxu0 0.0
  %3413 = vmatpush.msra.mxu0 0.0
  %3414 = vmatpush.msra.mxu0 0.0
  %3415 = vmatpush.msra.mxu0 0.0
  %3416 = vmatpush.msra.mxu0 0.0
  %3417 = vmatpush.msra.mxu0 0.0
  %3418 = vmatpush.msra.mxu0 %v3378
  %3419 = vmatpush.msra.mxu0 %v3374
  %3420 = vmatmul.f32.gmra.mxu0 %v3382
  %v3421 = vpop.f32.mrf.mxu0
  %v3422 = vadd.f32 0.0, %v3421
  %3423 = vdwg.mxu0
  %3424 = vmatpush.msra.mxu0 0.0
  %3425 = vmatpush.msra.mxu0 0.0
  %3426 = vmatpush.msra.mxu0 0.0
  %3427 = vmatpush.msra.mxu0 0.0
  %3428 = vmatpush.msra.mxu0 0.0
  %3429 = vmatpush.msra.mxu0 0.0
  %3430 = vmatpush.msra.mxu0 0.0
  %3431 = vmatpush.msra.mxu0 0.0
  %3432 = vmatpush.msra.mxu0 0.0
  %3433 = vmatpush.msra.mxu0 0.0
  %3434 = vmatpush.msra.mxu0 0.0
  %3435 = vmatpush.msra.mxu0 0.0
  %3436 = vmatpush.msra.mxu0 0.0
  %3437 = vmatpush.msra.mxu0 0.0
  %3438 = vmatpush.msra.mxu0 %v3379
  %3439 = vmatpush.msra.mxu0 %v3375
  %3440 = vmatmul.f32.gmra.mxu0 %v3382
  %v3441 = vpop.f32.mrf.mxu0
  %v3442 = vadd.f32 0.0, %v3441
  %3443 = vdwg.mxu0
  %3444 = vmatpush.msra.mxu0 0.0
  %3445 = vmatpush.msra.mxu0 0.0
  %3446 = vmatpush.msra.mxu0 0.0
  %3447 = vmatpush.msra.mxu0 0.0
  %3448 = vmatpush.msra.mxu0 0.0
  %3449 = vmatpush.msra.mxu0 0.0
  %3450 = vmatpush.msra.mxu0 0.0
  %3451 = vmatpush.msra.mxu0 0.0
  %3452 = vmatpush.msra.mxu0 0.0
  %3453 = vmatpush.msra.mxu0 0.0
  %3454 = vmatpush.msra.mxu0 0.0
  %3455 = vmatpush.msra.mxu0 0.0
  %3456 = vmatpush.msra.mxu0 0.0
  %3457 = vmatpush.msra.mxu0 0.0
  %3458 = vmatpush.msra.mxu0 %v3380
  %3459 = vmatpush.msra.mxu0 %v3376
  %3460 = vmatmul.f32.gmra.mxu0 %v3382
  %v3461 = vpop.f32.mrf.mxu0
  %v3462 = vadd.f32 0.0, %v3461
  %3463 = vdwg.mxu0
  %v3464 = vadd.f32 %v3343, %v3402
  %v3465 = vadd.f32 %v3344, %v3422
  %v3466 = vadd.f32 %v3345, %v3442
  %v3467 = vadd.f32 %v3346, %v3462
  %v3468 = vld [vmem:[%s10] sm:$0x7]
  %3470 = vset.pattern.permute.xlu0 0
  %3471 = vperm.xlu0 %3470, %v3468
  %v3472 = vpop.permute.xlu0 %3471
  %v3474 = vadd.f32 %v3464, %v3472
  %v3475 = vadd.f32 %v3465, %v3472
  %v3476 = vadd.f32 %v3466, %v3472
  %v3477 = vadd.f32 %v3467, %v3472
  %3478 = vst [vmem:[%s11] sm:$0x7] %v3474
  %3479 = vst [vmem:[%s11 + $0x8] sm:$0x7] %v3475
  %v3482 = vrot.slane %v3476, 5
  %v3483 = vrot.slane %v3477, 5
  %3486 = vst [vmem:[%s11] sm:$0x38] %v3482
  %3487 = vst [vmem:[%s11 + $0x8] sm:$0x38] %v3483
  // Predicated region
  $region46: #{one_stage_ae_forward.1} parent=0 // pred_check
    _
  $region47: #{one_stage_ae_forward.1} parent=0 // pred_check_branch
    %3489 = sbr.rel (0) target = $region49
  $region48: #{one_stage_ae_forward.1} parent=0 // pred_region
    _
  $region49: #{one_stage_ae_forward.1} parent=0 // pred_fallthru
    _
  // Predicated region
  $region50: #{one_stage_ae_forward.1} parent=0 // pred_check
    _
  $region51: #{one_stage_ae_forward.1} parent=0 // pred_check_branch
    %3491 = sbr.rel (0) target = $region53
  $region52: #{one_stage_ae_forward.1} parent=0 // pred_region
    _
  $region53: #{one_stage_ae_forward.1} parent=0 // pred_fallthru
    _

</llo_original>
